<compile_context>
chip_gen: v7x
topology: tpu7x:2x2x1
jax: 0.10.0
libtpu: 0.0.40
codegen_flags: <defaults>
</compile_context>

<pallas_src>
import jax
import jax.numpy as jnp
from jax.experimental import pallas as pl
from jax.experimental.pallas import tpu as pltpu


LANE = 128        # lane width / Cout padding target
SUBLANE = 8       # sublane alignment for M tiles
ROW_TILES = 2     # parallel row tiles per conv matmul (one per v7x TensorCore)


def _round_up(x, m):
    return (x + m - 1) // m * m


# ------------------------------- Pallas kernels -------------------------------

def _conv_matmul_kernel(x_ref, w_ref, b_ref, o_ref):
    # x : (tile_m, Kp) bf16   im2col patches (batch collapsed into rows)
    # w : (Kp, 128)    bf16   conv weight, rows ordered (ky, kx, cin), Cout zero-padded
    # b : (1, 128)     f32
    acc = jnp.dot(x_ref[...], w_ref[...], preferred_element_type=jnp.float32)
    acc = jnp.maximum(acc + b_ref[...], 0.0)          # f32 epilogue (v5e-safe)
    o_ref[...] = acc.astype(o_ref.dtype)              # lane-dense (128-wide) store


def _fc_head_kernel(x_ref, w1_ref, b1_ref, w2_ref, b2_ref, o_ref, acc_ref):
    # x : (N, ktile) bf16    w1: (ktile, hc) bf16    b1: (1, hc) f32
    # w2: (hc, A)    bf16    b2: (1, A) f32 (pre-scaled by 1/col_tiles)
    # o : (1, N, A)  f32     acc: (N, hc) f32 scratch
    k = pl.program_id(1)

    @pl.when(k == 0)
    def _():
        acc_ref[...] = jnp.zeros_like(acc_ref)

    acc_ref[...] += jnp.dot(x_ref[...], w1_ref[...],
                            preferred_element_type=jnp.float32)

    @pl.when(k == pl.num_programs(1) - 1)
    def _():
        h = jnp.maximum(acc_ref[...] + b1_ref[...], 0.0)      # f32 epilogue (v5e-safe)
        logits = jnp.dot(h.astype(w2_ref.dtype), w2_ref[...],
                         preferred_element_type=jnp.float32)
        o_ref[0] = logits + b2_ref[...]


# -------------------------------- JAX wrappers ---------------------------------

def conv_matmul(flat, w, b):
    """flat: (Mp, Kp) bf16; w: (Kp, 128) bf16; b: (1, 128) f32 -> (Mp, 128) bf16."""
    Mp, Kp = flat.shape
    Cp = w.shape[-1]
    tile_m = Mp // ROW_TILES
    return pl.pallas_call(
        _conv_matmul_kernel,
        grid=(ROW_TILES,),
        in_specs=[
            pl.BlockSpec((tile_m, Kp), lambda i: (i, 0)),
            pl.BlockSpec((Kp, Cp), lambda i: (0, 0)),   # constant index: fetched once
            pl.BlockSpec((1, Cp), lambda i: (0, 0)),
        ],
        out_specs=pl.BlockSpec((tile_m, Cp), lambda i: (i, 0)),
        out_shape=jax.ShapeDtypeStruct((Mp, Cp), jnp.bfloat16),
        compiler_params=pltpu.CompilerParams(dimension_semantics=("parallel",)),
    )(flat, w, b)


def fc_head(x_flat, w1, b1, w2, b2, *, ktile=640, col_tiles=2):
    """x_flat: (N, Kp) bf16 -> logits (N, A) f32.

    fc1 is K-tiled ('arbitrary' axis) so the 3.2 MB weight streams under
    double-buffering; the hidden columns are split into `col_tiles` 'parallel'
    tiles (one per v7x TensorCore).  Each tile writes partial logits; the tiny
    (col_tiles, N, A) partial sum is done in XLA (b2 pre-scaled by 1/col_tiles)."""
    N, Kp = x_flat.shape
    H = w1.shape[1]
    A = w2.shape[1]
    assert Kp % ktile == 0 and H % col_tiles == 0
    kt = Kp // ktile
    hc = H // col_tiles
    b2_scaled = b2 * (1.0 / col_tiles)
    partials = pl.pallas_call(
        _fc_head_kernel,
        grid=(col_tiles, kt),
        in_specs=[
            pl.BlockSpec((N, ktile), lambda j, k: (0, k)),
            pl.BlockSpec((ktile, hc), lambda j, k: (k, j)),
            pl.BlockSpec((1, hc), lambda j, k: (0, j)),
            pl.BlockSpec((hc, A), lambda j, k: (j, 0)),
            pl.BlockSpec((1, A), lambda j, k: (0, 0)),
        ],
        out_specs=pl.BlockSpec((1, N, A), lambda j, k: (j, 0, 0)),
        out_shape=jax.ShapeDtypeStruct((col_tiles, N, A), jnp.float32),
        scratch_shapes=[pltpu.VMEM((N, hc), jnp.float32)],
        compiler_params=pltpu.CompilerParams(
            dimension_semantics=("parallel", "arbitrary")),
    )(x_flat, w1, b1, w2, b2_scaled)
    return partials.sum(axis=0)


def _im2col(x, k, s):
    """x: (N, H, W, C) -> (N, Ho, Wo, k*k*C); patch feature order (ky, kx, c).

    Pure strided data movement (XLA glue); all MACs happen inside the kernels."""
    N, H, W, C = x.shape
    Ho = (H - k) // s + 1
    Wo = (W - k) // s + 1
    cols = []
    for ky in range(k):
        for kx in range(k):
            cols.append(x[:, ky:ky + s * (Ho - 1) + 1:s,
                          kx:kx + s * (Wo - 1) + 1:s, :])
    return jnp.concatenate(cols, axis=-1), Ho, Wo


def conv_layer(x_nhwc, w, b, *, ksize, stride, cout):
    """im2col (XLA glue) + one lane-dense Pallas matmul; returns (N, Ho, Wo, cout) bf16."""
    N = x_nhwc.shape[0]
    patches, Ho, Wo = _im2col(x_nhwc, ksize, stride)       # (N, Ho, Wo, Kreal)
    Kreal = patches.shape[-1]
    Kp = w.shape[0]                                        # K padded to multiple of 128
    M = N * Ho * Wo                                        # batch collapsed into rows
    Mp = _round_up(M, ROW_TILES * SUBLANE)
    flat = patches.reshape(M, Kreal)
    flat = jnp.pad(flat, ((0, Mp - M), (0, Kp - Kreal)))   # zero rows/cols: no-op MACs
    out = conv_matmul(flat, w, b)                          # (Mp, 128) bf16, ReLU applied
    return out[:M, :cout].reshape(N, Ho, Wo, cout)


# ------------------------------ parameter creation ------------------------------

def _uniform(key, shape, bound):
    return jax.random.uniform(key, shape, jnp.float32, -bound, bound)


def init_params(key, in_channels, action_size):
    ks = jax.random.split(key, 10)

    def conv_w(k, ksz, cin, cout):
        fan_in = ksz * ksz * cin
        w = _uniform(k, (ksz, ksz, cin, cout), fan_in ** -0.5)   # HWIO -> rows (ky, kx, cin)
        w = w.reshape(fan_in, cout)
        kp = _round_up(fan_in, LANE)
        w = jnp.pad(w, ((0, kp - fan_in), (0, LANE - cout)))     # zero-pad K and Cout
        return w.astype(jnp.bfloat16)

    def conv_b(k, fan_in, cout):
        b = _uniform(k, (1, cout), fan_in ** -0.5)
        return jnp.pad(b, ((0, 0), (0, LANE - cout)))            # f32

    p = {}
    p["w1"], p["b1"] = conv_w(ks[0], 8, in_channels, 32), conv_b(ks[1], 8 * 8 * in_channels, 32)
    p["w2"], p["b2"] = conv_w(ks[2], 4, 32, 64),          conv_b(ks[3], 4 * 4 * 32, 64)
    p["w3"], p["b3"] = conv_w(ks[4], 3, 64, 64),          conv_b(ks[5], 3 * 3 * 64, 64)

    # fc1 rows are ordered (y, x, c) to match the channels-last flatten of conv3's
    # output; importing PyTorch weights would require permuting rows from (c, y, x).
    fan_fc1 = 7 * 7 * 64                                   # 3136
    kp = _round_up(fan_fc1, LANE)                          # 3200 (K-tile friendly)
    wf1 = _uniform(ks[6], (fan_fc1, 512), fan_fc1 ** -0.5)
    p["wf1"] = jnp.pad(wf1, ((0, kp - fan_fc1), (0, 0))).astype(jnp.bfloat16)
    p["bf1"] = _uniform(ks[7], (1, 512), fan_fc1 ** -0.5)
    p["wf2"] = _uniform(ks[8], (512, action_size), 512 ** -0.5).astype(jnp.bfloat16)
    p["bf2"] = _uniform(ks[9], (1, action_size), 512 ** -0.5)
    return p


# -------------------------------- forward pass ----------------------------------

def policynet2d_conv_forward(params, x_nchw):
    # mirror PyTorch: accept (C, H, W) or (N, C, H, W); returns raw logits (no softmax)
    if x_nchw.ndim == 3:
        x_nchw = x_nchw[None]
    N = x_nchw.shape[0]
    x = jnp.transpose(x_nchw, (0, 2, 3, 1)).astype(jnp.bfloat16)     # NHWC bf16 operands

    p = params
    a1 = conv_layer(x,  p["w1"], p["b1"], ksize=8, stride=4, cout=32)   # (N, 20, 20, 32)
    a2 = conv_layer(a1, p["w2"], p["b2"], ksize=4, stride=2, cout=64)   # (N,  9,  9, 64)
    a3 = conv_layer(a2, p["w3"], p["b3"], ksize=3, stride=1, cout=64)   # (N,  7,  7, 64)

    flat = a3.reshape(N, -1)                                  # (N, 3136), (y, x, c) order
    Kp = p["wf1"].shape[0]
    flat = jnp.pad(flat, ((0, 0), (0, Kp - flat.shape[1])))   # zero K-pad -> (N, 3200)
    return fc_head(flat, p["wf1"], p["bf1"], p["wf2"], p["bf2"])


# ------------------------------------- main --------------------------------------

if __name__ == "__main__":
    key = jax.random.PRNGKey(0)
    k_x, k_p = jax.random.split(key)

    # fc1 = Linear(64*7*7, 512) in the spec implies 84x84 spatial input (Atari frames).
    batch, channels, spatial, action_size = 2, 4, 84, 6
    x = jax.random.uniform(k_x, (batch, channels, spatial, spatial), jnp.float32)
    params = init_params(k_p, in_channels=channels, action_size=action_size)

    fwd = jax.jit(policynet2d_conv_forward)
    logits = jax.block_until_ready(fwd(params, x))

    assert logits.shape == (batch, action_size), logits.shape
    assert bool(jnp.all(jnp.isfinite(logits)))
    print("KERNEL_OK")
</pallas_src>

<mosaic_0001>
module attributes {stable_mosaic.version = 11 : i64} {
  func.func @_conv_matmul_kernel(%arg0: i32, %arg1: memref<400x256xbf16, #tpu.memory_space<vmem>>, %arg2: memref<256x128xbf16, #tpu.memory_space<vmem>>, %arg3: memref<1x128xf32, #tpu.memory_space<vmem>>, %arg4: memref<400x128xbf16, #tpu.memory_space<vmem>>) attributes {dimension_semantics = [#tpu.dimension_semantics<parallel>], iteration_bounds = array<i64: 2>, scalar_prefetch = 0 : i64, scratch_operands = 0 : i64, tpu.core_type = #tpu.core_type<tc>, window_params = [{transform_indices = @transform_0, window_bounds = array<i64: 400, 256>}, {pipeline_mode = #tpu.pipeline_mode<synchronous>, transform_indices = @transform_1, window_bounds = array<i64: 256, 128>}, {pipeline_mode = #tpu.pipeline_mode<synchronous>, transform_indices = @transform_2, window_bounds = array<i64: 1, 128>}, {transform_indices = @transform_3, window_bounds = array<i64: 400, 128>}]} {
    %c0 = arith.constant 0 : index
    %c0_0 = arith.constant 0 : index
    %0 = vector.load %arg1[%c0, %c0_0] : memref<400x256xbf16, #tpu.memory_space<vmem>>, vector<400x256xbf16>
    %c0_1 = arith.constant 0 : index
    %c0_2 = arith.constant 0 : index
    %1 = vector.load %arg2[%c0_1, %c0_2] : memref<256x128xbf16, #tpu.memory_space<vmem>>, vector<256x128xbf16>
    %cst = arith.constant dense<0.000000e+00> : vector<400x128xf32>
    %2 = tpu.matmul %0, %1, %cst {dimension_numbers = #tpu.dot_dimension_numbers<[1], [0], [0], [1], [0, 0, 1, 1], [], []>} : vector<400x256xbf16>, vector<256x128xbf16>, vector<400x128xf32> -> vector<400x128xf32>
    %c0_3 = arith.constant 0 : index
    %c0_4 = arith.constant 0 : index
    %3 = vector.load %arg3[%c0_3, %c0_4] : memref<1x128xf32, #tpu.memory_space<vmem>>, vector<1x128xf32>
    %4 = vector.broadcast %3 : vector<1x128xf32> to vector<400x128xf32>
    %5 = arith.addf %2, %4 : vector<400x128xf32>
    %cst_5 = arith.constant 0.000000e+00 : f32
    %6 = vector.broadcast %cst_5 : f32 to vector<400x128xf32>
    %7 = arith.maximumf %5, %6 : vector<400x128xf32>
    %8 = arith.truncf %7 : vector<400x128xf32> to vector<400x128xbf16>
    %c0_6 = arith.constant 0 : index
    %c0_7 = arith.constant 0 : index
    %9 = vector.load %arg4[%c0_6, %c0_7] : memref<400x128xbf16, #tpu.memory_space<vmem>>, vector<400x128xbf16>
    tpu.vector_store %arg4[%c0_6, %c0_7], %8 {strides = array<i32>} : memref<400x128xbf16, #tpu.memory_space<vmem>>, vector<400x128xbf16>,
    return
  }
  func.func @transform_0(%arg0: i32) -> (i32, i32) {
    %c0_i32 = arith.constant 0 : i32
    %c0_i32_0 = arith.constant 0 : i32
    return %arg0, %c0_i32 : i32, i32
  }
  func.func @transform_1(%arg0: i32) -> (i32, i32) {
    %c0_i32 = arith.constant 0 : i32
    %c0_i32_0 = arith.constant 0 : i32
    %c0_i32_1 = arith.constant 0 : i32
    return %c0_i32, %c0_i32_0 : i32, i32
  }
  func.func @transform_2(%arg0: i32) -> (i32, i32) {
    %c0_i32 = arith.constant 0 : i32
    %c0_i32_0 = arith.constant 0 : i32
    %c0_i32_1 = arith.constant 0 : i32
    return %c0_i32, %c0_i32_0 : i32, i32
  }
  func.func @transform_3(%arg0: i32) -> (i32, i32) {
    %c0_i32 = arith.constant 0 : i32
    %c0_i32_0 = arith.constant 0 : i32
    return %arg0, %c0_i32 : i32, i32
  }
}

module attributes {stable_mosaic.version = 11 : i64} {
  func.func @_conv_matmul_kernel(%arg0: i32, %arg1: memref<88x512xbf16, #tpu.memory_space<vmem>>, %arg2: memref<512x128xbf16, #tpu.memory_space<vmem>>, %arg3: memref<1x128xf32, #tpu.memory_space<vmem>>, %arg4: memref<88x128xbf16, #tpu.memory_space<vmem>>) attributes {dimension_semantics = [#tpu.dimension_semantics<parallel>], iteration_bounds = array<i64: 2>, scalar_prefetch = 0 : i64, scratch_operands = 0 : i64, tpu.core_type = #tpu.core_type<tc>, window_params = [{transform_indices = @transform_0, window_bounds = array<i64: 88, 512>}, {pipeline_mode = #tpu.pipeline_mode<synchronous>, transform_indices = @transform_1, window_bounds = array<i64: 512, 128>}, {pipeline_mode = #tpu.pipeline_mode<synchronous>, transform_indices = @transform_2, window_bounds = array<i64: 1, 128>}, {transform_indices = @transform_3, window_bounds = array<i64: 88, 128>}]} {
    %c0 = arith.constant 0 : index
    %c0_0 = arith.constant 0 : index
    %0 = vector.load %arg1[%c0, %c0_0] : memref<88x512xbf16, #tpu.memory_space<vmem>>, vector<88x512xbf16>
    %c0_1 = arith.constant 0 : index
    %c0_2 = arith.constant 0 : index
    %1 = vector.load %arg2[%c0_1, %c0_2] : memref<512x128xbf16, #tpu.memory_space<vmem>>, vector<512x128xbf16>
    %cst = arith.constant dense<0.000000e+00> : vector<88x128xf32>
    %2 = tpu.matmul %0, %1, %cst {dimension_numbers = #tpu.dot_dimension_numbers<[1], [0], [0], [1], [0, 0, 1, 1], [], []>} : vector<88x512xbf16>, vector<512x128xbf16>, vector<88x128xf32> -> vector<88x128xf32>
    %c0_3 = arith.constant 0 : index
    %c0_4 = arith.constant 0 : index
    %3 = vector.load %arg3[%c0_3, %c0_4] : memref<1x128xf32, #tpu.memory_space<vmem>>, vector<1x128xf32>
    %4 = vector.broadcast %3 : vector<1x128xf32> to vector<88x128xf32>
    %5 = arith.addf %2, %4 : vector<88x128xf32>
    %cst_5 = arith.constant 0.000000e+00 : f32
    %6 = vector.broadcast %cst_5 : f32 to vector<88x128xf32>
    %7 = arith.maximumf %5, %6 : vector<88x128xf32>
    %8 = arith.truncf %7 : vector<88x128xf32> to vector<88x128xbf16>
    %c0_6 = arith.constant 0 : index
    %c0_7 = arith.constant 0 : index
    %9 = vector.load %arg4[%c0_6, %c0_7] : memref<88x128xbf16, #tpu.memory_space<vmem>>, vector<88x128xbf16>
    tpu.vector_store %arg4[%c0_6, %c0_7], %8 {strides = array<i32>} : memref<88x128xbf16, #tpu.memory_space<vmem>>, vector<88x128xbf16>,
    return
  }
  func.func @transform_0(%arg0: i32) -> (i32, i32) {
    %c0_i32 = arith.constant 0 : i32
    %c0_i32_0 = arith.constant 0 : i32
    return %arg0, %c0_i32 : i32, i32
  }
  func.func @transform_1(%arg0: i32) -> (i32, i32) {
    %c0_i32 = arith.constant 0 : i32
    %c0_i32_0 = arith.constant 0 : i32
    %c0_i32_1 = arith.constant 0 : i32
    return %c0_i32, %c0_i32_0 : i32, i32
  }
  func.func @transform_2(%arg0: i32) -> (i32, i32) {
    %c0_i32 = arith.constant 0 : i32
    %c0_i32_0 = arith.constant 0 : i32
    %c0_i32_1 = arith.constant 0 : i32
    return %c0_i32, %c0_i32_0 : i32, i32
  }
  func.func @transform_3(%arg0: i32) -> (i32, i32) {
    %c0_i32 = arith.constant 0 : i32
    %c0_i32_0 = arith.constant 0 : i32
    return %arg0, %c0_i32 : i32, i32
  }
}

module attributes {stable_mosaic.version = 11 : i64} {
  func.func @_conv_matmul_kernel(%arg0: i32, %arg1: memref<56x640xbf16, #tpu.memory_space<vmem>>, %arg2: memref<640x128xbf16, #tpu.memory_space<vmem>>, %arg3: memref<1x128xf32, #tpu.memory_space<vmem>>, %arg4: memref<56x128xbf16, #tpu.memory_space<vmem>>) attributes {dimension_semantics = [#tpu.dimension_semantics<parallel>], iteration_bounds = array<i64: 2>, scalar_prefetch = 0 : i64, scratch_operands = 0 : i64, tpu.core_type = #tpu.core_type<tc>, window_params = [{transform_indices = @transform_0, window_bounds = array<i64: 56, 640>}, {pipeline_mode = #tpu.pipeline_mode<synchronous>, transform_indices = @transform_1, window_bounds = array<i64: 640, 128>}, {pipeline_mode = #tpu.pipeline_mode<synchronous>, transform_indices = @transform_2, window_bounds = array<i64: 1, 128>}, {transform_indices = @transform_3, window_bounds = array<i64: 56, 128>}]} {
    %c0 = arith.constant 0 : index
    %c0_0 = arith.constant 0 : index
    %0 = vector.load %arg1[%c0, %c0_0] : memref<56x640xbf16, #tpu.memory_space<vmem>>, vector<56x640xbf16>
    %c0_1 = arith.constant 0 : index
    %c0_2 = arith.constant 0 : index
    %1 = vector.load %arg2[%c0_1, %c0_2] : memref<640x128xbf16, #tpu.memory_space<vmem>>, vector<640x128xbf16>
    %cst = arith.constant dense<0.000000e+00> : vector<56x128xf32>
    %2 = tpu.matmul %0, %1, %cst {dimension_numbers = #tpu.dot_dimension_numbers<[1], [0], [0], [1], [0, 0, 1, 1], [], []>} : vector<56x640xbf16>, vector<640x128xbf16>, vector<56x128xf32> -> vector<56x128xf32>
    %c0_3 = arith.constant 0 : index
    %c0_4 = arith.constant 0 : index
    %3 = vector.load %arg3[%c0_3, %c0_4] : memref<1x128xf32, #tpu.memory_space<vmem>>, vector<1x128xf32>
    %4 = vector.broadcast %3 : vector<1x128xf32> to vector<56x128xf32>
    %5 = arith.addf %2, %4 : vector<56x128xf32>
    %cst_5 = arith.constant 0.000000e+00 : f32
    %6 = vector.broadcast %cst_5 : f32 to vector<56x128xf32>
    %7 = arith.maximumf %5, %6 : vector<56x128xf32>
    %8 = arith.truncf %7 : vector<56x128xf32> to vector<56x128xbf16>
    %c0_6 = arith.constant 0 : index
    %c0_7 = arith.constant 0 : index
    %9 = vector.load %arg4[%c0_6, %c0_7] : memref<56x128xbf16, #tpu.memory_space<vmem>>, vector<56x128xbf16>
    tpu.vector_store %arg4[%c0_6, %c0_7], %8 {strides = array<i32>} : memref<56x128xbf16, #tpu.memory_space<vmem>>, vector<56x128xbf16>,
    return
  }
  func.func @transform_0(%arg0: i32) -> (i32, i32) {
    %c0_i32 = arith.constant 0 : i32
    %c0_i32_0 = arith.constant 0 : i32
    return %arg0, %c0_i32 : i32, i32
  }
  func.func @transform_1(%arg0: i32) -> (i32, i32) {
    %c0_i32 = arith.constant 0 : i32
    %c0_i32_0 = arith.constant 0 : i32
    %c0_i32_1 = arith.constant 0 : i32
    return %c0_i32, %c0_i32_0 : i32, i32
  }
  func.func @transform_2(%arg0: i32) -> (i32, i32) {
    %c0_i32 = arith.constant 0 : i32
    %c0_i32_0 = arith.constant 0 : i32
    %c0_i32_1 = arith.constant 0 : i32
    return %c0_i32, %c0_i32_0 : i32, i32
  }
  func.func @transform_3(%arg0: i32) -> (i32, i32) {
    %c0_i32 = arith.constant 0 : i32
    %c0_i32_0 = arith.constant 0 : i32
    return %arg0, %c0_i32 : i32, i32
  }
}

module attributes {stable_mosaic.version = 11 : i64} {
  func.func @_fc_head_kernel(%arg0: i32, %arg1: i32, %arg2: memref<2x640xbf16, #tpu.memory_space<vmem>>, %arg3: memref<640x256xbf16, #tpu.memory_space<vmem>>, %arg4: memref<1x256xf32, #tpu.memory_space<vmem>>, %arg5: memref<256x6xbf16, #tpu.memory_space<vmem>>, %arg6: memref<1x6xf32, #tpu.memory_space<vmem>>, %arg7: memref<1x2x6xf32, #tpu.memory_space<vmem>>, %arg8: memref<2x256xf32, #tpu.memory_space<vmem>>) attributes {dimension_semantics = [#tpu.dimension_semantics<parallel>, #tpu.dimension_semantics<arbitrary>], iteration_bounds = array<i64: 2, 5>, scalar_prefetch = 0 : i64, scratch_operands = 1 : i64, tpu.core_type = #tpu.core_type<tc>, window_params = [{transform_indices = @transform_0, window_bounds = array<i64: 2, 640>}, {transform_indices = @transform_1, window_bounds = array<i64: 640, 256>}, {transform_indices = @transform_2, window_bounds = array<i64: 1, 256>}, {transform_indices = @transform_3, window_bounds = array<i64: 256, 6>}, {pipeline_mode = #tpu.pipeline_mode<synchronous>, transform_indices = @transform_4, window_bounds = array<i64: 1, 6>}, {transform_indices = @transform_5, window_bounds = array<i64: 1, 2, 6>}]} {
    %c0_i32 = arith.constant 0 : i32
    %0 = arith.cmpi eq, %arg1, %c0_i32 : i32
    %1 = arith.extui %0 : i1 to i32
    %c0_i32_0 = arith.constant 0 : i32
    %2 = arith.cmpi ne, %1, %c0_i32_0 : i32
    scf.if %2 {
      %cst_9 = arith.constant 0.000000e+00 : f32
      %12 = vector.broadcast %cst_9 : f32 to vector<2x256xf32>
      %c0_10 = arith.constant 0 : index
      %c0_11 = arith.constant 0 : index
      %13 = vector.load %arg8[%c0_10, %c0_11] : memref<2x256xf32, #tpu.memory_space<vmem>>, vector<2x256xf32>
      tpu.vector_store %arg8[%c0_10, %c0_11], %12 {strides = array<i32>} : memref<2x256xf32, #tpu.memory_space<vmem>>, vector<2x256xf32>,
    } else {
    }
    %c0 = arith.constant 0 : index
    %c0_1 = arith.constant 0 : index
    %3 = vector.load %arg8[%c0, %c0_1] : memref<2x256xf32, #tpu.memory_space<vmem>>, vector<2x256xf32>
    %c0_2 = arith.constant 0 : index
    %c0_3 = arith.constant 0 : index
    %4 = vector.load %arg2[%c0_2, %c0_3] : memref<2x640xbf16, #tpu.memory_space<vmem>>, vector<2x640xbf16>
    %c0_4 = arith.constant 0 : index
    %c0_5 = arith.constant 0 : index
    %5 = vector.load %arg3[%c0_4, %c0_5] : memref<640x256xbf16, #tpu.memory_space<vmem>>, vector<640x256xbf16>
    %cst = arith.constant dense<0.000000e+00> : vector<2x256xf32>
    %6 = tpu.matmul %4, %5, %cst {dimension_numbers = #tpu.dot_dimension_numbers<[1], [0], [0], [1], [0, 0, 1, 1], [], []>} : vector<2x640xbf16>, vector<640x256xbf16>, vector<2x256xf32> -> vector<2x256xf32>
    %7 = arith.addf %3, %6 : vector<2x256xf32>
    %c0_6 = arith.constant 0 : index
    %c0_7 = arith.constant 0 : index
    %8 = vector.load %arg8[%c0_6, %c0_7] : memref<2x256xf32, #tpu.memory_space<vmem>>, vector<2x256xf32>
    tpu.vector_store %arg8[%c0_6, %c0_7], %7 {strides = array<i32>} : memref<2x256xf32, #tpu.memory_space<vmem>>, vector<2x256xf32>,
    %c4_i32 = arith.constant 4 : i32
    %9 = arith.cmpi eq, %arg1, %c4_i32 : i32
    %10 = arith.extui %9 : i1 to i32
    %c0_i32_8 = arith.constant 0 : i32
    %11 = arith.cmpi ne, %10, %c0_i32_8 : i32
    scf.if %11 {
      %c0_9 = arith.constant 0 : index
      %c0_10 = arith.constant 0 : index
      %12 = vector.load %arg8[%c0_9, %c0_10] : memref<2x256xf32, #tpu.memory_space<vmem>>, vector<2x256xf32>
      %c0_11 = arith.constant 0 : index
      %c0_12 = arith.constant 0 : index
      %13 = vector.load %arg4[%c0_11, %c0_12] : memref<1x256xf32, #tpu.memory_space<vmem>>, vector<1x256xf32>
      %14 = vector.broadcast %13 : vector<1x256xf32> to vector<2x256xf32>
      %15 = arith.addf %12, %14 : vector<2x256xf32>
      %cst_13 = arith.constant 0.000000e+00 : f32
      %16 = vector.broadcast %cst_13 : f32 to vector<2x256xf32>
      %17 = arith.maximumf %15, %16 : vector<2x256xf32>
      %18 = arith.truncf %17 : vector<2x256xf32> to vector<2x256xbf16>
      %c0_14 = arith.constant 0 : index
      %c0_15 = arith.constant 0 : index
      %19 = vector.load %arg5[%c0_14, %c0_15] : memref<256x6xbf16, #tpu.memory_space<vmem>>, vector<256x6xbf16>
      %cst_16 = arith.constant dense<0.000000e+00> : vector<2x6xf32>
      %20 = tpu.matmul %18, %19, %cst_16 {dimension_numbers = #tpu.dot_dimension_numbers<[1], [0], [0], [1], [0, 0, 1, 1], [], []>} : vector<2x256xbf16>, vector<256x6xbf16>, vector<2x6xf32> -> vector<2x6xf32>
      %c0_17 = arith.constant 0 : index
      %c0_18 = arith.constant 0 : index
      %21 = vector.load %arg6[%c0_17, %c0_18] : memref<1x6xf32, #tpu.memory_space<vmem>>, vector<1x6xf32>
      %22 = vector.broadcast %21 : vector<1x6xf32> to vector<2x6xf32>
      %23 = arith.addf %20, %22 : vector<2x6xf32>
      %c0_19 = arith.constant 0 : index
      %c0_20 = arith.constant 0 : index
      %c0_21 = arith.constant 0 : index
      %24 = vector.load %arg7[%c0_19, %c0_20, %c0_21] : memref<1x2x6xf32, #tpu.memory_space<vmem>>, vector<1x2x6xf32>
      %25 = vector.shape_cast %24 : vector<1x2x6xf32> to vector<2x6xf32>
      %26 = vector.shape_cast %23 : vector<2x6xf32> to vector<1x2x6xf32>
      tpu.vector_store %arg7[%c0_19, %c0_20, %c0_21], %26 {strides = array<i32>} : memref<1x2x6xf32, #tpu.memory_space<vmem>>, vector<1x2x6xf32>,
    } else {
    }
    return
  }
  func.func @transform_0(%arg0: i32, %arg1: i32) -> (i32, i32) {
    %c0_i32 = arith.constant 0 : i32
    %c0_i32_0 = arith.constant 0 : i32
    return %c0_i32, %arg1 : i32, i32
  }
  func.func @transform_1(%arg0: i32, %arg1: i32) -> (i32, i32) {
    %c0_i32 = arith.constant 0 : i32
    return %arg1, %arg0 : i32, i32
  }
  func.func @transform_2(%arg0: i32, %arg1: i32) -> (i32, i32) {
    %c0_i32 = arith.constant 0 : i32
    %c0_i32_0 = arith.constant 0 : i32
    return %c0_i32, %arg0 : i32, i32
  }
  func.func @transform_3(%arg0: i32, %arg1: i32) -> (i32, i32) {
    %c0_i32 = arith.constant 0 : i32
    %c0_i32_0 = arith.constant 0 : i32
    return %arg0, %c0_i32 : i32, i32
  }
  func.func @transform_4(%arg0: i32, %arg1: i32) -> (i32, i32) {
    %c0_i32 = arith.constant 0 : i32
    %c0_i32_0 = arith.constant 0 : i32
    %c0_i32_1 = arith.constant 0 : i32
    return %c0_i32, %c0_i32_0 : i32, i32
  }
  func.func @transform_5(%arg0: i32, %arg1: i32) -> (i32, i32, i32) {
    %c0_i32 = arith.constant 0 : i32
    %c0_i32_0 = arith.constant 0 : i32
    %c0_i32_1 = arith.constant 0 : i32
    return %arg0, %c0_i32, %c0_i32_0 : i32, i32, i32
  }
}

</mosaic_0001>

<llo_original>
// kernel: policynet2d_conv_forward.4
$region0: #{policynet2d_conv_forward.4}
  #allocation0 [shape = 'u32[]', space=smem, size = 0x4, offset = 0x4, fixed_abs, tag = 'smem constant byte address 0x4 - core index']
  #allocation1 [shape = 'u32[144,128]{1,0:T(1,128)}', space=vmem, size = 0x12000, scoped, tag = 'internal scratch']
  %s0 = inlined_call_operand.vmem [shape: bf16[800,256], index: 0, kind: input, shape index: {}]
  %s1 = inlined_call_operand.vmem [shape: bf16[256,128], index: 1, kind: input, shape index: {}]
  %s2 = inlined_call_operand.vmem [shape: f32[1,128], index: 2, kind: input, shape index: {}]
  %s3 = inlined_call_operand.vmem [shape: bf16[800,128], index: 3, kind: output, shape index: {}]
  %s4 = sld [smem:[#allocation0]]
  $region45: #{policynet2d_conv_forward.4} parent=0
    _
  %s6 = ssub.s32 1, %s4
  %s7 = scalar_select 0, %s6, %s4
  loop: start=0, step=1, limit=4
  $region2: #{policynet2d_conv_forward.4} parent=0 // loop_pre_header
    _
  $region3: #{policynet2d_conv_forward.4} parent=0 // loop_header
    %s9 = sphi 0, %s13
    %p10 = scmp.ge.s32.totalorder %s9, 4
    %s19 = sphi 0, %s21
    %s22 = sphi 0, %s19
    %s23 = sphi 0, %s22
    %s39 = sphi 0, %s23
    %s43 = sphi 0, %s43
    %s45 = sphi 0, %s43
    %s46 = sphi 0, %s45
    %s60 = sphi 0, %s46
    %s64 = sphi 0, %s64
    %s66 = sphi 0, %s64
    %s67 = sphi 0, %s66
    %s81 = sphi 0, %s67
    %s87 = sphi 0, %s89
    %s90 = sphi 0, %s87
    %s91 = sphi 0, %s90
    %s107 = sphi 0, %s91
  $region4: #{policynet2d_conv_forward.4} parent=0 // loop_header_branch
    %12 = sbr.rel (%p10) target = $region8
  $region5: #{policynet2d_conv_forward.4} parent=0 // loop_body
    %s14 = ssub.s32 %s9, 1
    %s15 = ssub.s32 %s9, 2
    %s16 = sadd.s32 %s9, 1
    %s17 = ssub.s32 %s9, %s16
    %p18 = scmp.eq.s32.totalorder %s17, 0
    %s20 = sadd.s32 %s19, 1
    %s21 = scalar_select %p18, %s19, %s20
    %p24 = pneg %p18
    %p25 = scmp.eq.s32.totalorder %s9, 1
    %p26 = por %p24, %p25
    %p27 = scmp.ne.s32.totalorder %s19, %s22
    %p28 = scmp.eq.s32.totalorder %s9, 0
    %p29 = por %p27, %p28
    %p30 = scmp.ne.s32.totalorder %s19, %s22
    %p31 = scmp.eq.s32.totalorder %s14, 1
    %p32 = por %p30, %p31
    %p33 = scmp.ne.s32.totalorder %s22, %s23
    %p34 = scmp.eq.s32.totalorder %s14, 0
    %p35 = por %p33, %p34
    %p36 = scmp.ne.s32.totalorder %s22, %s23
    %p37 = scmp.eq.s32.totalorder %s15, 1
    %p38 = por %p36, %p37
    %p40 = scmp.ne.s32.totalorder %s23, %s39
    %p41 = scmp.eq.s32.totalorder %s15, 0
    %p42 = por %p40, %p41
    %s44 = sadd.s32 %s43, 1
    %p47 = scmp.eq.s32.totalorder %s9, 1
    %p48 = scmp.ne.s32.totalorder %s43, %s45
    %p49 = scmp.eq.s32.totalorder %s9, 0
    %p50 = por %p48, %p49
    %p51 = scmp.ne.s32.totalorder %s43, %s45
    %p52 = scmp.eq.s32.totalorder %s14, 1
    %p53 = por %p51, %p52
    %p54 = scmp.ne.s32.totalorder %s45, %s46
    %p55 = scmp.eq.s32.totalorder %s14, 0
    %p56 = por %p54, %p55
    %p57 = scmp.ne.s32.totalorder %s45, %s46
    %p58 = scmp.eq.s32.totalorder %s15, 1
    %p59 = por %p57, %p58
    %p61 = scmp.ne.s32.totalorder %s46, %s60
    %p62 = scmp.eq.s32.totalorder %s15, 0
    %p63 = por %p61, %p62
    %s65 = sadd.s32 %s64, 1
    %p68 = scmp.eq.s32.totalorder %s9, 1
    %p69 = scmp.ne.s32.totalorder %s64, %s66
    %p70 = scmp.eq.s32.totalorder %s9, 0
    %p71 = por %p69, %p70
    %p72 = scmp.ne.s32.totalorder %s64, %s66
    %p73 = scmp.eq.s32.totalorder %s14, 1
    %p74 = por %p72, %p73
    %p75 = scmp.ne.s32.totalorder %s66, %s67
    %p76 = scmp.eq.s32.totalorder %s14, 0
    %p77 = por %p75, %p76
    %p78 = scmp.ne.s32.totalorder %s66, %s67
    %p79 = scmp.eq.s32.totalorder %s15, 1
    %p80 = por %p78, %p79
    %p82 = scmp.ne.s32.totalorder %s67, %s81
    %p83 = scmp.eq.s32.totalorder %s15, 0
    %p84 = por %p82, %p83
    %s85 = ssub.s32 %s9, %s16
    %p86 = scmp.eq.s32.totalorder %s85, 0
    %s88 = sadd.s32 %s87, 1
    %s89 = scalar_select %p86, %s87, %s88
    %p92 = pneg %p86
    %p93 = scmp.eq.s32.totalorder %s9, 1
    %p94 = por %p92, %p93
    %p95 = scmp.ne.s32.totalorder %s87, %s90
    %p96 = scmp.eq.s32.totalorder %s9, 0
    %p97 = por %p95, %p96
    %p98 = scmp.ne.s32.totalorder %s87, %s90
    %p99 = scmp.eq.s32.totalorder %s14, 1
    %p100 = por %p98, %p99
    %p101 = scmp.ne.s32.totalorder %s90, %s91
    %p102 = scmp.eq.s32.totalorder %s14, 0
    %p103 = por %p101, %p102
    %p104 = scmp.ne.s32.totalorder %s90, %s91
    %p105 = scmp.eq.s32.totalorder %s15, 1
    %p106 = por %p104, %p105
    %p108 = scmp.ne.s32.totalorder %s91, %s107
    %p109 = scmp.eq.s32.totalorder %s15, 0
    %p110 = por %p108, %p109
    %p111 = scmp.le.s32.totalorder 1, %s9
    %p112 = scmp.lt.s32.totalorder %s9, 3
    %p113 = pnand %p111, %p112
    %p114 = pneg %p113
    // Predicated region
    $region9: #{policynet2d_conv_forward.4} parent=5 // pred_check
      _
    $region10: #{policynet2d_conv_forward.4} parent=5 // pred_check_branch
      %116 = sbr.rel (%p113) target = $region12
    $region11: #{policynet2d_conv_forward.4} parent=5 // pred_region
      %s117 = ssub.s32 %s9, 1
      // Predicated region
      $region13: #{policynet2d_conv_forward.4} parent=11 // pred_check
        %p118 = pneg %p56
      $region14: #{policynet2d_conv_forward.4} parent=11 // pred_check_branch
        %120 = sbr.rel (%p118) target = $region16
      $region15: #{policynet2d_conv_forward.4} parent=11 // pred_region
        _
      $region16: #{policynet2d_conv_forward.4} parent=11 // pred_fallthru
        _
      // Predicated region
      $region17: #{policynet2d_conv_forward.4} parent=11 // pred_check
        %p121 = pneg %p77
      $region18: #{policynet2d_conv_forward.4} parent=11 // pred_check_branch
        %123 = sbr.rel (%p121) target = $region20
      $region19: #{policynet2d_conv_forward.4} parent=11 // pred_region
        _
      $region20: #{policynet2d_conv_forward.4} parent=11 // pred_fallthru
        _
    $region12: #{policynet2d_conv_forward.4} parent=5 // pred_fallthru
      _
    %p124 = scmp.lt.s32.totalorder %s9, 2
    // Predicated region
    $region21: #{policynet2d_conv_forward.4} parent=5 // pred_check
      %p125 = pneg %p124
    $region22: #{policynet2d_conv_forward.4} parent=5 // pred_check_branch
      %127 = sbr.rel (%p125) target = $region24
    $region23: #{policynet2d_conv_forward.4} parent=5 // pred_region
      // Predicated region
      $region25: #{policynet2d_conv_forward.4} parent=23 // pred_check
        %p128 = pneg %p29
      $region26: #{policynet2d_conv_forward.4} parent=23 // pred_check_branch
        %130 = sbr.rel (%p128) target = $region28
      $region27: #{policynet2d_conv_forward.4} parent=23 // pred_region
        %s131 = smul.u32 50, %s9
        %p132 = scmp.lt.s32.totalorder %s131, 99
        %s133 = scalar_select %p132, %s131, 99
        %s134 = smul.addr %s133, 2
        %s135 = smul.addr %s134, 4
        %s136 = scalar_lea.vmem %s0, %s135
        %s137 = smul.u32 50, %s9
      $region28: #{policynet2d_conv_forward.4} parent=23 // pred_fallthru
        _
    $region24: #{policynet2d_conv_forward.4} parent=5 // pred_fallthru
      _
    %p138 = scmp.le.s32.totalorder 1, %s9
    %p139 = scmp.lt.s32.totalorder %s9, 3
    %p140 = pnand %p138, %p139
    %p141 = pneg %p140
    // Predicated region
    $region29: #{policynet2d_conv_forward.4} parent=5 // pred_check
      _
    $region30: #{policynet2d_conv_forward.4} parent=5 // pred_check_branch
      %143 = sbr.rel (%p140) target = $region32
    $region31: #{policynet2d_conv_forward.4} parent=5 // pred_region
      %s144 = ssub.s32 %s9, 1
      %s145 = smul.u32 50, %s14
      %p146 = scmp.lt.s32.totalorder %s145, 99
      %s147 = scalar_select %p146, %s145, 99
      %s148 = smul.addr %s147, 2
      %s149 = smul.addr %s148, 4
      %s150 = scalar_lea.vmem %s0, %s149
      %p151 = pneg %p35
      %p152 = pneg %p32
      %p153 = pneg %p56
      %p154 = pneg %p53
      %p155 = pneg %p77
      %p156 = pneg %p74
      %p157 = pneg %p103
      %p158 = pneg %p100
      %s159 = smul.u32 50, %s14
      %p160 = scmp.lt.s32.totalorder %s159, 99
      %s161 = scalar_select %p160, %s159, 99
      %s162 = smul.addr %s161, 4
      %s163 = scalar_lea.vmem %s3, %s162
      %s164 = smul.u32 50, %s14
      %p165 = scmp.lt.s32.totalorder %s164, 99
      %s166 = scalar_select %p165, %s164, 99
      %s167 = smul.addr %s166, 2
      %s168 = smul.addr %s167, 4
      %s169 = scalar_lea.vmem %s0, %s168
      %s170 = smul.u32 50, %s14
      %s171 = smul.u32 50, %s14
      %p172 = scmp.lt.s32.totalorder %s171, 99
      %s173 = scalar_select %p172, %s171, 99
      %s174 = smul.addr %s173, 4
      %s175 = scalar_lea.vmem %s3, %s174
      %s176 = smul.u32 50, %s14
      %v178 = vld [vmem:[%s169] sm:$0xff]
      %v179 = vld [vmem:[%s169 + $0x8] sm:$0xff]
      %v180 = vld [vmem:[%s169 + $0x10] sm:$0xff]
      %v181 = vld [vmem:[%s169 + $0x18] sm:$0xff]
      %v182 = vld [vmem:[%s169 + $0x20] sm:$0xff]
      %v183 = vld [vmem:[%s169 + $0x28] sm:$0xff]
      %v184 = vld [vmem:[%s169 + $0x30] sm:$0xff]
      %v185 = vld [vmem:[%s169 + $0x38] sm:$0xff]
      %v186 = vld [vmem:[%s169 + $0x40] sm:$0xff]
      %v187 = vld [vmem:[%s169 + $0x48] sm:$0xff]
      %v188 = vld [vmem:[%s169 + $0x50] sm:$0xff]
      %v189 = vld [vmem:[%s169 + $0x58] sm:$0xff]
      %v190 = vld [vmem:[%s169 + $0x60] sm:$0xff]
      %v191 = vld [vmem:[%s169 + $0x68] sm:$0xff]
      %v192 = vld [vmem:[%s169 + $0x70] sm:$0xff]
      %v193 = vld [vmem:[%s169 + $0x78] sm:$0xff]
      %v194 = vld [vmem:[%s169 + $0x80] sm:$0xff]
      %v195 = vld [vmem:[%s169 + $0x88] sm:$0xff]
      %v196 = vld [vmem:[%s169 + $0x90] sm:$0xff]
      %v197 = vld [vmem:[%s169 + $0x98] sm:$0xff]
      %v198 = vld [vmem:[%s169 + $0xa0] sm:$0xff]
      %v199 = vld [vmem:[%s169 + $0xa8] sm:$0xff]
      %v200 = vld [vmem:[%s169 + $0xb0] sm:$0xff]
      %v201 = vld [vmem:[%s169 + $0xb8] sm:$0xff]
      %v202 = vld [vmem:[%s169 + $0xc0] sm:$0xff]
      %v203 = vld [vmem:[%s169 + $0xc8] sm:$0xff]
      %v204 = vld [vmem:[%s169 + $0xd0] sm:$0xff]
      %v205 = vld [vmem:[%s169 + $0xd8] sm:$0xff]
      %v206 = vld [vmem:[%s169 + $0xe0] sm:$0xff]
      %v207 = vld [vmem:[%s169 + $0xe8] sm:$0xff]
      %v208 = vld [vmem:[%s169 + $0xf0] sm:$0xff]
      %v209 = vld [vmem:[%s169 + $0xf8] sm:$0xff]
      %v210 = vld [vmem:[%s169 + $0x100] sm:$0xff]
      %v211 = vld [vmem:[%s169 + $0x108] sm:$0xff]
      %v212 = vld [vmem:[%s169 + $0x110] sm:$0xff]
      %v213 = vld [vmem:[%s169 + $0x118] sm:$0xff]
      %v214 = vld [vmem:[%s169 + $0x120] sm:$0xff]
      %v215 = vld [vmem:[%s169 + $0x128] sm:$0xff]
      %v216 = vld [vmem:[%s169 + $0x130] sm:$0xff]
      %v217 = vld [vmem:[%s169 + $0x138] sm:$0xff]
      %v218 = vld [vmem:[%s169 + $0x140] sm:$0xff]
      %v219 = vld [vmem:[%s169 + $0x148] sm:$0xff]
      %v220 = vld [vmem:[%s169 + $0x150] sm:$0xff]
      %v221 = vld [vmem:[%s169 + $0x158] sm:$0xff]
      %v222 = vld [vmem:[%s169 + $0x160] sm:$0xff]
      %v223 = vld [vmem:[%s169 + $0x168] sm:$0xff]
      %v224 = vld [vmem:[%s169 + $0x170] sm:$0xff]
      %v225 = vld [vmem:[%s169 + $0x178] sm:$0xff]
      %v226 = vld [vmem:[%s169 + $0x180] sm:$0xff]
      %v227 = vld [vmem:[%s169 + $0x188] sm:$0xff]
      %v228 = vld [vmem:[%s1] sm:$0xf]
      %v229 = vld [vmem:[%s1 + $0x4] sm:$0xf]
      %v230 = vld [vmem:[%s1 + $0x8] sm:$0xf]
      %v231 = vld [vmem:[%s1 + $0xc] sm:$0xf]
      %v232 = vld [vmem:[%s1 + $0x10] sm:$0xf]
      %v233 = vld [vmem:[%s1 + $0x14] sm:$0xf]
      %v234 = vld [vmem:[%s1 + $0x18] sm:$0xf]
      %v235 = vld [vmem:[%s1 + $0x1c] sm:$0xf]
      %v236 = vld [vmem:[%s1 + $0x20] sm:$0xf]
      %v237 = vld [vmem:[%s1 + $0x24] sm:$0xf]
      %v238 = vld [vmem:[%s1 + $0x28] sm:$0xf]
      %v239 = vld [vmem:[%s1 + $0x2c] sm:$0xf]
      %v240 = vld [vmem:[%s1 + $0x30] sm:$0xf]
      %v241 = vld [vmem:[%s1 + $0x34] sm:$0xf]
      %v242 = vld [vmem:[%s1 + $0x38] sm:$0xf]
      %v243 = vld [vmem:[%s1 + $0x3c] sm:$0xf]
      %v244 = vld [vmem:[%s1 + $0x40] sm:$0xf]
      %v245 = vld [vmem:[%s1 + $0x44] sm:$0xf]
      %v246 = vld [vmem:[%s1 + $0x48] sm:$0xf]
      %v247 = vld [vmem:[%s1 + $0x4c] sm:$0xf]
      %v248 = vld [vmem:[%s1 + $0x50] sm:$0xf]
      %v249 = vld [vmem:[%s1 + $0x54] sm:$0xf]
      %v250 = vld [vmem:[%s1 + $0x58] sm:$0xf]
      %v251 = vld [vmem:[%s1 + $0x5c] sm:$0xf]
      %v252 = vld [vmem:[%s1 + $0x60] sm:$0xf]
      %v253 = vld [vmem:[%s1 + $0x64] sm:$0xf]
      %v254 = vld [vmem:[%s1 + $0x68] sm:$0xf]
      %v255 = vld [vmem:[%s1 + $0x6c] sm:$0xf]
      %v256 = vld [vmem:[%s1 + $0x70] sm:$0xf]
      %v257 = vld [vmem:[%s1 + $0x74] sm:$0xf]
      %v258 = vld [vmem:[%s1 + $0x78] sm:$0xf]
      %v259 = vld [vmem:[%s1 + $0x7c] sm:$0xf]
      %v260 = vld [vmem:[%s2] sm:$0x1]
      %v262 = vlaneseq
      %v263 = vshrl.u32 %v262, 7
      %v264 = vsub.s32 0, %v263
      %v265 = vrot.slane %v260, %v264
      %v317 = vunpack.c.l.b16 %v178
      %v318 = vunpack.c.h.b16 %v178
      %v319 = vunpack.c.l.b16 %v179
      %v320 = vunpack.c.h.b16 %v179
      %v321 = vunpack.c.l.b16 %v180
      %v322 = vunpack.c.h.b16 %v180
      %v323 = vunpack.c.l.b16 %v181
      %v324 = vunpack.c.h.b16 %v181
      %v325 = vunpack.c.l.b16 %v182
      %v326 = vunpack.c.h.b16 %v182
      %v327 = vunpack.c.l.b16 %v183
      %v328 = vunpack.c.h.b16 %v183
      %v329 = vunpack.c.l.b16 %v184
      %v330 = vunpack.c.h.b16 %v184
      %v331 = vunpack.c.l.b16 %v185
      %v332 = vunpack.c.h.b16 %v185
      %v333 = vunpack.c.l.b16 %v186
      %v334 = vunpack.c.h.b16 %v186
      %v335 = vunpack.c.l.b16 %v187
      %v336 = vunpack.c.h.b16 %v187
      %v337 = vunpack.c.l.b16 %v188
      %v338 = vunpack.c.h.b16 %v188
      %v339 = vunpack.c.l.b16 %v189
      %v340 = vunpack.c.h.b16 %v189
      %v341 = vunpack.c.l.b16 %v190
      %v342 = vunpack.c.h.b16 %v190
      %v343 = vunpack.c.l.b16 %v191
      %v344 = vunpack.c.h.b16 %v191
      %v345 = vunpack.c.l.b16 %v192
      %v346 = vunpack.c.h.b16 %v192
      %v347 = vunpack.c.l.b16 %v193
      %v348 = vunpack.c.h.b16 %v193
      %v349 = vunpack.c.l.b16 %v194
      %v350 = vunpack.c.h.b16 %v194
      %v351 = vunpack.c.l.b16 %v195
      %v352 = vunpack.c.h.b16 %v195
      %v353 = vunpack.c.l.b16 %v196
      %v354 = vunpack.c.h.b16 %v196
      %v355 = vunpack.c.l.b16 %v197
      %v356 = vunpack.c.h.b16 %v197
      %v357 = vunpack.c.l.b16 %v198
      %v358 = vunpack.c.h.b16 %v198
      %v359 = vunpack.c.l.b16 %v199
      %v360 = vunpack.c.h.b16 %v199
      %v361 = vunpack.c.l.b16 %v200
      %v362 = vunpack.c.h.b16 %v200
      %v363 = vunpack.c.l.b16 %v201
      %v364 = vunpack.c.h.b16 %v201
      %v365 = vunpack.c.l.b16 %v202
      %v366 = vunpack.c.h.b16 %v202
      %v367 = vunpack.c.l.b16 %v203
      %v368 = vunpack.c.h.b16 %v203
      %v369 = vunpack.c.l.b16 %v204
      %v370 = vunpack.c.h.b16 %v204
      %v371 = vunpack.c.l.b16 %v205
      %v372 = vunpack.c.h.b16 %v205
      %v373 = vunpack.c.l.b16 %v206
      %v374 = vunpack.c.h.b16 %v206
      %v375 = vunpack.c.l.b16 %v207
      %v376 = vunpack.c.h.b16 %v207
      %v377 = vunpack.c.l.b16 %v208
      %v378 = vunpack.c.h.b16 %v208
      %v379 = vunpack.c.l.b16 %v209
      %v380 = vunpack.c.h.b16 %v209
      %v381 = vunpack.c.l.b16 %v210
      %v382 = vunpack.c.h.b16 %v210
      %v383 = vunpack.c.l.b16 %v211
      %v384 = vunpack.c.h.b16 %v211
      %v385 = vunpack.c.l.b16 %v212
      %v386 = vunpack.c.h.b16 %v212
      %v387 = vunpack.c.l.b16 %v213
      %v388 = vunpack.c.h.b16 %v213
      %v389 = vunpack.c.l.b16 %v214
      %v390 = vunpack.c.h.b16 %v214
      %v391 = vunpack.c.l.b16 %v215
      %v392 = vunpack.c.h.b16 %v215
      %v393 = vunpack.c.l.b16 %v216
      %v394 = vunpack.c.h.b16 %v216
      %v395 = vunpack.c.l.b16 %v217
      %v396 = vunpack.c.h.b16 %v217
      %v397 = vunpack.c.l.b16 %v218
      %v398 = vunpack.c.h.b16 %v218
      %v399 = vunpack.c.l.b16 %v219
      %v400 = vunpack.c.h.b16 %v219
      %v401 = vunpack.c.l.b16 %v220
      %v402 = vunpack.c.h.b16 %v220
      %v403 = vunpack.c.l.b16 %v221
      %v404 = vunpack.c.h.b16 %v221
      %v405 = vunpack.c.l.b16 %v222
      %v406 = vunpack.c.h.b16 %v222
      %v407 = vunpack.c.l.b16 %v223
      %v408 = vunpack.c.h.b16 %v223
      %v409 = vunpack.c.l.b16 %v224
      %v410 = vunpack.c.h.b16 %v224
      %v411 = vunpack.c.l.b16 %v225
      %v412 = vunpack.c.h.b16 %v225
      %v413 = vunpack.c.l.b16 %v226
      %v414 = vunpack.c.h.b16 %v226
      %v415 = vunpack.c.l.b16 %v227
      %v416 = vunpack.c.h.b16 %v227
      %v417 = vpack.c.b16 %v319, %v317
      %v418 = vpack.c.b16 %v320, %v318
      %v419 = vpack.c.b16 %v323, %v321
      %v420 = vpack.c.b16 %v324, %v322
      %v421 = vpack.c.b16 %v327, %v325
      %v422 = vpack.c.b16 %v328, %v326
      %v423 = vpack.c.b16 %v331, %v329
      %v424 = vpack.c.b16 %v332, %v330
      %v425 = vpack.c.b16 %v335, %v333
      %v426 = vpack.c.b16 %v336, %v334
      %v427 = vpack.c.b16 %v339, %v337
      %v428 = vpack.c.b16 %v340, %v338
      %v429 = vpack.c.b16 %v343, %v341
      %v430 = vpack.c.b16 %v344, %v342
      %v431 = vpack.c.b16 %v347, %v345
      %v432 = vpack.c.b16 %v348, %v346
      %v433 = vpack.c.b16 %v351, %v349
      %v434 = vpack.c.b16 %v352, %v350
      %v435 = vpack.c.b16 %v355, %v353
      %v436 = vpack.c.b16 %v356, %v354
      %v437 = vpack.c.b16 %v359, %v357
      %v438 = vpack.c.b16 %v360, %v358
      %v439 = vpack.c.b16 %v363, %v361
      %v440 = vpack.c.b16 %v364, %v362
      %v441 = vpack.c.b16 %v367, %v365
      %v442 = vpack.c.b16 %v368, %v366
      %v443 = vpack.c.b16 %v371, %v369
      %v444 = vpack.c.b16 %v372, %v370
      %v445 = vpack.c.b16 %v375, %v373
      %v446 = vpack.c.b16 %v376, %v374
      %v447 = vpack.c.b16 %v379, %v377
      %v448 = vpack.c.b16 %v380, %v378
      %v449 = vpack.c.b16 %v383, %v381
      %v450 = vpack.c.b16 %v384, %v382
      %v451 = vpack.c.b16 %v387, %v385
      %v452 = vpack.c.b16 %v388, %v386
      %v453 = vpack.c.b16 %v391, %v389
      %v454 = vpack.c.b16 %v392, %v390
      %v455 = vpack.c.b16 %v395, %v393
      %v456 = vpack.c.b16 %v396, %v394
      %v457 = vpack.c.b16 %v399, %v397
      %v458 = vpack.c.b16 %v400, %v398
      %v459 = vpack.c.b16 %v403, %v401
      %v460 = vpack.c.b16 %v404, %v402
      %v461 = vpack.c.b16 %v407, %v405
      %v462 = vpack.c.b16 %v408, %v406
      %v463 = vpack.c.b16 %v411, %v409
      %v464 = vpack.c.b16 %v412, %v410
      %v465 = vpack.c.b16 %v415, %v413
      %v466 = vpack.c.b16 %v416, %v414
      %v549 = vunpack.c.l.b16 %v228
      %v550 = vunpack.c.l.b16 %v229
      %v551 = vunpack.c.l.b16 %v230
      %v552 = vunpack.c.l.b16 %v231
      %v553 = vunpack.c.l.b16 %v232
      %v554 = vunpack.c.l.b16 %v233
      %v555 = vunpack.c.l.b16 %v234
      %v556 = vunpack.c.l.b16 %v235
      %v557 = vunpack.c.l.b16 %v236
      %v558 = vunpack.c.l.b16 %v237
      %v559 = vunpack.c.l.b16 %v238
      %v560 = vunpack.c.l.b16 %v239
      %v561 = vunpack.c.l.b16 %v240
      %v562 = vunpack.c.l.b16 %v241
      %v563 = vunpack.c.l.b16 %v242
      %v564 = vunpack.c.l.b16 %v243
      %v565 = vunpack.c.l.b16 %v244
      %v566 = vunpack.c.l.b16 %v245
      %v567 = vunpack.c.l.b16 %v246
      %v568 = vunpack.c.l.b16 %v247
      %v569 = vunpack.c.l.b16 %v248
      %v570 = vunpack.c.l.b16 %v249
      %v571 = vunpack.c.l.b16 %v250
      %v572 = vunpack.c.l.b16 %v251
      %v573 = vunpack.c.l.b16 %v252
      %v574 = vunpack.c.l.b16 %v253
      %v575 = vunpack.c.l.b16 %v254
      %v576 = vunpack.c.l.b16 %v255
      %v577 = vunpack.c.l.b16 %v256
      %v578 = vunpack.c.l.b16 %v257
      %v579 = vunpack.c.l.b16 %v258
      %v580 = vunpack.c.l.b16 %v259
      %v581 = vpack.c.b16 %v550, %v549
      %v582 = vpack.c.b16 %v552, %v551
      %v583 = vpack.c.b16 %v554, %v553
      %v584 = vpack.c.b16 %v556, %v555
      %v585 = vpack.c.b16 %v558, %v557
      %v586 = vpack.c.b16 %v560, %v559
      %v587 = vpack.c.b16 %v562, %v561
      %v588 = vpack.c.b16 %v564, %v563
      %v589 = vpack.c.b16 %v566, %v565
      %v590 = vpack.c.b16 %v568, %v567
      %v591 = vpack.c.b16 %v570, %v569
      %v592 = vpack.c.b16 %v572, %v571
      %v593 = vpack.c.b16 %v574, %v573
      %v594 = vpack.c.b16 %v576, %v575
      %v595 = vpack.c.b16 %v578, %v577
      %v596 = vpack.c.b16 %v580, %v579
      %613 = vmatprep.subr.bf16.mxu0 0
      %614 = vmatpush1.bf16.msra.mxu0 %v581
      %615 = vmatprep.subr.bf16.mxu0 0
      %616 = vmatpush1.bf16.msra.mxu0 %v582
      %617 = vmatprep.subr.bf16.mxu0 0
      %618 = vmatpush1.bf16.msra.mxu0 %v583
      %619 = vmatprep.subr.bf16.mxu0 0
      %620 = vmatpush1.bf16.msra.mxu0 %v584
      %621 = vmatprep.subr.bf16.mxu0 0
      %622 = vmatpush1.bf16.msra.mxu0 %v585
      %623 = vmatprep.subr.bf16.mxu0 0
      %624 = vmatpush1.bf16.msra.mxu0 %v586
      %625 = vmatprep.subr.bf16.mxu0 0
      %626 = vmatpush1.bf16.msra.mxu0 %v587
      %627 = vmatprep.subr.bf16.mxu0 0
      %628 = vmatpush1.bf16.msra.mxu0 %v588
      %629 = vmatprep.subr.bf16.mxu0 0
      %630 = vmatpush1.bf16.msra.mxu0 %v589
      %631 = vmatprep.subr.bf16.mxu0 0
      %632 = vmatpush1.bf16.msra.mxu0 %v590
      %633 = vmatprep.subr.bf16.mxu0 0
      %634 = vmatpush1.bf16.msra.mxu0 %v591
      %635 = vmatprep.subr.bf16.mxu0 0
      %636 = vmatpush1.bf16.msra.mxu0 %v592
      %637 = vmatprep.subr.bf16.mxu0 0
      %638 = vmatpush1.bf16.msra.mxu0 %v593
      %639 = vmatprep.subr.bf16.mxu0 0
      %640 = vmatpush1.bf16.msra.mxu0 %v594
      %641 = vmatprep.subr.bf16.mxu0 0
      %642 = vmatpush1.bf16.msra.mxu0 %v595
      %643 = vmatprep.subr.bf16.mxu0 0
      %644 = vmatpush1.bf16.msra.mxu0 %v596
      %645 = vmatprep.mubr.bf16.mxu0 %v418
      %646 = vmatmul.mubr.bf16.gmra.mrb[0].mxu0 %v417
      %v647 = vpop.f32.mrb[0].mxu0
      %v648 = vadd.f32 %v265, %v647
      %v649 = vpop.f32.mrb[0].mxu0
      %v650 = vpop.f32.mrb[0].mxu0
      %v651 = vadd.f32 %v265, %v650
      %v652 = vpop.f32.mrb[0].mxu0
      %653 = vmatprep.mubr.bf16.mxu0 %v420
      %654 = vmatmul.mubr.bf16.gmra.mrb[0].mxu0 %v419
      %v655 = vpop.f32.mrb[0].mxu0
      %v656 = vadd.f32 %v265, %v655
      %v657 = vpop.f32.mrb[0].mxu0
      %v658 = vpop.f32.mrb[0].mxu0
      %v659 = vadd.f32 %v265, %v658
      %v660 = vpop.f32.mrb[0].mxu0
      %661 = vmatprep.mubr.bf16.mxu0 %v422
      %662 = vmatmul.mubr.bf16.gmra.mrb[0].mxu0 %v421
      %v663 = vpop.f32.mrb[0].mxu0
      %v664 = vadd.f32 %v265, %v663
      %v665 = vpop.f32.mrb[0].mxu0
      %v666 = vpop.f32.mrb[0].mxu0
      %v667 = vadd.f32 %v265, %v666
      %v668 = vpop.f32.mrb[0].mxu0
      %669 = vmatprep.mubr.bf16.mxu0 %v424
      %670 = vmatmul.mubr.bf16.gmra.mrb[0].mxu0 %v423
      %v671 = vpop.f32.mrb[0].mxu0
      %v672 = vadd.f32 %v265, %v671
      %v673 = vpop.f32.mrb[0].mxu0
      %v674 = vpop.f32.mrb[0].mxu0
      %v675 = vadd.f32 %v265, %v674
      %v676 = vpop.f32.mrb[0].mxu0
      %677 = vmatprep.mubr.bf16.mxu0 %v426
      %678 = vmatmul.mubr.bf16.gmra.mrb[0].mxu0 %v425
      %v679 = vpop.f32.mrb[0].mxu0
      %v680 = vadd.f32 %v265, %v679
      %v681 = vpop.f32.mrb[0].mxu0
      %v682 = vpop.f32.mrb[0].mxu0
      %v683 = vadd.f32 %v265, %v682
      %v684 = vpop.f32.mrb[0].mxu0
      %685 = vmatprep.mubr.bf16.mxu0 %v428
      %686 = vmatmul.mubr.bf16.gmra.mrb[0].mxu0 %v427
      %v687 = vpop.f32.mrb[0].mxu0
      %v688 = vadd.f32 %v265, %v687
      %v689 = vpop.f32.mrb[0].mxu0
      %v690 = vpop.f32.mrb[0].mxu0
      %v691 = vadd.f32 %v265, %v690
      %v692 = vpop.f32.mrb[0].mxu0
      %693 = vmatprep.mubr.bf16.mxu0 %v430
      %694 = vmatmul.mubr.bf16.gmra.mrb[0].mxu0 %v429
      %v695 = vpop.f32.mrb[0].mxu0
      %v696 = vadd.f32 %v265, %v695
      %v697 = vpop.f32.mrb[0].mxu0
      %v698 = vpop.f32.mrb[0].mxu0
      %v699 = vadd.f32 %v265, %v698
      %v700 = vpop.f32.mrb[0].mxu0
      %701 = vmatprep.mubr.bf16.mxu0 %v432
      %702 = vmatmul.mubr.bf16.gmra.mrb[0].mxu0 %v431
      %v703 = vpop.f32.mrb[0].mxu0
      %v704 = vadd.f32 %v265, %v703
      %v705 = vpop.f32.mrb[0].mxu0
      %v706 = vpop.f32.mrb[0].mxu0
      %v707 = vadd.f32 %v265, %v706
      %v708 = vpop.f32.mrb[0].mxu0
      %709 = vmatprep.mubr.bf16.mxu0 %v434
      %710 = vmatmul.mubr.bf16.gmra.mrb[0].mxu0 %v433
      %v711 = vpop.f32.mrb[0].mxu0
      %v712 = vadd.f32 %v265, %v711
      %v713 = vpop.f32.mrb[0].mxu0
      %v714 = vpop.f32.mrb[0].mxu0
      %v715 = vadd.f32 %v265, %v714
      %v716 = vpop.f32.mrb[0].mxu0
      %717 = vmatprep.mubr.bf16.mxu0 %v436
      %718 = vmatmul.mubr.bf16.gmra.mrb[0].mxu0 %v435
      %v719 = vpop.f32.mrb[0].mxu0
      %v720 = vadd.f32 %v265, %v719
      %v721 = vpop.f32.mrb[0].mxu0
      %v722 = vpop.f32.mrb[0].mxu0
      %v723 = vadd.f32 %v265, %v722
      %v724 = vpop.f32.mrb[0].mxu0
      %725 = vmatprep.mubr.bf16.mxu0 %v438
      %726 = vmatmul.mubr.bf16.gmra.mrb[0].mxu0 %v437
      %v727 = vpop.f32.mrb[0].mxu0
      %v728 = vadd.f32 %v265, %v727
      %v729 = vpop.f32.mrb[0].mxu0
      %v730 = vpop.f32.mrb[0].mxu0
      %v731 = vadd.f32 %v265, %v730
      %v732 = vpop.f32.mrb[0].mxu0
      %733 = vmatprep.mubr.bf16.mxu0 %v440
      %734 = vmatmul.mubr.bf16.gmra.mrb[0].mxu0 %v439
      %v735 = vpop.f32.mrb[0].mxu0
      %v736 = vadd.f32 %v265, %v735
      %v737 = vpop.f32.mrb[0].mxu0
      %v738 = vpop.f32.mrb[0].mxu0
      %v739 = vadd.f32 %v265, %v738
      %v740 = vpop.f32.mrb[0].mxu0
      %741 = vmatprep.mubr.bf16.mxu0 %v442
      %742 = vmatmul.mubr.bf16.gmra.mrb[0].mxu0 %v441
      %v743 = vpop.f32.mrb[0].mxu0
      %v744 = vadd.f32 %v265, %v743
      %v745 = vpop.f32.mrb[0].mxu0
      %v746 = vpop.f32.mrb[0].mxu0
      %v747 = vadd.f32 %v265, %v746
      %v748 = vpop.f32.mrb[0].mxu0
      %749 = vmatprep.mubr.bf16.mxu0 %v444
      %750 = vmatmul.mubr.bf16.gmra.mrb[0].mxu0 %v443
      %v751 = vpop.f32.mrb[0].mxu0
      %v752 = vadd.f32 %v265, %v751
      %v753 = vpop.f32.mrb[0].mxu0
      %v754 = vpop.f32.mrb[0].mxu0
      %v755 = vadd.f32 %v265, %v754
      %v756 = vpop.f32.mrb[0].mxu0
      %757 = vmatprep.mubr.bf16.mxu0 %v446
      %758 = vmatmul.mubr.bf16.gmra.mrb[0].mxu0 %v445
      %v759 = vpop.f32.mrb[0].mxu0
      %v760 = vadd.f32 %v265, %v759
      %v761 = vpop.f32.mrb[0].mxu0
      %v762 = vpop.f32.mrb[0].mxu0
      %v763 = vadd.f32 %v265, %v762
      %v764 = vpop.f32.mrb[0].mxu0
      %765 = vmatprep.mubr.bf16.mxu0 %v448
      %766 = vmatmul.mubr.bf16.gmra.mrb[0].mxu0 %v447
      %v767 = vpop.f32.mrb[0].mxu0
      %v768 = vadd.f32 %v265, %v767
      %v769 = vpop.f32.mrb[0].mxu0
      %v770 = vpop.f32.mrb[0].mxu0
      %v771 = vadd.f32 %v265, %v770
      %v772 = vpop.f32.mrb[0].mxu0
      %773 = vmatprep.mubr.bf16.mxu0 %v450
      %774 = vmatmul.mubr.bf16.gmra.mrb[0].mxu0 %v449
      %v775 = vpop.f32.mrb[0].mxu0
      %v776 = vadd.f32 %v265, %v775
      %v777 = vpop.f32.mrb[0].mxu0
      %v778 = vpop.f32.mrb[0].mxu0
      %v779 = vadd.f32 %v265, %v778
      %v780 = vpop.f32.mrb[0].mxu0
      %781 = vmatprep.mubr.bf16.mxu0 %v452
      %782 = vmatmul.mubr.bf16.gmra.mrb[0].mxu0 %v451
      %v783 = vpop.f32.mrb[0].mxu0
      %v784 = vadd.f32 %v265, %v783
      %v785 = vpop.f32.mrb[0].mxu0
      %v786 = vpop.f32.mrb[0].mxu0
      %v787 = vadd.f32 %v265, %v786
      %v788 = vpop.f32.mrb[0].mxu0
      %789 = vmatprep.mubr.bf16.mxu0 %v454
      %790 = vmatmul.mubr.bf16.gmra.mrb[0].mxu0 %v453
      %v791 = vpop.f32.mrb[0].mxu0
      %v792 = vadd.f32 %v265, %v791
      %v793 = vpop.f32.mrb[0].mxu0
      %v794 = vpop.f32.mrb[0].mxu0
      %v795 = vadd.f32 %v265, %v794
      %v796 = vpop.f32.mrb[0].mxu0
      %797 = vmatprep.mubr.bf16.mxu0 %v456
      %798 = vmatmul.mubr.bf16.gmra.mrb[0].mxu0 %v455
      %v799 = vpop.f32.mrb[0].mxu0
      %v800 = vadd.f32 %v265, %v799
      %v801 = vpop.f32.mrb[0].mxu0
      %v802 = vpop.f32.mrb[0].mxu0
      %v803 = vadd.f32 %v265, %v802
      %v804 = vpop.f32.mrb[0].mxu0
      %805 = vmatprep.mubr.bf16.mxu0 %v458
      %806 = vmatmul.mubr.bf16.gmra.mrb[0].mxu0 %v457
      %v807 = vpop.f32.mrb[0].mxu0
      %v808 = vadd.f32 %v265, %v807
      %v809 = vpop.f32.mrb[0].mxu0
      %v810 = vpop.f32.mrb[0].mxu0
      %v811 = vadd.f32 %v265, %v810
      %v812 = vpop.f32.mrb[0].mxu0
      %813 = vmatprep.mubr.bf16.mxu0 %v460
      %814 = vmatmul.mubr.bf16.gmra.mrb[0].mxu0 %v459
      %v815 = vpop.f32.mrb[0].mxu0
      %v816 = vadd.f32 %v265, %v815
      %v817 = vpop.f32.mrb[0].mxu0
      %v818 = vpop.f32.mrb[0].mxu0
      %v819 = vadd.f32 %v265, %v818
      %v820 = vpop.f32.mrb[0].mxu0
      %821 = vmatprep.mubr.bf16.mxu0 %v462
      %822 = vmatmul.mubr.bf16.gmra.mrb[0].mxu0 %v461
      %v823 = vpop.f32.mrb[0].mxu0
      %v824 = vadd.f32 %v265, %v823
      %v825 = vpop.f32.mrb[0].mxu0
      %v826 = vpop.f32.mrb[0].mxu0
      %v827 = vadd.f32 %v265, %v826
      %v828 = vpop.f32.mrb[0].mxu0
      %829 = vmatprep.mubr.bf16.mxu0 %v464
      %830 = vmatmul.mubr.bf16.gmra.mrb[0].mxu0 %v463
      %v831 = vpop.f32.mrb[0].mxu0
      %v832 = vadd.f32 %v265, %v831
      %v833 = vpop.f32.mrb[0].mxu0
      %v834 = vpop.f32.mrb[0].mxu0
      %v835 = vadd.f32 %v265, %v834
      %v836 = vpop.f32.mrb[0].mxu0
      %837 = vmatprep.mubr.bf16.mxu0 %v466
      %838 = vmatmul.mubr.bf16.gmra.mrb[0].mxu0 %v465
      %v839 = vpop.f32.mrb[0].mxu0
      %v840 = vadd.f32 %v265, %v839
      %v841 = vpop.f32.mrb[0].mxu0
      %v842 = vpop.f32.mrb[0].mxu0
      %v843 = vadd.f32 %v265, %v842
      %v844 = vpop.f32.mrb[0].mxu0
      %845 = vdwg.mxu0
      %v846 = vmax.f32 %v648, 0.0
      %v847 = vmax.f32 %v651, 0.0
      %v848 = vmax.f32 %v656, 0.0
      %v849 = vmax.f32 %v659, 0.0
      %v850 = vmax.f32 %v664, 0.0
      %v851 = vmax.f32 %v667, 0.0
      %v852 = vmax.f32 %v672, 0.0
      %v853 = vmax.f32 %v675, 0.0
      %v854 = vmax.f32 %v680, 0.0
      %v855 = vmax.f32 %v683, 0.0
      %v856 = vmax.f32 %v688, 0.0
      %v857 = vmax.f32 %v691, 0.0
      %v858 = vmax.f32 %v696, 0.0
      %v859 = vmax.f32 %v699, 0.0
      %v860 = vmax.f32 %v704, 0.0
      %v861 = vmax.f32 %v707, 0.0
      %v862 = vmax.f32 %v712, 0.0
      %v863 = vmax.f32 %v715, 0.0
      %v864 = vmax.f32 %v720, 0.0
      %v865 = vmax.f32 %v723, 0.0
      %v866 = vmax.f32 %v728, 0.0
      %v867 = vmax.f32 %v731, 0.0
      %v868 = vmax.f32 %v736, 0.0
      %v869 = vmax.f32 %v739, 0.0
      %v870 = vmax.f32 %v744, 0.0
      %v871 = vmax.f32 %v747, 0.0
      %v872 = vmax.f32 %v752, 0.0
      %v873 = vmax.f32 %v755, 0.0
      %v874 = vmax.f32 %v760, 0.0
      %v875 = vmax.f32 %v763, 0.0
      %v876 = vmax.f32 %v768, 0.0
      %v877 = vmax.f32 %v771, 0.0
      %v878 = vmax.f32 %v776, 0.0
      %v879 = vmax.f32 %v779, 0.0
      %v880 = vmax.f32 %v784, 0.0
      %v881 = vmax.f32 %v787, 0.0
      %v882 = vmax.f32 %v792, 0.0
      %v883 = vmax.f32 %v795, 0.0
      %v884 = vmax.f32 %v800, 0.0
      %v885 = vmax.f32 %v803, 0.0
      %v886 = vmax.f32 %v808, 0.0
      %v887 = vmax.f32 %v811, 0.0
      %v888 = vmax.f32 %v816, 0.0
      %v889 = vmax.f32 %v819, 0.0
      %v890 = vmax.f32 %v824, 0.0
      %v891 = vmax.f32 %v827, 0.0
      %v892 = vmax.f32 %v832, 0.0
      %v893 = vmax.f32 %v835, 0.0
      %v894 = vmax.f32 %v840, 0.0
      %v895 = vmax.f32 %v843, 0.0
      %v896 = vpack.c.bf16 %v847, %v846
      %v897 = vpack.c.bf16 %v849, %v848
      %v898 = vpack.c.bf16 %v851, %v850
      %v899 = vpack.c.bf16 %v853, %v852
      %v900 = vpack.c.bf16 %v855, %v854
      %v901 = vpack.c.bf16 %v857, %v856
      %v902 = vpack.c.bf16 %v859, %v858
      %v903 = vpack.c.bf16 %v861, %v860
      %v904 = vpack.c.bf16 %v863, %v862
      %v905 = vpack.c.bf16 %v865, %v864
      %v906 = vpack.c.bf16 %v867, %v866
      %v907 = vpack.c.bf16 %v869, %v868
      %v908 = vpack.c.bf16 %v871, %v870
      %v909 = vpack.c.bf16 %v873, %v872
      %v910 = vpack.c.bf16 %v875, %v874
      %v911 = vpack.c.bf16 %v877, %v876
      %v912 = vpack.c.bf16 %v879, %v878
      %v913 = vpack.c.bf16 %v881, %v880
      %v914 = vpack.c.bf16 %v883, %v882
      %v915 = vpack.c.bf16 %v885, %v884
      %v916 = vpack.c.bf16 %v887, %v886
      %v917 = vpack.c.bf16 %v889, %v888
      %v918 = vpack.c.bf16 %v891, %v890
      %v919 = vpack.c.bf16 %v893, %v892
      %v920 = vpack.c.bf16 %v895, %v894
      %v946 = vunpack.c.l.b16 %v896
      %v947 = vunpack.c.h.b16 %v896
      %v948 = vunpack.c.l.b16 %v897
      %v949 = vunpack.c.h.b16 %v897
      %v950 = vunpack.c.l.b16 %v898
      %v951 = vunpack.c.h.b16 %v898
      %v952 = vunpack.c.l.b16 %v899
      %v953 = vunpack.c.h.b16 %v899
      %v954 = vunpack.c.l.b16 %v900
      %v955 = vunpack.c.h.b16 %v900
      %v956 = vunpack.c.l.b16 %v901
      %v957 = vunpack.c.h.b16 %v901
      %v958 = vunpack.c.l.b16 %v902
      %v959 = vunpack.c.h.b16 %v902
      %v960 = vunpack.c.l.b16 %v903
      %v961 = vunpack.c.h.b16 %v903
      %v962 = vunpack.c.l.b16 %v904
      %v963 = vunpack.c.h.b16 %v904
      %v964 = vunpack.c.l.b16 %v905
      %v965 = vunpack.c.h.b16 %v905
      %v966 = vunpack.c.l.b16 %v906
      %v967 = vunpack.c.h.b16 %v906
      %v968 = vunpack.c.l.b16 %v907
      %v969 = vunpack.c.h.b16 %v907
      %v970 = vunpack.c.l.b16 %v908
      %v971 = vunpack.c.h.b16 %v908
      %v972 = vunpack.c.l.b16 %v909
      %v973 = vunpack.c.h.b16 %v909
      %v974 = vunpack.c.l.b16 %v910
      %v975 = vunpack.c.h.b16 %v910
      %v976 = vunpack.c.l.b16 %v911
      %v977 = vunpack.c.h.b16 %v911
      %v978 = vunpack.c.l.b16 %v912
      %v979 = vunpack.c.h.b16 %v912
      %v980 = vunpack.c.l.b16 %v913
      %v981 = vunpack.c.h.b16 %v913
      %v982 = vunpack.c.l.b16 %v914
      %v983 = vunpack.c.h.b16 %v914
      %v984 = vunpack.c.l.b16 %v915
      %v985 = vunpack.c.h.b16 %v915
      %v986 = vunpack.c.l.b16 %v916
      %v987 = vunpack.c.h.b16 %v916
      %v988 = vunpack.c.l.b16 %v917
      %v989 = vunpack.c.h.b16 %v917
      %v990 = vunpack.c.l.b16 %v918
      %v991 = vunpack.c.h.b16 %v918
      %v992 = vunpack.c.l.b16 %v919
      %v993 = vunpack.c.h.b16 %v919
      %v994 = vunpack.c.l.b16 %v920
      %v995 = vunpack.c.h.b16 %v920
      %v996 = vpack.c.b16 %v946, %v946
      %v997 = vpack.c.b16 %v947, %v947
      %v998 = vpack.c.b16 %v948, %v948
      %v999 = vpack.c.b16 %v949, %v949
      %v1000 = vpack.c.b16 %v950, %v950
      %v1001 = vpack.c.b16 %v951, %v951
      %v1002 = vpack.c.b16 %v952, %v952
      %v1003 = vpack.c.b16 %v953, %v953
      %v1004 = vpack.c.b16 %v954, %v954
      %v1005 = vpack.c.b16 %v955, %v955
      %v1006 = vpack.c.b16 %v956, %v956
      %v1007 = vpack.c.b16 %v957, %v957
      %v1008 = vpack.c.b16 %v958, %v958
      %v1009 = vpack.c.b16 %v959, %v959
      %v1010 = vpack.c.b16 %v960, %v960
      %v1011 = vpack.c.b16 %v961, %v961
      %v1012 = vpack.c.b16 %v962, %v962
      %v1013 = vpack.c.b16 %v963, %v963
      %v1014 = vpack.c.b16 %v964, %v964
      %v1015 = vpack.c.b16 %v965, %v965
      %v1016 = vpack.c.b16 %v966, %v966
      %v1017 = vpack.c.b16 %v967, %v967
      %v1018 = vpack.c.b16 %v968, %v968
      %v1019 = vpack.c.b16 %v969, %v969
      %v1020 = vpack.c.b16 %v970, %v970
      %v1021 = vpack.c.b16 %v971, %v971
      %v1022 = vpack.c.b16 %v972, %v972
      %v1023 = vpack.c.b16 %v973, %v973
      %v1024 = vpack.c.b16 %v974, %v974
      %v1025 = vpack.c.b16 %v975, %v975
      %v1026 = vpack.c.b16 %v976, %v976
      %v1027 = vpack.c.b16 %v977, %v977
      %v1028 = vpack.c.b16 %v978, %v978
      %v1029 = vpack.c.b16 %v979, %v979
      %v1030 = vpack.c.b16 %v980, %v980
      %v1031 = vpack.c.b16 %v981, %v981
      %v1032 = vpack.c.b16 %v982, %v982
      %v1033 = vpack.c.b16 %v983, %v983
      %v1034 = vpack.c.b16 %v984, %v984
      %v1035 = vpack.c.b16 %v985, %v985
      %v1036 = vpack.c.b16 %v986, %v986
      %v1037 = vpack.c.b16 %v987, %v987
      %v1038 = vpack.c.b16 %v988, %v988
      %v1039 = vpack.c.b16 %v989, %v989
      %v1040 = vpack.c.b16 %v990, %v990
      %v1041 = vpack.c.b16 %v991, %v991
      %v1042 = vpack.c.b16 %v992, %v992
      %v1043 = vpack.c.b16 %v993, %v993
      %v1044 = vpack.c.b16 %v994, %v994
      %v1045 = vpack.c.b16 %v995, %v995
      %1096 = vst [vmem:[%s175] sm:$0xf] %v996
      %1097 = vst [vmem:[%s175 + $0x4] sm:$0xf] %v997
      %1098 = vst [vmem:[%s175 + $0x8] sm:$0xf] %v998
      %1099 = vst [vmem:[%s175 + $0xc] sm:$0xf] %v999
      %1100 = vst [vmem:[%s175 + $0x10] sm:$0xf] %v1000
      %1101 = vst [vmem:[%s175 + $0x14] sm:$0xf] %v1001
      %1102 = vst [vmem:[%s175 + $0x18] sm:$0xf] %v1002
      %1103 = vst [vmem:[%s175 + $0x1c] sm:$0xf] %v1003
      %1104 = vst [vmem:[%s175 + $0x20] sm:$0xf] %v1004
      %1105 = vst [vmem:[%s175 + $0x24] sm:$0xf] %v1005
      %1106 = vst [vmem:[%s175 + $0x28] sm:$0xf] %v1006
      %1107 = vst [vmem:[%s175 + $0x2c] sm:$0xf] %v1007
      %1108 = vst [vmem:[%s175 + $0x30] sm:$0xf] %v1008
      %1109 = vst [vmem:[%s175 + $0x34] sm:$0xf] %v1009
      %1110 = vst [vmem:[%s175 + $0x38] sm:$0xf] %v1010
      %1111 = vst [vmem:[%s175 + $0x3c] sm:$0xf] %v1011
      %1112 = vst [vmem:[%s175 + $0x40] sm:$0xf] %v1012
      %1113 = vst [vmem:[%s175 + $0x44] sm:$0xf] %v1013
      %1114 = vst [vmem:[%s175 + $0x48] sm:$0xf] %v1014
      %1115 = vst [vmem:[%s175 + $0x4c] sm:$0xf] %v1015
      %1116 = vst [vmem:[%s175 + $0x50] sm:$0xf] %v1016
      %1117 = vst [vmem:[%s175 + $0x54] sm:$0xf] %v1017
      %1118 = vst [vmem:[%s175 + $0x58] sm:$0xf] %v1018
      %1119 = vst [vmem:[%s175 + $0x5c] sm:$0xf] %v1019
      %1120 = vst [vmem:[%s175 + $0x60] sm:$0xf] %v1020
      %1121 = vst [vmem:[%s175 + $0x64] sm:$0xf] %v1021
      %1122 = vst [vmem:[%s175 + $0x68] sm:$0xf] %v1022
      %1123 = vst [vmem:[%s175 + $0x6c] sm:$0xf] %v1023
      %1124 = vst [vmem:[%s175 + $0x70] sm:$0xf] %v1024
      %1125 = vst [vmem:[%s175 + $0x74] sm:$0xf] %v1025
      %1126 = vst [vmem:[%s175 + $0x78] sm:$0xf] %v1026
      %1127 = vst [vmem:[%s175 + $0x7c] sm:$0xf] %v1027
      %1128 = vst [vmem:[%s175 + $0x80] sm:$0xf] %v1028
      %1129 = vst [vmem:[%s175 + $0x84] sm:$0xf] %v1029
      %1130 = vst [vmem:[%s175 + $0x88] sm:$0xf] %v1030
      %1131 = vst [vmem:[%s175 + $0x8c] sm:$0xf] %v1031
      %1132 = vst [vmem:[%s175 + $0x90] sm:$0xf] %v1032
      %1133 = vst [vmem:[%s175 + $0x94] sm:$0xf] %v1033
      %1134 = vst [vmem:[%s175 + $0x98] sm:$0xf] %v1034
      %1135 = vst [vmem:[%s175 + $0x9c] sm:$0xf] %v1035
      %1136 = vst [vmem:[%s175 + $0xa0] sm:$0xf] %v1036
      %1137 = vst [vmem:[%s175 + $0xa4] sm:$0xf] %v1037
      %1138 = vst [vmem:[%s175 + $0xa8] sm:$0xf] %v1038
      %1139 = vst [vmem:[%s175 + $0xac] sm:$0xf] %v1039
      %1140 = vst [vmem:[%s175 + $0xb0] sm:$0xf] %v1040
      %1141 = vst [vmem:[%s175 + $0xb4] sm:$0xf] %v1041
      %1142 = vst [vmem:[%s175 + $0xb8] sm:$0xf] %v1042
      %1143 = vst [vmem:[%s175 + $0xbc] sm:$0xf] %v1043
      %1144 = vst [vmem:[%s175 + $0xc0] sm:$0xf] %v1044
      %1145 = vst [vmem:[%s175 + $0xc4] sm:$0xf] %v1045
      %s1146 = smul.u32 50, %s14
      %p1147 = scmp.lt.s32.totalorder %s1146, 99
      %s1148 = scalar_select %p1147, %s1146, 99
      %s1149 = smul.addr %s1148, 4
      %s1150 = scalar_lea.vmem %s3, %s1149
      // Predicated region
      $region33: #{policynet2d_conv_forward.4} parent=31 // pred_check
        %p1151 = pneg %p100
      $region34: #{policynet2d_conv_forward.4} parent=31 // pred_check_branch
        %1153 = sbr.rel (%p1151) target = $region36
      $region35: #{policynet2d_conv_forward.4} parent=31 // pred_region
        %s1154 = smul.u32 50, %s14
      $region36: #{policynet2d_conv_forward.4} parent=31 // pred_fallthru
        _
    $region32: #{policynet2d_conv_forward.4} parent=5 // pred_fallthru
      _
    %p1155 = scmp.le.s32.totalorder 2, %s9
    // Predicated region
    $region37: #{policynet2d_conv_forward.4} parent=5 // pred_check
      %p1156 = pneg %p1155
    $region38: #{policynet2d_conv_forward.4} parent=5 // pred_check_branch
      %1158 = sbr.rel (%p1156) target = $region40
    $region39: #{policynet2d_conv_forward.4} parent=5 // pred_region
      %s1159 = ssub.s32 %s9, 2
      // Predicated region
      $region41: #{policynet2d_conv_forward.4} parent=39 // pred_check
        %p1160 = pneg %p106
      $region42: #{policynet2d_conv_forward.4} parent=39 // pred_check_branch
        %1162 = sbr.rel (%p1160) target = $region44
      $region43: #{policynet2d_conv_forward.4} parent=39 // pred_region
        %s1163 = smul.u32 50, %s15
        %p1164 = scmp.lt.s32.totalorder %s1163, 99
        %s1165 = scalar_select %p1164, %s1163, 99
        %s1166 = smul.addr %s1165, 4
        %s1167 = scalar_lea.vmem %s3, %s1166
      $region44: #{policynet2d_conv_forward.4} parent=39 // pred_fallthru
        _
    $region40: #{policynet2d_conv_forward.4} parent=5 // pred_fallthru
      _
  $region6: #{policynet2d_conv_forward.4} parent=0 // loop_footer
    %s13 = sadd.s32 1, %s9
  $region7: #{policynet2d_conv_forward.4} parent=0 // loop_footer_branch
    %8 = sbr.rel target = $region3
  $region8: #{policynet2d_conv_forward.4} parent=0 // loop_exit
    _

// kernel: policynet2d_conv_forward.5
$region0: #{policynet2d_conv_forward.5}
  #allocation0 [shape = 'u32[]', space=smem, size = 0x4, offset = 0x4, fixed_abs, tag = 'smem constant byte address 0x4 - core index']
  #allocation1 [shape = 'u32[144,128]{1,0:T(1,128)}', space=vmem, size = 0x12000, scoped, tag = 'internal scratch']
  %s0 = inlined_call_operand.vmem [shape: bf16[176,512], index: 0, kind: input, shape index: {}]
  %s1 = inlined_call_operand.vmem [shape: bf16[512,128], index: 1, kind: input, shape index: {}]
  %s2 = inlined_call_operand.vmem [shape: f32[1,128], index: 2, kind: input, shape index: {}]
  %s3 = inlined_call_operand.vmem [shape: bf16[176,128], index: 3, kind: output, shape index: {}]
  %s4 = sld [smem:[#allocation0]]
  $region45: #{policynet2d_conv_forward.5} parent=0
    _
  %s6 = ssub.s32 1, %s4
  %s7 = scalar_select 0, %s6, %s4
  loop: start=0, step=1, limit=4
  $region2: #{policynet2d_conv_forward.5} parent=0 // loop_pre_header
    _
  $region3: #{policynet2d_conv_forward.5} parent=0 // loop_header
    %s9 = sphi 0, %s13
    %p10 = scmp.ge.s32.totalorder %s9, 4
    %s19 = sphi 0, %s21
    %s22 = sphi 0, %s19
    %s23 = sphi 0, %s22
    %s39 = sphi 0, %s23
    %s43 = sphi 0, %s43
    %s45 = sphi 0, %s43
    %s46 = sphi 0, %s45
    %s60 = sphi 0, %s46
    %s64 = sphi 0, %s64
    %s66 = sphi 0, %s64
    %s67 = sphi 0, %s66
    %s81 = sphi 0, %s67
    %s87 = sphi 0, %s89
    %s90 = sphi 0, %s87
    %s91 = sphi 0, %s90
    %s107 = sphi 0, %s91
  $region4: #{policynet2d_conv_forward.5} parent=0 // loop_header_branch
    %12 = sbr.rel (%p10) target = $region8
  $region5: #{policynet2d_conv_forward.5} parent=0 // loop_body
    %s14 = ssub.s32 %s9, 1
    %s15 = ssub.s32 %s9, 2
    %s16 = sadd.s32 %s9, 1
    %s17 = ssub.s32 %s9, %s16
    %p18 = scmp.eq.s32.totalorder %s17, 0
    %s20 = sadd.s32 %s19, 1
    %s21 = scalar_select %p18, %s19, %s20
    %p24 = pneg %p18
    %p25 = scmp.eq.s32.totalorder %s9, 1
    %p26 = por %p24, %p25
    %p27 = scmp.ne.s32.totalorder %s19, %s22
    %p28 = scmp.eq.s32.totalorder %s9, 0
    %p29 = por %p27, %p28
    %p30 = scmp.ne.s32.totalorder %s19, %s22
    %p31 = scmp.eq.s32.totalorder %s14, 1
    %p32 = por %p30, %p31
    %p33 = scmp.ne.s32.totalorder %s22, %s23
    %p34 = scmp.eq.s32.totalorder %s14, 0
    %p35 = por %p33, %p34
    %p36 = scmp.ne.s32.totalorder %s22, %s23
    %p37 = scmp.eq.s32.totalorder %s15, 1
    %p38 = por %p36, %p37
    %p40 = scmp.ne.s32.totalorder %s23, %s39
    %p41 = scmp.eq.s32.totalorder %s15, 0
    %p42 = por %p40, %p41
    %s44 = sadd.s32 %s43, 1
    %p47 = scmp.eq.s32.totalorder %s9, 1
    %p48 = scmp.ne.s32.totalorder %s43, %s45
    %p49 = scmp.eq.s32.totalorder %s9, 0
    %p50 = por %p48, %p49
    %p51 = scmp.ne.s32.totalorder %s43, %s45
    %p52 = scmp.eq.s32.totalorder %s14, 1
    %p53 = por %p51, %p52
    %p54 = scmp.ne.s32.totalorder %s45, %s46
    %p55 = scmp.eq.s32.totalorder %s14, 0
    %p56 = por %p54, %p55
    %p57 = scmp.ne.s32.totalorder %s45, %s46
    %p58 = scmp.eq.s32.totalorder %s15, 1
    %p59 = por %p57, %p58
    %p61 = scmp.ne.s32.totalorder %s46, %s60
    %p62 = scmp.eq.s32.totalorder %s15, 0
    %p63 = por %p61, %p62
    %s65 = sadd.s32 %s64, 1
    %p68 = scmp.eq.s32.totalorder %s9, 1
    %p69 = scmp.ne.s32.totalorder %s64, %s66
    %p70 = scmp.eq.s32.totalorder %s9, 0
    %p71 = por %p69, %p70
    %p72 = scmp.ne.s32.totalorder %s64, %s66
    %p73 = scmp.eq.s32.totalorder %s14, 1
    %p74 = por %p72, %p73
    %p75 = scmp.ne.s32.totalorder %s66, %s67
    %p76 = scmp.eq.s32.totalorder %s14, 0
    %p77 = por %p75, %p76
    %p78 = scmp.ne.s32.totalorder %s66, %s67
    %p79 = scmp.eq.s32.totalorder %s15, 1
    %p80 = por %p78, %p79
    %p82 = scmp.ne.s32.totalorder %s67, %s81
    %p83 = scmp.eq.s32.totalorder %s15, 0
    %p84 = por %p82, %p83
    %s85 = ssub.s32 %s9, %s16
    %p86 = scmp.eq.s32.totalorder %s85, 0
    %s88 = sadd.s32 %s87, 1
    %s89 = scalar_select %p86, %s87, %s88
    %p92 = pneg %p86
    %p93 = scmp.eq.s32.totalorder %s9, 1
    %p94 = por %p92, %p93
    %p95 = scmp.ne.s32.totalorder %s87, %s90
    %p96 = scmp.eq.s32.totalorder %s9, 0
    %p97 = por %p95, %p96
    %p98 = scmp.ne.s32.totalorder %s87, %s90
    %p99 = scmp.eq.s32.totalorder %s14, 1
    %p100 = por %p98, %p99
    %p101 = scmp.ne.s32.totalorder %s90, %s91
    %p102 = scmp.eq.s32.totalorder %s14, 0
    %p103 = por %p101, %p102
    %p104 = scmp.ne.s32.totalorder %s90, %s91
    %p105 = scmp.eq.s32.totalorder %s15, 1
    %p106 = por %p104, %p105
    %p108 = scmp.ne.s32.totalorder %s91, %s107
    %p109 = scmp.eq.s32.totalorder %s15, 0
    %p110 = por %p108, %p109
    %p111 = scmp.le.s32.totalorder 1, %s9
    %p112 = scmp.lt.s32.totalorder %s9, 3
    %p113 = pnand %p111, %p112
    %p114 = pneg %p113
    // Predicated region
    $region9: #{policynet2d_conv_forward.5} parent=5 // pred_check
      _
    $region10: #{policynet2d_conv_forward.5} parent=5 // pred_check_branch
      %116 = sbr.rel (%p113) target = $region12
    $region11: #{policynet2d_conv_forward.5} parent=5 // pred_region
      %s117 = ssub.s32 %s9, 1
      // Predicated region
      $region13: #{policynet2d_conv_forward.5} parent=11 // pred_check
        %p118 = pneg %p56
      $region14: #{policynet2d_conv_forward.5} parent=11 // pred_check_branch
        %120 = sbr.rel (%p118) target = $region16
      $region15: #{policynet2d_conv_forward.5} parent=11 // pred_region
        _
      $region16: #{policynet2d_conv_forward.5} parent=11 // pred_fallthru
        _
      // Predicated region
      $region17: #{policynet2d_conv_forward.5} parent=11 // pred_check
        %p121 = pneg %p77
      $region18: #{policynet2d_conv_forward.5} parent=11 // pred_check_branch
        %123 = sbr.rel (%p121) target = $region20
      $region19: #{policynet2d_conv_forward.5} parent=11 // pred_region
        _
      $region20: #{policynet2d_conv_forward.5} parent=11 // pred_fallthru
        _
    $region12: #{policynet2d_conv_forward.5} parent=5 // pred_fallthru
      _
    %p124 = scmp.lt.s32.totalorder %s9, 2
    // Predicated region
    $region21: #{policynet2d_conv_forward.5} parent=5 // pred_check
      %p125 = pneg %p124
    $region22: #{policynet2d_conv_forward.5} parent=5 // pred_check_branch
      %127 = sbr.rel (%p125) target = $region24
    $region23: #{policynet2d_conv_forward.5} parent=5 // pred_region
      // Predicated region
      $region25: #{policynet2d_conv_forward.5} parent=23 // pred_check
        %p128 = pneg %p29
      $region26: #{policynet2d_conv_forward.5} parent=23 // pred_check_branch
        %130 = sbr.rel (%p128) target = $region28
      $region27: #{policynet2d_conv_forward.5} parent=23 // pred_region
        %s131 = smul.u32 11, %s9
        %p132 = scmp.lt.s32.totalorder %s131, 21
        %s133 = scalar_select %p132, %s131, 21
        %s134 = smul.addr %s133, 4
        %s135 = smul.addr %s134, 4
        %s136 = scalar_lea.vmem %s0, %s135
        %s137 = smul.u32 11, %s9
      $region28: #{policynet2d_conv_forward.5} parent=23 // pred_fallthru
        _
    $region24: #{policynet2d_conv_forward.5} parent=5 // pred_fallthru
      _
    %p138 = scmp.le.s32.totalorder 1, %s9
    %p139 = scmp.lt.s32.totalorder %s9, 3
    %p140 = pnand %p138, %p139
    %p141 = pneg %p140
    // Predicated region
    $region29: #{policynet2d_conv_forward.5} parent=5 // pred_check
      _
    $region30: #{policynet2d_conv_forward.5} parent=5 // pred_check_branch
      %143 = sbr.rel (%p140) target = $region32
    $region31: #{policynet2d_conv_forward.5} parent=5 // pred_region
      %s144 = ssub.s32 %s9, 1
      %s145 = smul.u32 11, %s14
      %p146 = scmp.lt.s32.totalorder %s145, 21
      %s147 = scalar_select %p146, %s145, 21
      %s148 = smul.addr %s147, 4
      %s149 = smul.addr %s148, 4
      %s150 = scalar_lea.vmem %s0, %s149
      %p151 = pneg %p35
      %p152 = pneg %p32
      %p153 = pneg %p56
      %p154 = pneg %p53
      %p155 = pneg %p77
      %p156 = pneg %p74
      %p157 = pneg %p103
      %p158 = pneg %p100
      %s159 = smul.u32 11, %s14
      %p160 = scmp.lt.s32.totalorder %s159, 21
      %s161 = scalar_select %p160, %s159, 21
      %s162 = smul.addr %s161, 4
      %s163 = scalar_lea.vmem %s3, %s162
      %s164 = smul.u32 11, %s14
      %p165 = scmp.lt.s32.totalorder %s164, 21
      %s166 = scalar_select %p165, %s164, 21
      %s167 = smul.addr %s166, 4
      %s168 = smul.addr %s167, 4
      %s169 = scalar_lea.vmem %s0, %s168
      %s170 = smul.u32 11, %s14
      %s171 = smul.u32 11, %s14
      %p172 = scmp.lt.s32.totalorder %s171, 21
      %s173 = scalar_select %p172, %s171, 21
      %s174 = smul.addr %s173, 4
      %s175 = scalar_lea.vmem %s3, %s174
      %s176 = smul.u32 11, %s14
      %v178 = vld [vmem:[%s169] sm:$0xff]
      %v179 = vld [vmem:[%s169 + $0x8] sm:$0xff]
      %v180 = vld [vmem:[%s169 + $0x10] sm:$0xff]
      %v181 = vld [vmem:[%s169 + $0x18] sm:$0xff]
      %v182 = vld [vmem:[%s169 + $0x20] sm:$0xff]
      %v183 = vld [vmem:[%s169 + $0x28] sm:$0xff]
      %v184 = vld [vmem:[%s169 + $0x30] sm:$0xff]
      %v185 = vld [vmem:[%s169 + $0x38] sm:$0xff]
      %v186 = vld [vmem:[%s169 + $0x40] sm:$0xff]
      %v187 = vld [vmem:[%s169 + $0x48] sm:$0xff]
      %v188 = vld [vmem:[%s169 + $0x50] sm:$0xff]
      %v189 = vld [vmem:[%s169 + $0x58] sm:$0xff]
      %v190 = vld [vmem:[%s169 + $0x60] sm:$0xff]
      %v191 = vld [vmem:[%s169 + $0x68] sm:$0xff]
      %v192 = vld [vmem:[%s169 + $0x70] sm:$0xff]
      %v193 = vld [vmem:[%s169 + $0x78] sm:$0xff]
      %v194 = vld [vmem:[%s169 + $0x80] sm:$0xff]
      %v195 = vld [vmem:[%s169 + $0x88] sm:$0xff]
      %v196 = vld [vmem:[%s169 + $0x90] sm:$0xff]
      %v197 = vld [vmem:[%s169 + $0x98] sm:$0xff]
      %v198 = vld [vmem:[%s169 + $0xa0] sm:$0xff]
      %v199 = vld [vmem:[%s169 + $0xa8] sm:$0xff]
      %v200 = vld [vmem:[%s1] sm:$0xf]
      %v201 = vld [vmem:[%s1 + $0x4] sm:$0xf]
      %v202 = vld [vmem:[%s1 + $0x8] sm:$0xf]
      %v203 = vld [vmem:[%s1 + $0xc] sm:$0xf]
      %v204 = vld [vmem:[%s1 + $0x10] sm:$0xf]
      %v205 = vld [vmem:[%s1 + $0x14] sm:$0xf]
      %v206 = vld [vmem:[%s1 + $0x18] sm:$0xf]
      %v207 = vld [vmem:[%s1 + $0x1c] sm:$0xf]
      %v208 = vld [vmem:[%s1 + $0x20] sm:$0xf]
      %v209 = vld [vmem:[%s1 + $0x24] sm:$0xf]
      %v210 = vld [vmem:[%s1 + $0x28] sm:$0xf]
      %v211 = vld [vmem:[%s1 + $0x2c] sm:$0xf]
      %v212 = vld [vmem:[%s1 + $0x30] sm:$0xf]
      %v213 = vld [vmem:[%s1 + $0x34] sm:$0xf]
      %v214 = vld [vmem:[%s1 + $0x38] sm:$0xf]
      %v215 = vld [vmem:[%s1 + $0x3c] sm:$0xf]
      %v216 = vld [vmem:[%s1 + $0x40] sm:$0xf]
      %v217 = vld [vmem:[%s1 + $0x44] sm:$0xf]
      %v218 = vld [vmem:[%s1 + $0x48] sm:$0xf]
      %v219 = vld [vmem:[%s1 + $0x4c] sm:$0xf]
      %v220 = vld [vmem:[%s1 + $0x50] sm:$0xf]
      %v221 = vld [vmem:[%s1 + $0x54] sm:$0xf]
      %v222 = vld [vmem:[%s1 + $0x58] sm:$0xf]
      %v223 = vld [vmem:[%s1 + $0x5c] sm:$0xf]
      %v224 = vld [vmem:[%s1 + $0x60] sm:$0xf]
      %v225 = vld [vmem:[%s1 + $0x64] sm:$0xf]
      %v226 = vld [vmem:[%s1 + $0x68] sm:$0xf]
      %v227 = vld [vmem:[%s1 + $0x6c] sm:$0xf]
      %v228 = vld [vmem:[%s1 + $0x70] sm:$0xf]
      %v229 = vld [vmem:[%s1 + $0x74] sm:$0xf]
      %v230 = vld [vmem:[%s1 + $0x78] sm:$0xf]
      %v231 = vld [vmem:[%s1 + $0x7c] sm:$0xf]
      %v232 = vld [vmem:[%s1 + $0x80] sm:$0xf]
      %v233 = vld [vmem:[%s1 + $0x84] sm:$0xf]
      %v234 = vld [vmem:[%s1 + $0x88] sm:$0xf]
      %v235 = vld [vmem:[%s1 + $0x8c] sm:$0xf]
      %v236 = vld [vmem:[%s1 + $0x90] sm:$0xf]
      %v237 = vld [vmem:[%s1 + $0x94] sm:$0xf]
      %v238 = vld [vmem:[%s1 + $0x98] sm:$0xf]
      %v239 = vld [vmem:[%s1 + $0x9c] sm:$0xf]
      %v240 = vld [vmem:[%s1 + $0xa0] sm:$0xf]
      %v241 = vld [vmem:[%s1 + $0xa4] sm:$0xf]
      %v242 = vld [vmem:[%s1 + $0xa8] sm:$0xf]
      %v243 = vld [vmem:[%s1 + $0xac] sm:$0xf]
      %v244 = vld [vmem:[%s1 + $0xb0] sm:$0xf]
      %v245 = vld [vmem:[%s1 + $0xb4] sm:$0xf]
      %v246 = vld [vmem:[%s1 + $0xb8] sm:$0xf]
      %v247 = vld [vmem:[%s1 + $0xbc] sm:$0xf]
      %v248 = vld [vmem:[%s1 + $0xc0] sm:$0xf]
      %v249 = vld [vmem:[%s1 + $0xc4] sm:$0xf]
      %v250 = vld [vmem:[%s1 + $0xc8] sm:$0xf]
      %v251 = vld [vmem:[%s1 + $0xcc] sm:$0xf]
      %v252 = vld [vmem:[%s1 + $0xd0] sm:$0xf]
      %v253 = vld [vmem:[%s1 + $0xd4] sm:$0xf]
      %v254 = vld [vmem:[%s1 + $0xd8] sm:$0xf]
      %v255 = vld [vmem:[%s1 + $0xdc] sm:$0xf]
      %v256 = vld [vmem:[%s1 + $0xe0] sm:$0xf]
      %v257 = vld [vmem:[%s1 + $0xe4] sm:$0xf]
      %v258 = vld [vmem:[%s1 + $0xe8] sm:$0xf]
      %v259 = vld [vmem:[%s1 + $0xec] sm:$0xf]
      %v260 = vld [vmem:[%s1 + $0xf0] sm:$0xf]
      %v261 = vld [vmem:[%s1 + $0xf4] sm:$0xf]
      %v262 = vld [vmem:[%s1 + $0xf8] sm:$0xf]
      %v263 = vld [vmem:[%s1 + $0xfc] sm:$0xf]
      %v264 = vld [vmem:[%s2] sm:$0x1]
      %v266 = vlaneseq
      %v267 = vshrl.u32 %v266, 7
      %v268 = vsub.s32 0, %v267
      %v269 = vrot.slane %v264, %v268
      %v293 = vunpack.c.l.b16 %v178
      %v294 = vunpack.c.h.b16 %v178
      %v295 = vunpack.c.l.b16 %v179
      %v296 = vunpack.c.h.b16 %v179
      %v297 = vunpack.c.l.b16 %v180
      %v298 = vunpack.c.h.b16 %v180
      %v299 = vunpack.c.l.b16 %v181
      %v300 = vunpack.c.h.b16 %v181
      %v301 = vunpack.c.l.b16 %v182
      %v302 = vunpack.c.h.b16 %v182
      %v303 = vunpack.c.l.b16 %v183
      %v304 = vunpack.c.h.b16 %v183
      %v305 = vunpack.c.l.b16 %v184
      %v306 = vunpack.c.h.b16 %v184
      %v307 = vunpack.c.l.b16 %v185
      %v308 = vunpack.c.h.b16 %v185
      %v309 = vunpack.c.l.b16 %v186
      %v310 = vunpack.c.h.b16 %v186
      %v311 = vunpack.c.l.b16 %v187
      %v312 = vunpack.c.h.b16 %v187
      %v313 = vunpack.c.l.b16 %v188
      %v314 = vunpack.c.h.b16 %v188
      %v315 = vunpack.c.l.b16 %v189
      %v316 = vunpack.c.h.b16 %v189
      %v317 = vunpack.c.l.b16 %v190
      %v318 = vunpack.c.h.b16 %v190
      %v319 = vunpack.c.l.b16 %v191
      %v320 = vunpack.c.h.b16 %v191
      %v321 = vunpack.c.l.b16 %v192
      %v322 = vunpack.c.h.b16 %v192
      %v323 = vunpack.c.l.b16 %v193
      %v324 = vunpack.c.h.b16 %v193
      %v325 = vunpack.c.l.b16 %v194
      %v326 = vunpack.c.h.b16 %v194
      %v327 = vunpack.c.l.b16 %v195
      %v328 = vunpack.c.h.b16 %v195
      %v329 = vunpack.c.l.b16 %v196
      %v330 = vunpack.c.h.b16 %v196
      %v331 = vunpack.c.l.b16 %v197
      %v332 = vunpack.c.h.b16 %v197
      %v333 = vunpack.c.l.b16 %v198
      %v334 = vunpack.c.h.b16 %v198
      %v335 = vunpack.c.l.b16 %v199
      %v336 = vunpack.c.h.b16 %v199
      %v337 = vpack.c.b16 %v297, %v293
      %v338 = vpack.c.b16 %v298, %v294
      %v339 = vpack.c.b16 %v299, %v295
      %v340 = vpack.c.b16 %v300, %v296
      %v341 = vpack.c.b16 %v305, %v301
      %v342 = vpack.c.b16 %v306, %v302
      %v343 = vpack.c.b16 %v307, %v303
      %v344 = vpack.c.b16 %v308, %v304
      %v345 = vpack.c.b16 %v313, %v309
      %v346 = vpack.c.b16 %v314, %v310
      %v347 = vpack.c.b16 %v315, %v311
      %v348 = vpack.c.b16 %v316, %v312
      %v349 = vpack.c.b16 %v321, %v317
      %v350 = vpack.c.b16 %v322, %v318
      %v351 = vpack.c.b16 %v323, %v319
      %v352 = vpack.c.b16 %v324, %v320
      %v353 = vpack.c.b16 %v329, %v325
      %v354 = vpack.c.b16 %v330, %v326
      %v355 = vpack.c.b16 %v331, %v327
      %v356 = vpack.c.b16 %v332, %v328
      %v357 = vpack.c.b16 %v333, %v333
      %v358 = vpack.c.b16 %v334, %v334
      %v359 = vpack.c.b16 %v335, %v335
      %v360 = vpack.c.b16 %v336, %v336
      %v449 = vunpack.c.l.b16 %v200
      %v450 = vunpack.c.l.b16 %v201
      %v451 = vunpack.c.l.b16 %v202
      %v452 = vunpack.c.l.b16 %v203
      %v453 = vunpack.c.l.b16 %v204
      %v454 = vunpack.c.l.b16 %v205
      %v455 = vunpack.c.l.b16 %v206
      %v456 = vunpack.c.l.b16 %v207
      %v457 = vunpack.c.l.b16 %v208
      %v458 = vunpack.c.l.b16 %v209
      %v459 = vunpack.c.l.b16 %v210
      %v460 = vunpack.c.l.b16 %v211
      %v461 = vunpack.c.l.b16 %v212
      %v462 = vunpack.c.l.b16 %v213
      %v463 = vunpack.c.l.b16 %v214
      %v464 = vunpack.c.l.b16 %v215
      %v465 = vunpack.c.l.b16 %v216
      %v466 = vunpack.c.l.b16 %v217
      %v467 = vunpack.c.l.b16 %v218
      %v468 = vunpack.c.l.b16 %v219
      %v469 = vunpack.c.l.b16 %v220
      %v470 = vunpack.c.l.b16 %v221
      %v471 = vunpack.c.l.b16 %v222
      %v472 = vunpack.c.l.b16 %v223
      %v473 = vunpack.c.l.b16 %v224
      %v474 = vunpack.c.l.b16 %v225
      %v475 = vunpack.c.l.b16 %v226
      %v476 = vunpack.c.l.b16 %v227
      %v477 = vunpack.c.l.b16 %v228
      %v478 = vunpack.c.l.b16 %v229
      %v479 = vunpack.c.l.b16 %v230
      %v480 = vunpack.c.l.b16 %v231
      %v481 = vunpack.c.l.b16 %v232
      %v482 = vunpack.c.l.b16 %v233
      %v483 = vunpack.c.l.b16 %v234
      %v484 = vunpack.c.l.b16 %v235
      %v485 = vunpack.c.l.b16 %v236
      %v486 = vunpack.c.l.b16 %v237
      %v487 = vunpack.c.l.b16 %v238
      %v488 = vunpack.c.l.b16 %v239
      %v489 = vunpack.c.l.b16 %v240
      %v490 = vunpack.c.l.b16 %v241
      %v491 = vunpack.c.l.b16 %v242
      %v492 = vunpack.c.l.b16 %v243
      %v493 = vunpack.c.l.b16 %v244
      %v494 = vunpack.c.l.b16 %v245
      %v495 = vunpack.c.l.b16 %v246
      %v496 = vunpack.c.l.b16 %v247
      %v497 = vunpack.c.l.b16 %v248
      %v498 = vunpack.c.l.b16 %v249
      %v499 = vunpack.c.l.b16 %v250
      %v500 = vunpack.c.l.b16 %v251
      %v501 = vunpack.c.l.b16 %v252
      %v502 = vunpack.c.l.b16 %v253
      %v503 = vunpack.c.l.b16 %v254
      %v504 = vunpack.c.l.b16 %v255
      %v505 = vunpack.c.l.b16 %v256
      %v506 = vunpack.c.l.b16 %v257
      %v507 = vunpack.c.l.b16 %v258
      %v508 = vunpack.c.l.b16 %v259
      %v509 = vunpack.c.l.b16 %v260
      %v510 = vunpack.c.l.b16 %v261
      %v511 = vunpack.c.l.b16 %v262
      %v512 = vunpack.c.l.b16 %v263
      %v513 = vpack.c.b16 %v450, %v449
      %v514 = vpack.c.b16 %v452, %v451
      %v515 = vpack.c.b16 %v454, %v453
      %v516 = vpack.c.b16 %v456, %v455
      %v517 = vpack.c.b16 %v458, %v457
      %v518 = vpack.c.b16 %v460, %v459
      %v519 = vpack.c.b16 %v462, %v461
      %v520 = vpack.c.b16 %v464, %v463
      %v521 = vpack.c.b16 %v466, %v465
      %v522 = vpack.c.b16 %v468, %v467
      %v523 = vpack.c.b16 %v470, %v469
      %v524 = vpack.c.b16 %v472, %v471
      %v525 = vpack.c.b16 %v474, %v473
      %v526 = vpack.c.b16 %v476, %v475
      %v527 = vpack.c.b16 %v478, %v477
      %v528 = vpack.c.b16 %v480, %v479
      %v529 = vpack.c.b16 %v482, %v481
      %v530 = vpack.c.b16 %v484, %v483
      %v531 = vpack.c.b16 %v486, %v485
      %v532 = vpack.c.b16 %v488, %v487
      %v533 = vpack.c.b16 %v490, %v489
      %v534 = vpack.c.b16 %v492, %v491
      %v535 = vpack.c.b16 %v494, %v493
      %v536 = vpack.c.b16 %v496, %v495
      %v537 = vpack.c.b16 %v498, %v497
      %v538 = vpack.c.b16 %v500, %v499
      %v539 = vpack.c.b16 %v502, %v501
      %v540 = vpack.c.b16 %v504, %v503
      %v541 = vpack.c.b16 %v506, %v505
      %v542 = vpack.c.b16 %v508, %v507
      %v543 = vpack.c.b16 %v510, %v509
      %v544 = vpack.c.b16 %v512, %v511
      %577 = vmatprep.subr.bf16.mxu0 0
      %578 = vmatpush1.bf16.msra.mxu0 %v513
      %579 = vmatprep.subr.bf16.mxu0 0
      %580 = vmatpush1.bf16.msra.mxu0 %v514
      %581 = vmatprep.subr.bf16.mxu0 0
      %582 = vmatpush1.bf16.msra.mxu0 %v515
      %583 = vmatprep.subr.bf16.mxu0 0
      %584 = vmatpush1.bf16.msra.mxu0 %v516
      %585 = vmatprep.subr.bf16.mxu0 0
      %586 = vmatpush1.bf16.msra.mxu0 %v517
      %587 = vmatprep.subr.bf16.mxu0 0
      %588 = vmatpush1.bf16.msra.mxu0 %v518
      %589 = vmatprep.subr.bf16.mxu0 0
      %590 = vmatpush1.bf16.msra.mxu0 %v519
      %591 = vmatprep.subr.bf16.mxu0 0
      %592 = vmatpush1.bf16.msra.mxu0 %v520
      %593 = vmatprep.subr.bf16.mxu0 0
      %594 = vmatpush1.bf16.msra.mxu0 %v521
      %595 = vmatprep.subr.bf16.mxu0 0
      %596 = vmatpush1.bf16.msra.mxu0 %v522
      %597 = vmatprep.subr.bf16.mxu0 0
      %598 = vmatpush1.bf16.msra.mxu0 %v523
      %599 = vmatprep.subr.bf16.mxu0 0
      %600 = vmatpush1.bf16.msra.mxu0 %v524
      %601 = vmatprep.subr.bf16.mxu0 0
      %602 = vmatpush1.bf16.msra.mxu0 %v525
      %603 = vmatprep.subr.bf16.mxu0 0
      %604 = vmatpush1.bf16.msra.mxu0 %v526
      %605 = vmatprep.subr.bf16.mxu0 0
      %606 = vmatpush1.bf16.msra.mxu0 %v527
      %607 = vmatprep.subr.bf16.mxu0 0
      %608 = vmatpush1.bf16.msra.mxu0 %v528
      %609 = vmatprep.mubr.bf16.mxu0 %v338
      %610 = vmatmul.mubr.bf16.gmra.mrb[0].mxu0 %v337
      %v611 = vpop.f32.mrb[0].mxu0
      %v612 = vadd.f32 %v269, %v611
      %v613 = vpop.f32.mrb[0].mxu0
      %v614 = vpop.f32.mrb[0].mxu0
      %v615 = vadd.f32 %v269, %v614
      %v616 = vpop.f32.mrb[0].mxu0
      %617 = vmatprep.mubr.bf16.mxu0 %v342
      %618 = vmatmul.mubr.bf16.gmra.mrb[0].mxu0 %v341
      %v619 = vpop.f32.mrb[0].mxu0
      %v620 = vadd.f32 %v269, %v619
      %v621 = vpop.f32.mrb[0].mxu0
      %v622 = vpop.f32.mrb[0].mxu0
      %v623 = vadd.f32 %v269, %v622
      %v624 = vpop.f32.mrb[0].mxu0
      %625 = vmatprep.mubr.bf16.mxu0 %v346
      %626 = vmatmul.mubr.bf16.gmra.mrb[0].mxu0 %v345
      %v627 = vpop.f32.mrb[0].mxu0
      %v628 = vadd.f32 %v269, %v627
      %v629 = vpop.f32.mrb[0].mxu0
      %v630 = vpop.f32.mrb[0].mxu0
      %v631 = vadd.f32 %v269, %v630
      %v632 = vpop.f32.mrb[0].mxu0
      %633 = vmatprep.mubr.bf16.mxu0 %v350
      %634 = vmatmul.mubr.bf16.gmra.mrb[0].mxu0 %v349
      %v635 = vpop.f32.mrb[0].mxu0
      %v636 = vadd.f32 %v269, %v635
      %v637 = vpop.f32.mrb[0].mxu0
      %v638 = vpop.f32.mrb[0].mxu0
      %v639 = vadd.f32 %v269, %v638
      %v640 = vpop.f32.mrb[0].mxu0
      %641 = vmatprep.mubr.bf16.mxu0 %v354
      %642 = vmatmul.mubr.bf16.gmra.mrb[0].mxu0 %v353
      %v643 = vpop.f32.mrb[0].mxu0
      %v644 = vadd.f32 %v269, %v643
      %v645 = vpop.f32.mrb[0].mxu0
      %v646 = vpop.f32.mrb[0].mxu0
      %v647 = vadd.f32 %v269, %v646
      %v648 = vpop.f32.mrb[0].mxu0
      %649 = vmatprep.mubr.bf16.mxu0 %v358
      %650 = vmatmul.mubr.bf16.gmra.mrb[0].mxu0 %v357
      %v651 = vpop.f32.mrb[0].mxu0
      %v652 = vadd.f32 %v269, %v651
      %v653 = vpop.f32.mrb[0].mxu0
      %v654 = vpop.f32.mrb[0].mxu0
      %v655 = vpop.f32.mrb[0].mxu0
      %656 = vdwg.mxu0
      %657 = vmatprep.subr.bf16.mxu0 0
      %658 = vmatpush1.bf16.msra.mxu0 %v529
      %659 = vmatprep.subr.bf16.mxu0 0
      %660 = vmatpush1.bf16.msra.mxu0 %v530
      %661 = vmatprep.subr.bf16.mxu0 0
      %662 = vmatpush1.bf16.msra.mxu0 %v531
      %663 = vmatprep.subr.bf16.mxu0 0
      %664 = vmatpush1.bf16.msra.mxu0 %v532
      %665 = vmatprep.subr.bf16.mxu0 0
      %666 = vmatpush1.bf16.msra.mxu0 %v533
      %667 = vmatprep.subr.bf16.mxu0 0
      %668 = vmatpush1.bf16.msra.mxu0 %v534
      %669 = vmatprep.subr.bf16.mxu0 0
      %670 = vmatpush1.bf16.msra.mxu0 %v535
      %671 = vmatprep.subr.bf16.mxu0 0
      %672 = vmatpush1.bf16.msra.mxu0 %v536
      %673 = vmatprep.subr.bf16.mxu0 0
      %674 = vmatpush1.bf16.msra.mxu0 %v537
      %675 = vmatprep.subr.bf16.mxu0 0
      %676 = vmatpush1.bf16.msra.mxu0 %v538
      %677 = vmatprep.subr.bf16.mxu0 0
      %678 = vmatpush1.bf16.msra.mxu0 %v539
      %679 = vmatprep.subr.bf16.mxu0 0
      %680 = vmatpush1.bf16.msra.mxu0 %v540
      %681 = vmatprep.subr.bf16.mxu0 0
      %682 = vmatpush1.bf16.msra.mxu0 %v541
      %683 = vmatprep.subr.bf16.mxu0 0
      %684 = vmatpush1.bf16.msra.mxu0 %v542
      %685 = vmatprep.subr.bf16.mxu0 0
      %686 = vmatpush1.bf16.msra.mxu0 %v543
      %687 = vmatprep.subr.bf16.mxu0 0
      %688 = vmatpush1.bf16.msra.mxu0 %v544
      %689 = vmatprep.mubr.bf16.mxu0 %v340
      %690 = vmatmul.mubr.bf16.gmra.mrb[0].mxu0 %v339
      %v691 = vpop.f32.mrb[0].mxu0
      %v692 = vadd.f32 %v612, %v691
      %v693 = vpop.f32.mrb[0].mxu0
      %v694 = vpop.f32.mrb[0].mxu0
      %v695 = vadd.f32 %v615, %v694
      %v696 = vpop.f32.mrb[0].mxu0
      %697 = vmatprep.mubr.bf16.mxu0 %v344
      %698 = vmatmul.mubr.bf16.gmra.mrb[0].mxu0 %v343
      %v699 = vpop.f32.mrb[0].mxu0
      %v700 = vadd.f32 %v620, %v699
      %v701 = vpop.f32.mrb[0].mxu0
      %v702 = vpop.f32.mrb[0].mxu0
      %v703 = vadd.f32 %v623, %v702
      %v704 = vpop.f32.mrb[0].mxu0
      %705 = vmatprep.mubr.bf16.mxu0 %v348
      %706 = vmatmul.mubr.bf16.gmra.mrb[0].mxu0 %v347
      %v707 = vpop.f32.mrb[0].mxu0
      %v708 = vadd.f32 %v628, %v707
      %v709 = vpop.f32.mrb[0].mxu0
      %v710 = vpop.f32.mrb[0].mxu0
      %v711 = vadd.f32 %v631, %v710
      %v712 = vpop.f32.mrb[0].mxu0
      %713 = vmatprep.mubr.bf16.mxu0 %v352
      %714 = vmatmul.mubr.bf16.gmra.mrb[0].mxu0 %v351
      %v715 = vpop.f32.mrb[0].mxu0
      %v716 = vadd.f32 %v636, %v715
      %v717 = vpop.f32.mrb[0].mxu0
      %v718 = vpop.f32.mrb[0].mxu0
      %v719 = vadd.f32 %v639, %v718
      %v720 = vpop.f32.mrb[0].mxu0
      %721 = vmatprep.mubr.bf16.mxu0 %v356
      %722 = vmatmul.mubr.bf16.gmra.mrb[0].mxu0 %v355
      %v723 = vpop.f32.mrb[0].mxu0
      %v724 = vadd.f32 %v644, %v723
      %v725 = vpop.f32.mrb[0].mxu0
      %v726 = vpop.f32.mrb[0].mxu0
      %v727 = vadd.f32 %v647, %v726
      %v728 = vpop.f32.mrb[0].mxu0
      %729 = vmatprep.mubr.bf16.mxu0 %v360
      %730 = vmatmul.mubr.bf16.gmra.mrb[0].mxu0 %v359
      %v731 = vpop.f32.mrb[0].mxu0
      %v732 = vadd.f32 %v652, %v731
      %v733 = vpop.f32.mrb[0].mxu0
      %v734 = vpop.f32.mrb[0].mxu0
      %v735 = vpop.f32.mrb[0].mxu0
      %736 = vdwg.mxu0
      %v737 = vmax.f32 %v692, 0.0
      %v738 = vmax.f32 %v695, 0.0
      %v739 = vmax.f32 %v700, 0.0
      %v740 = vmax.f32 %v703, 0.0
      %v741 = vmax.f32 %v708, 0.0
      %v742 = vmax.f32 %v711, 0.0
      %v743 = vmax.f32 %v716, 0.0
      %v744 = vmax.f32 %v719, 0.0
      %v745 = vmax.f32 %v724, 0.0
      %v746 = vmax.f32 %v727, 0.0
      %v747 = vmax.f32 %v732, 0.0
      %v748 = vpack.c.bf16 %v738, %v737
      %v749 = vpack.c.bf16 %v740, %v739
      %v750 = vpack.c.bf16 %v742, %v741
      %v751 = vpack.c.bf16 %v744, %v743
      %v752 = vpack.c.bf16 %v746, %v745
      %v753 = vpack.c.bf16 %v747, %v747
      %v760 = vunpack.c.l.b16 %v748
      %v761 = vunpack.c.h.b16 %v748
      %v762 = vunpack.c.l.b16 %v749
      %v763 = vunpack.c.h.b16 %v749
      %v764 = vunpack.c.l.b16 %v750
      %v765 = vunpack.c.h.b16 %v750
      %v766 = vunpack.c.l.b16 %v751
      %v767 = vunpack.c.h.b16 %v751
      %v768 = vunpack.c.l.b16 %v752
      %v769 = vunpack.c.h.b16 %v752
      %v770 = vunpack.c.l.b16 %v753
      %v771 = vpack.c.b16 %v760, %v760
      %v772 = vpack.c.b16 %v761, %v761
      %v773 = vpack.c.b16 %v762, %v762
      %v774 = vpack.c.b16 %v763, %v763
      %v775 = vpack.c.b16 %v764, %v764
      %v776 = vpack.c.b16 %v765, %v765
      %v777 = vpack.c.b16 %v766, %v766
      %v778 = vpack.c.b16 %v767, %v767
      %v779 = vpack.c.b16 %v768, %v768
      %v780 = vpack.c.b16 %v769, %v769
      %v781 = vpack.c.b16 %v770, %v770
      %793 = vst [vmem:[%s175] sm:$0xf] %v771
      %794 = vst [vmem:[%s175 + $0x4] sm:$0xf] %v772
      %795 = vst [vmem:[%s175 + $0x8] sm:$0xf] %v773
      %796 = vst [vmem:[%s175 + $0xc] sm:$0xf] %v774
      %797 = vst [vmem:[%s175 + $0x10] sm:$0xf] %v775
      %798 = vst [vmem:[%s175 + $0x14] sm:$0xf] %v776
      %799 = vst [vmem:[%s175 + $0x18] sm:$0xf] %v777
      %800 = vst [vmem:[%s175 + $0x1c] sm:$0xf] %v778
      %801 = vst [vmem:[%s175 + $0x20] sm:$0xf] %v779
      %802 = vst [vmem:[%s175 + $0x24] sm:$0xf] %v780
      %803 = vst [vmem:[%s175 + $0x28] sm:$0xf] %v781
      %s804 = smul.u32 11, %s14
      %p805 = scmp.lt.s32.totalorder %s804, 21
      %s806 = scalar_select %p805, %s804, 21
      %s807 = smul.addr %s806, 4
      %s808 = scalar_lea.vmem %s3, %s807
      // Predicated region
      $region33: #{policynet2d_conv_forward.5} parent=31 // pred_check
        %p809 = pneg %p100
      $region34: #{policynet2d_conv_forward.5} parent=31 // pred_check_branch
        %811 = sbr.rel (%p809) target = $region36
      $region35: #{policynet2d_conv_forward.5} parent=31 // pred_region
        %s812 = smul.u32 11, %s14
      $region36: #{policynet2d_conv_forward.5} parent=31 // pred_fallthru
        _
    $region32: #{policynet2d_conv_forward.5} parent=5 // pred_fallthru
      _
    %p813 = scmp.le.s32.totalorder 2, %s9
    // Predicated region
    $region37: #{policynet2d_conv_forward.5} parent=5 // pred_check
      %p814 = pneg %p813
    $region38: #{policynet2d_conv_forward.5} parent=5 // pred_check_branch
      %816 = sbr.rel (%p814) target = $region40
    $region39: #{policynet2d_conv_forward.5} parent=5 // pred_region
      %s817 = ssub.s32 %s9, 2
      // Predicated region
      $region41: #{policynet2d_conv_forward.5} parent=39 // pred_check
        %p818 = pneg %p106
      $region42: #{policynet2d_conv_forward.5} parent=39 // pred_check_branch
        %820 = sbr.rel (%p818) target = $region44
      $region43: #{policynet2d_conv_forward.5} parent=39 // pred_region
        %s821 = smul.u32 11, %s15
        %p822 = scmp.lt.s32.totalorder %s821, 21
        %s823 = scalar_select %p822, %s821, 21
        %s824 = smul.addr %s823, 4
        %s825 = scalar_lea.vmem %s3, %s824
      $region44: #{policynet2d_conv_forward.5} parent=39 // pred_fallthru
        _
    $region40: #{policynet2d_conv_forward.5} parent=5 // pred_fallthru
      _
  $region6: #{policynet2d_conv_forward.5} parent=0 // loop_footer
    %s13 = sadd.s32 1, %s9
  $region7: #{policynet2d_conv_forward.5} parent=0 // loop_footer_branch
    %8 = sbr.rel target = $region3
  $region8: #{policynet2d_conv_forward.5} parent=0 // loop_exit
    _

// kernel: policynet2d_conv_forward.6
$region0: #{policynet2d_conv_forward.6}
  #allocation0 [shape = 'u32[]', space=smem, size = 0x4, offset = 0x4, fixed_abs, tag = 'smem constant byte address 0x4 - core index']
  #allocation1 [shape = 'u32[144,128]{1,0:T(1,128)}', space=vmem, size = 0x12000, scoped, tag = 'internal scratch']
  %s0 = inlined_call_operand.vmem [shape: bf16[112,640], index: 0, kind: input, shape index: {}]
  %s1 = inlined_call_operand.vmem [shape: bf16[640,128], index: 1, kind: input, shape index: {}]
  %s2 = inlined_call_operand.vmem [shape: f32[1,128], index: 2, kind: input, shape index: {}]
  %s3 = inlined_call_operand.vmem [shape: bf16[112,128], index: 3, kind: output, shape index: {}]
  %s4 = sld [smem:[#allocation0]]
  $region45: #{policynet2d_conv_forward.6} parent=0
    _
  %s6 = ssub.s32 1, %s4
  %s7 = scalar_select 0, %s6, %s4
  loop: start=0, step=1, limit=4
  $region2: #{policynet2d_conv_forward.6} parent=0 // loop_pre_header
    _
  $region3: #{policynet2d_conv_forward.6} parent=0 // loop_header
    %s9 = sphi 0, %s13
    %p10 = scmp.ge.s32.totalorder %s9, 4
    %s19 = sphi 0, %s21
    %s22 = sphi 0, %s19
    %s23 = sphi 0, %s22
    %s39 = sphi 0, %s23
    %s43 = sphi 0, %s43
    %s45 = sphi 0, %s43
    %s46 = sphi 0, %s45
    %s60 = sphi 0, %s46
    %s64 = sphi 0, %s64
    %s66 = sphi 0, %s64
    %s67 = sphi 0, %s66
    %s81 = sphi 0, %s67
    %s87 = sphi 0, %s89
    %s90 = sphi 0, %s87
    %s91 = sphi 0, %s90
    %s107 = sphi 0, %s91
  $region4: #{policynet2d_conv_forward.6} parent=0 // loop_header_branch
    %12 = sbr.rel (%p10) target = $region8
  $region5: #{policynet2d_conv_forward.6} parent=0 // loop_body
    %s14 = ssub.s32 %s9, 1
    %s15 = ssub.s32 %s9, 2
    %s16 = sadd.s32 %s9, 1
    %s17 = ssub.s32 %s9, %s16
    %p18 = scmp.eq.s32.totalorder %s17, 0
    %s20 = sadd.s32 %s19, 1
    %s21 = scalar_select %p18, %s19, %s20
    %p24 = pneg %p18
    %p25 = scmp.eq.s32.totalorder %s9, 1
    %p26 = por %p24, %p25
    %p27 = scmp.ne.s32.totalorder %s19, %s22
    %p28 = scmp.eq.s32.totalorder %s9, 0
    %p29 = por %p27, %p28
    %p30 = scmp.ne.s32.totalorder %s19, %s22
    %p31 = scmp.eq.s32.totalorder %s14, 1
    %p32 = por %p30, %p31
    %p33 = scmp.ne.s32.totalorder %s22, %s23
    %p34 = scmp.eq.s32.totalorder %s14, 0
    %p35 = por %p33, %p34
    %p36 = scmp.ne.s32.totalorder %s22, %s23
    %p37 = scmp.eq.s32.totalorder %s15, 1
    %p38 = por %p36, %p37
    %p40 = scmp.ne.s32.totalorder %s23, %s39
    %p41 = scmp.eq.s32.totalorder %s15, 0
    %p42 = por %p40, %p41
    %s44 = sadd.s32 %s43, 1
    %p47 = scmp.eq.s32.totalorder %s9, 1
    %p48 = scmp.ne.s32.totalorder %s43, %s45
    %p49 = scmp.eq.s32.totalorder %s9, 0
    %p50 = por %p48, %p49
    %p51 = scmp.ne.s32.totalorder %s43, %s45
    %p52 = scmp.eq.s32.totalorder %s14, 1
    %p53 = por %p51, %p52
    %p54 = scmp.ne.s32.totalorder %s45, %s46
    %p55 = scmp.eq.s32.totalorder %s14, 0
    %p56 = por %p54, %p55
    %p57 = scmp.ne.s32.totalorder %s45, %s46
    %p58 = scmp.eq.s32.totalorder %s15, 1
    %p59 = por %p57, %p58
    %p61 = scmp.ne.s32.totalorder %s46, %s60
    %p62 = scmp.eq.s32.totalorder %s15, 0
    %p63 = por %p61, %p62
    %s65 = sadd.s32 %s64, 1
    %p68 = scmp.eq.s32.totalorder %s9, 1
    %p69 = scmp.ne.s32.totalorder %s64, %s66
    %p70 = scmp.eq.s32.totalorder %s9, 0
    %p71 = por %p69, %p70
    %p72 = scmp.ne.s32.totalorder %s64, %s66
    %p73 = scmp.eq.s32.totalorder %s14, 1
    %p74 = por %p72, %p73
    %p75 = scmp.ne.s32.totalorder %s66, %s67
    %p76 = scmp.eq.s32.totalorder %s14, 0
    %p77 = por %p75, %p76
    %p78 = scmp.ne.s32.totalorder %s66, %s67
    %p79 = scmp.eq.s32.totalorder %s15, 1
    %p80 = por %p78, %p79
    %p82 = scmp.ne.s32.totalorder %s67, %s81
    %p83 = scmp.eq.s32.totalorder %s15, 0
    %p84 = por %p82, %p83
    %s85 = ssub.s32 %s9, %s16
    %p86 = scmp.eq.s32.totalorder %s85, 0
    %s88 = sadd.s32 %s87, 1
    %s89 = scalar_select %p86, %s87, %s88
    %p92 = pneg %p86
    %p93 = scmp.eq.s32.totalorder %s9, 1
    %p94 = por %p92, %p93
    %p95 = scmp.ne.s32.totalorder %s87, %s90
    %p96 = scmp.eq.s32.totalorder %s9, 0
    %p97 = por %p95, %p96
    %p98 = scmp.ne.s32.totalorder %s87, %s90
    %p99 = scmp.eq.s32.totalorder %s14, 1
    %p100 = por %p98, %p99
    %p101 = scmp.ne.s32.totalorder %s90, %s91
    %p102 = scmp.eq.s32.totalorder %s14, 0
    %p103 = por %p101, %p102
    %p104 = scmp.ne.s32.totalorder %s90, %s91
    %p105 = scmp.eq.s32.totalorder %s15, 1
    %p106 = por %p104, %p105
    %p108 = scmp.ne.s32.totalorder %s91, %s107
    %p109 = scmp.eq.s32.totalorder %s15, 0
    %p110 = por %p108, %p109
    %p111 = scmp.le.s32.totalorder 1, %s9
    %p112 = scmp.lt.s32.totalorder %s9, 3
    %p113 = pnand %p111, %p112
    %p114 = pneg %p113
    // Predicated region
    $region9: #{policynet2d_conv_forward.6} parent=5 // pred_check
      _
    $region10: #{policynet2d_conv_forward.6} parent=5 // pred_check_branch
      %116 = sbr.rel (%p113) target = $region12
    $region11: #{policynet2d_conv_forward.6} parent=5 // pred_region
      %s117 = ssub.s32 %s9, 1
      // Predicated region
      $region13: #{policynet2d_conv_forward.6} parent=11 // pred_check
        %p118 = pneg %p56
      $region14: #{policynet2d_conv_forward.6} parent=11 // pred_check_branch
        %120 = sbr.rel (%p118) target = $region16
      $region15: #{policynet2d_conv_forward.6} parent=11 // pred_region
        _
      $region16: #{policynet2d_conv_forward.6} parent=11 // pred_fallthru
        _
      // Predicated region
      $region17: #{policynet2d_conv_forward.6} parent=11 // pred_check
        %p121 = pneg %p77
      $region18: #{policynet2d_conv_forward.6} parent=11 // pred_check_branch
        %123 = sbr.rel (%p121) target = $region20
      $region19: #{policynet2d_conv_forward.6} parent=11 // pred_region
        _
      $region20: #{policynet2d_conv_forward.6} parent=11 // pred_fallthru
        _
    $region12: #{policynet2d_conv_forward.6} parent=5 // pred_fallthru
      _
    %p124 = scmp.lt.s32.totalorder %s9, 2
    // Predicated region
    $region21: #{policynet2d_conv_forward.6} parent=5 // pred_check
      %p125 = pneg %p124
    $region22: #{policynet2d_conv_forward.6} parent=5 // pred_check_branch
      %127 = sbr.rel (%p125) target = $region24
    $region23: #{policynet2d_conv_forward.6} parent=5 // pred_region
      // Predicated region
      $region25: #{policynet2d_conv_forward.6} parent=23 // pred_check
        %p128 = pneg %p29
      $region26: #{policynet2d_conv_forward.6} parent=23 // pred_check_branch
        %130 = sbr.rel (%p128) target = $region28
      $region27: #{policynet2d_conv_forward.6} parent=23 // pred_region
        %s131 = smul.u32 7, %s9
        %p132 = scmp.lt.s32.totalorder %s131, 13
        %s133 = scalar_select %p132, %s131, 13
        %s134 = smul.addr %s133, 5
        %s135 = smul.addr %s134, 4
        %s136 = scalar_lea.vmem %s0, %s135
        %s137 = smul.u32 7, %s9
      $region28: #{policynet2d_conv_forward.6} parent=23 // pred_fallthru
        _
    $region24: #{policynet2d_conv_forward.6} parent=5 // pred_fallthru
      _
    %p138 = scmp.le.s32.totalorder 1, %s9
    %p139 = scmp.lt.s32.totalorder %s9, 3
    %p140 = pnand %p138, %p139
    %p141 = pneg %p140
    // Predicated region
    $region29: #{policynet2d_conv_forward.6} parent=5 // pred_check
      _
    $region30: #{policynet2d_conv_forward.6} parent=5 // pred_check_branch
      %143 = sbr.rel (%p140) target = $region32
    $region31: #{policynet2d_conv_forward.6} parent=5 // pred_region
      %s144 = ssub.s32 %s9, 1
      %s145 = smul.u32 7, %s14
      %p146 = scmp.lt.s32.totalorder %s145, 13
      %s147 = scalar_select %p146, %s145, 13
      %s148 = smul.addr %s147, 5
      %s149 = smul.addr %s148, 4
      %s150 = scalar_lea.vmem %s0, %s149
      %p151 = pneg %p35
      %p152 = pneg %p32
      %p153 = pneg %p56
      %p154 = pneg %p53
      %p155 = pneg %p77
      %p156 = pneg %p74
      %p157 = pneg %p103
      %p158 = pneg %p100
      %s159 = smul.u32 7, %s14
      %p160 = scmp.lt.s32.totalorder %s159, 13
      %s161 = scalar_select %p160, %s159, 13
      %s162 = smul.addr %s161, 4
      %s163 = scalar_lea.vmem %s3, %s162
      %s164 = smul.u32 7, %s14
      %p165 = scmp.lt.s32.totalorder %s164, 13
      %s166 = scalar_select %p165, %s164, 13
      %s167 = smul.addr %s166, 5
      %s168 = smul.addr %s167, 4
      %s169 = scalar_lea.vmem %s0, %s168
      %s170 = smul.u32 7, %s14
      %s171 = smul.u32 7, %s14
      %p172 = scmp.lt.s32.totalorder %s171, 13
      %s173 = scalar_select %p172, %s171, 13
      %s174 = smul.addr %s173, 4
      %s175 = scalar_lea.vmem %s3, %s174
      %s176 = smul.u32 7, %s14
      %v178 = vld [vmem:[%s169] sm:$0xff]
      %v179 = vld [vmem:[%s169 + $0x8] sm:$0xff]
      %v180 = vld [vmem:[%s169 + $0x10] sm:$0xf]
      %v181 = vld [vmem:[%s169 + $0x14] sm:$0xff]
      %v182 = vld [vmem:[%s169 + $0x1c] sm:$0xff]
      %v183 = vld [vmem:[%s169 + $0x24] sm:$0xf]
      %v184 = vld [vmem:[%s169 + $0x28] sm:$0xff]
      %v185 = vld [vmem:[%s169 + $0x30] sm:$0xff]
      %v186 = vld [vmem:[%s169 + $0x38] sm:$0xf]
      %v187 = vld [vmem:[%s169 + $0x3c] sm:$0xff]
      %v188 = vld [vmem:[%s169 + $0x44] sm:$0xff]
      %v189 = vld [vmem:[%s169 + $0x4c] sm:$0xf]
      %v190 = vld [vmem:[%s169 + $0x50] sm:$0xff]
      %v191 = vld [vmem:[%s169 + $0x58] sm:$0xff]
      %v192 = vld [vmem:[%s169 + $0x60] sm:$0xf]
      %v193 = vld [vmem:[%s169 + $0x64] sm:$0xff]
      %v194 = vld [vmem:[%s169 + $0x6c] sm:$0xff]
      %v195 = vld [vmem:[%s169 + $0x74] sm:$0xf]
      %v196 = vld [vmem:[%s169 + $0x78] sm:$0xff]
      %v197 = vld [vmem:[%s169 + $0x80] sm:$0xff]
      %v198 = vld [vmem:[%s169 + $0x88] sm:$0xf]
      %v199 = vld [vmem:[%s1] sm:$0xf]
      %v200 = vld [vmem:[%s1 + $0x4] sm:$0xf]
      %v201 = vld [vmem:[%s1 + $0x8] sm:$0xf]
      %v202 = vld [vmem:[%s1 + $0xc] sm:$0xf]
      %v203 = vld [vmem:[%s1 + $0x10] sm:$0xf]
      %v204 = vld [vmem:[%s1 + $0x14] sm:$0xf]
      %v205 = vld [vmem:[%s1 + $0x18] sm:$0xf]
      %v206 = vld [vmem:[%s1 + $0x1c] sm:$0xf]
      %v207 = vld [vmem:[%s1 + $0x20] sm:$0xf]
      %v208 = vld [vmem:[%s1 + $0x24] sm:$0xf]
      %v209 = vld [vmem:[%s1 + $0x28] sm:$0xf]
      %v210 = vld [vmem:[%s1 + $0x2c] sm:$0xf]
      %v211 = vld [vmem:[%s1 + $0x30] sm:$0xf]
      %v212 = vld [vmem:[%s1 + $0x34] sm:$0xf]
      %v213 = vld [vmem:[%s1 + $0x38] sm:$0xf]
      %v214 = vld [vmem:[%s1 + $0x3c] sm:$0xf]
      %v215 = vld [vmem:[%s1 + $0x40] sm:$0xf]
      %v216 = vld [vmem:[%s1 + $0x44] sm:$0xf]
      %v217 = vld [vmem:[%s1 + $0x48] sm:$0xf]
      %v218 = vld [vmem:[%s1 + $0x4c] sm:$0xf]
      %v219 = vld [vmem:[%s1 + $0x50] sm:$0xf]
      %v220 = vld [vmem:[%s1 + $0x54] sm:$0xf]
      %v221 = vld [vmem:[%s1 + $0x58] sm:$0xf]
      %v222 = vld [vmem:[%s1 + $0x5c] sm:$0xf]
      %v223 = vld [vmem:[%s1 + $0x60] sm:$0xf]
      %v224 = vld [vmem:[%s1 + $0x64] sm:$0xf]
      %v225 = vld [vmem:[%s1 + $0x68] sm:$0xf]
      %v226 = vld [vmem:[%s1 + $0x6c] sm:$0xf]
      %v227 = vld [vmem:[%s1 + $0x70] sm:$0xf]
      %v228 = vld [vmem:[%s1 + $0x74] sm:$0xf]
      %v229 = vld [vmem:[%s1 + $0x78] sm:$0xf]
      %v230 = vld [vmem:[%s1 + $0x7c] sm:$0xf]
      %v231 = vld [vmem:[%s1 + $0x80] sm:$0xf]
      %v232 = vld [vmem:[%s1 + $0x84] sm:$0xf]
      %v233 = vld [vmem:[%s1 + $0x88] sm:$0xf]
      %v234 = vld [vmem:[%s1 + $0x8c] sm:$0xf]
      %v235 = vld [vmem:[%s1 + $0x90] sm:$0xf]
      %v236 = vld [vmem:[%s1 + $0x94] sm:$0xf]
      %v237 = vld [vmem:[%s1 + $0x98] sm:$0xf]
      %v238 = vld [vmem:[%s1 + $0x9c] sm:$0xf]
      %v239 = vld [vmem:[%s1 + $0xa0] sm:$0xf]
      %v240 = vld [vmem:[%s1 + $0xa4] sm:$0xf]
      %v241 = vld [vmem:[%s1 + $0xa8] sm:$0xf]
      %v242 = vld [vmem:[%s1 + $0xac] sm:$0xf]
      %v243 = vld [vmem:[%s1 + $0xb0] sm:$0xf]
      %v244 = vld [vmem:[%s1 + $0xb4] sm:$0xf]
      %v245 = vld [vmem:[%s1 + $0xb8] sm:$0xf]
      %v246 = vld [vmem:[%s1 + $0xbc] sm:$0xf]
      %v247 = vld [vmem:[%s1 + $0xc0] sm:$0xf]
      %v248 = vld [vmem:[%s1 + $0xc4] sm:$0xf]
      %v249 = vld [vmem:[%s1 + $0xc8] sm:$0xf]
      %v250 = vld [vmem:[%s1 + $0xcc] sm:$0xf]
      %v251 = vld [vmem:[%s1 + $0xd0] sm:$0xf]
      %v252 = vld [vmem:[%s1 + $0xd4] sm:$0xf]
      %v253 = vld [vmem:[%s1 + $0xd8] sm:$0xf]
      %v254 = vld [vmem:[%s1 + $0xdc] sm:$0xf]
      %v255 = vld [vmem:[%s1 + $0xe0] sm:$0xf]
      %v256 = vld [vmem:[%s1 + $0xe4] sm:$0xf]
      %v257 = vld [vmem:[%s1 + $0xe8] sm:$0xf]
      %v258 = vld [vmem:[%s1 + $0xec] sm:$0xf]
      %v259 = vld [vmem:[%s1 + $0xf0] sm:$0xf]
      %v260 = vld [vmem:[%s1 + $0xf4] sm:$0xf]
      %v261 = vld [vmem:[%s1 + $0xf8] sm:$0xf]
      %v262 = vld [vmem:[%s1 + $0xfc] sm:$0xf]
      %v263 = vld [vmem:[%s1 + $0x100] sm:$0xf]
      %v264 = vld [vmem:[%s1 + $0x104] sm:$0xf]
      %v265 = vld [vmem:[%s1 + $0x108] sm:$0xf]
      %v266 = vld [vmem:[%s1 + $0x10c] sm:$0xf]
      %v267 = vld [vmem:[%s1 + $0x110] sm:$0xf]
      %v268 = vld [vmem:[%s1 + $0x114] sm:$0xf]
      %v269 = vld [vmem:[%s1 + $0x118] sm:$0xf]
      %v270 = vld [vmem:[%s1 + $0x11c] sm:$0xf]
      %v271 = vld [vmem:[%s1 + $0x120] sm:$0xf]
      %v272 = vld [vmem:[%s1 + $0x124] sm:$0xf]
      %v273 = vld [vmem:[%s1 + $0x128] sm:$0xf]
      %v274 = vld [vmem:[%s1 + $0x12c] sm:$0xf]
      %v275 = vld [vmem:[%s1 + $0x130] sm:$0xf]
      %v276 = vld [vmem:[%s1 + $0x134] sm:$0xf]
      %v277 = vld [vmem:[%s1 + $0x138] sm:$0xf]
      %v278 = vld [vmem:[%s1 + $0x13c] sm:$0xf]
      %v279 = vld [vmem:[%s2] sm:$0x1]
      %v281 = vlaneseq
      %v282 = vshrl.u32 %v281, 7
      %v283 = vsub.s32 0, %v282
      %v284 = vrot.slane %v279, %v283
      %v307 = vunpack.c.l.b16 %v178
      %v308 = vunpack.c.h.b16 %v178
      %v309 = vunpack.c.l.b16 %v179
      %v310 = vunpack.c.h.b16 %v179
      %v311 = vunpack.c.l.b16 %v180
      %v312 = vunpack.c.l.b16 %v181
      %v313 = vunpack.c.h.b16 %v181
      %v314 = vunpack.c.l.b16 %v182
      %v315 = vunpack.c.h.b16 %v182
      %v316 = vunpack.c.l.b16 %v183
      %v317 = vunpack.c.l.b16 %v184
      %v318 = vunpack.c.h.b16 %v184
      %v319 = vunpack.c.l.b16 %v185
      %v320 = vunpack.c.h.b16 %v185
      %v321 = vunpack.c.l.b16 %v186
      %v322 = vunpack.c.l.b16 %v187
      %v323 = vunpack.c.h.b16 %v187
      %v324 = vunpack.c.l.b16 %v188
      %v325 = vunpack.c.h.b16 %v188
      %v326 = vunpack.c.l.b16 %v189
      %v327 = vunpack.c.l.b16 %v190
      %v328 = vunpack.c.h.b16 %v190
      %v329 = vunpack.c.l.b16 %v191
      %v330 = vunpack.c.h.b16 %v191
      %v331 = vunpack.c.l.b16 %v192
      %v332 = vunpack.c.l.b16 %v193
      %v333 = vunpack.c.h.b16 %v193
      %v334 = vunpack.c.l.b16 %v194
      %v335 = vunpack.c.h.b16 %v194
      %v336 = vunpack.c.l.b16 %v195
      %v337 = vunpack.c.l.b16 %v196
      %v338 = vunpack.c.h.b16 %v196
      %v339 = vunpack.c.l.b16 %v197
      %v340 = vunpack.c.h.b16 %v197
      %v341 = vunpack.c.l.b16 %v198
      %v342 = vpack.c.b16 %v312, %v307
      %v343 = vpack.c.b16 %v313, %v308
      %v344 = vpack.c.b16 %v314, %v309
      %v345 = vpack.c.b16 %v315, %v310
      %v346 = vpack.c.b16 %v316, %v311
      %v347 = vpack.c.b16 %v322, %v317
      %v348 = vpack.c.b16 %v323, %v318
      %v349 = vpack.c.b16 %v324, %v319
      %v350 = vpack.c.b16 %v325, %v320
      %v351 = vpack.c.b16 %v326, %v321
      %v352 = vpack.c.b16 %v332, %v327
      %v353 = vpack.c.b16 %v333, %v328
      %v354 = vpack.c.b16 %v334, %v329
      %v355 = vpack.c.b16 %v335, %v330
      %v356 = vpack.c.b16 %v336, %v331
      %v357 = vpack.c.b16 %v337, %v337
      %v358 = vpack.c.b16 %v338, %v338
      %v359 = vpack.c.b16 %v339, %v339
      %v360 = vpack.c.b16 %v340, %v340
      %v361 = vpack.c.b16 %v341, %v341
      %v462 = vunpack.c.l.b16 %v199
      %v463 = vunpack.c.l.b16 %v200
      %v464 = vunpack.c.l.b16 %v201
      %v465 = vunpack.c.l.b16 %v202
      %v466 = vunpack.c.l.b16 %v203
      %v467 = vunpack.c.l.b16 %v204
      %v468 = vunpack.c.l.b16 %v205
      %v469 = vunpack.c.l.b16 %v206
      %v470 = vunpack.c.l.b16 %v207
      %v471 = vunpack.c.l.b16 %v208
      %v472 = vunpack.c.l.b16 %v209
      %v473 = vunpack.c.l.b16 %v210
      %v474 = vunpack.c.l.b16 %v211
      %v475 = vunpack.c.l.b16 %v212
      %v476 = vunpack.c.l.b16 %v213
      %v477 = vunpack.c.l.b16 %v214
      %v478 = vunpack.c.l.b16 %v215
      %v479 = vunpack.c.l.b16 %v216
      %v480 = vunpack.c.l.b16 %v217
      %v481 = vunpack.c.l.b16 %v218
      %v482 = vunpack.c.l.b16 %v219
      %v483 = vunpack.c.l.b16 %v220
      %v484 = vunpack.c.l.b16 %v221
      %v485 = vunpack.c.l.b16 %v222
      %v486 = vunpack.c.l.b16 %v223
      %v487 = vunpack.c.l.b16 %v224
      %v488 = vunpack.c.l.b16 %v225
      %v489 = vunpack.c.l.b16 %v226
      %v490 = vunpack.c.l.b16 %v227
      %v491 = vunpack.c.l.b16 %v228
      %v492 = vunpack.c.l.b16 %v229
      %v493 = vunpack.c.l.b16 %v230
      %v494 = vunpack.c.l.b16 %v231
      %v495 = vunpack.c.l.b16 %v232
      %v496 = vunpack.c.l.b16 %v233
      %v497 = vunpack.c.l.b16 %v234
      %v498 = vunpack.c.l.b16 %v235
      %v499 = vunpack.c.l.b16 %v236
      %v500 = vunpack.c.l.b16 %v237
      %v501 = vunpack.c.l.b16 %v238
      %v502 = vunpack.c.l.b16 %v239
      %v503 = vunpack.c.l.b16 %v240
      %v504 = vunpack.c.l.b16 %v241
      %v505 = vunpack.c.l.b16 %v242
      %v506 = vunpack.c.l.b16 %v243
      %v507 = vunpack.c.l.b16 %v244
      %v508 = vunpack.c.l.b16 %v245
      %v509 = vunpack.c.l.b16 %v246
      %v510 = vunpack.c.l.b16 %v247
      %v511 = vunpack.c.l.b16 %v248
      %v512 = vunpack.c.l.b16 %v249
      %v513 = vunpack.c.l.b16 %v250
      %v514 = vunpack.c.l.b16 %v251
      %v515 = vunpack.c.l.b16 %v252
      %v516 = vunpack.c.l.b16 %v253
      %v517 = vunpack.c.l.b16 %v254
      %v518 = vunpack.c.l.b16 %v255
      %v519 = vunpack.c.l.b16 %v256
      %v520 = vunpack.c.l.b16 %v257
      %v521 = vunpack.c.l.b16 %v258
      %v522 = vunpack.c.l.b16 %v259
      %v523 = vunpack.c.l.b16 %v260
      %v524 = vunpack.c.l.b16 %v261
      %v525 = vunpack.c.l.b16 %v262
      %v526 = vunpack.c.l.b16 %v263
      %v527 = vunpack.c.l.b16 %v264
      %v528 = vunpack.c.l.b16 %v265
      %v529 = vunpack.c.l.b16 %v266
      %v530 = vunpack.c.l.b16 %v267
      %v531 = vunpack.c.l.b16 %v268
      %v532 = vunpack.c.l.b16 %v269
      %v533 = vunpack.c.l.b16 %v270
      %v534 = vunpack.c.l.b16 %v271
      %v535 = vunpack.c.l.b16 %v272
      %v536 = vunpack.c.l.b16 %v273
      %v537 = vunpack.c.l.b16 %v274
      %v538 = vunpack.c.l.b16 %v275
      %v539 = vunpack.c.l.b16 %v276
      %v540 = vunpack.c.l.b16 %v277
      %v541 = vunpack.c.l.b16 %v278
      %v542 = vpack.c.b16 %v463, %v462
      %v543 = vpack.c.b16 %v465, %v464
      %v544 = vpack.c.b16 %v467, %v466
      %v545 = vpack.c.b16 %v469, %v468
      %v546 = vpack.c.b16 %v471, %v470
      %v547 = vpack.c.b16 %v473, %v472
      %v548 = vpack.c.b16 %v475, %v474
      %v549 = vpack.c.b16 %v477, %v476
      %v550 = vpack.c.b16 %v479, %v478
      %v551 = vpack.c.b16 %v481, %v480
      %v552 = vpack.c.b16 %v483, %v482
      %v553 = vpack.c.b16 %v485, %v484
      %v554 = vpack.c.b16 %v487, %v486
      %v555 = vpack.c.b16 %v489, %v488
      %v556 = vpack.c.b16 %v491, %v490
      %v557 = vpack.c.b16 %v493, %v492
      %v558 = vpack.c.b16 %v495, %v494
      %v559 = vpack.c.b16 %v497, %v496
      %v560 = vpack.c.b16 %v499, %v498
      %v561 = vpack.c.b16 %v501, %v500
      %v562 = vpack.c.b16 %v503, %v502
      %v563 = vpack.c.b16 %v505, %v504
      %v564 = vpack.c.b16 %v507, %v506
      %v565 = vpack.c.b16 %v509, %v508
      %v566 = vpack.c.b16 %v511, %v510
      %v567 = vpack.c.b16 %v513, %v512
      %v568 = vpack.c.b16 %v515, %v514
      %v569 = vpack.c.b16 %v517, %v516
      %v570 = vpack.c.b16 %v519, %v518
      %v571 = vpack.c.b16 %v521, %v520
      %v572 = vpack.c.b16 %v523, %v522
      %v573 = vpack.c.b16 %v525, %v524
      %v574 = vpack.c.b16 %v527, %v526
      %v575 = vpack.c.b16 %v529, %v528
      %v576 = vpack.c.b16 %v531, %v530
      %v577 = vpack.c.b16 %v533, %v532
      %v578 = vpack.c.b16 %v535, %v534
      %v579 = vpack.c.b16 %v537, %v536
      %v580 = vpack.c.b16 %v539, %v538
      %v581 = vpack.c.b16 %v541, %v540
      %622 = vmatprep.subr.bf16.mxu0 0
      %623 = vmatpush1.bf16.msra.mxu0 %v542
      %624 = vmatprep.subr.bf16.mxu0 0
      %625 = vmatpush1.bf16.msra.mxu0 %v543
      %626 = vmatprep.subr.bf16.mxu0 0
      %627 = vmatpush1.bf16.msra.mxu0 %v544
      %628 = vmatprep.subr.bf16.mxu0 0
      %629 = vmatpush1.bf16.msra.mxu0 %v545
      %630 = vmatprep.subr.bf16.mxu0 0
      %631 = vmatpush1.bf16.msra.mxu0 %v546
      %632 = vmatprep.subr.bf16.mxu0 0
      %633 = vmatpush1.bf16.msra.mxu0 %v547
      %634 = vmatprep.subr.bf16.mxu0 0
      %635 = vmatpush1.bf16.msra.mxu0 %v548
      %636 = vmatprep.subr.bf16.mxu0 0
      %637 = vmatpush1.bf16.msra.mxu0 %v549
      %638 = vmatprep.subr.bf16.mxu0 0
      %639 = vmatpush1.bf16.msra.mxu0 %v550
      %640 = vmatprep.subr.bf16.mxu0 0
      %641 = vmatpush1.bf16.msra.mxu0 %v551
      %642 = vmatprep.subr.bf16.mxu0 0
      %643 = vmatpush1.bf16.msra.mxu0 %v552
      %644 = vmatprep.subr.bf16.mxu0 0
      %645 = vmatpush1.bf16.msra.mxu0 %v553
      %646 = vmatprep.subr.bf16.mxu0 0
      %647 = vmatpush1.bf16.msra.mxu0 %v554
      %648 = vmatprep.subr.bf16.mxu0 0
      %649 = vmatpush1.bf16.msra.mxu0 %v555
      %650 = vmatprep.subr.bf16.mxu0 0
      %651 = vmatpush1.bf16.msra.mxu0 %v556
      %652 = vmatprep.subr.bf16.mxu0 0
      %653 = vmatpush1.bf16.msra.mxu0 %v557
      %654 = vmatprep.mubr.bf16.mxu0 %v343
      %655 = vmatmul.mubr.bf16.gmra.mrb[0].mxu0 %v342
      %v656 = vpop.f32.mrb[0].mxu0
      %v657 = vadd.f32 %v284, %v656
      %v658 = vpop.f32.mrb[0].mxu0
      %v659 = vpop.f32.mrb[0].mxu0
      %v660 = vadd.f32 %v284, %v659
      %v661 = vpop.f32.mrb[0].mxu0
      %662 = vmatprep.mubr.bf16.mxu0 %v348
      %663 = vmatmul.mubr.bf16.gmra.mrb[0].mxu0 %v347
      %v664 = vpop.f32.mrb[0].mxu0
      %v665 = vadd.f32 %v284, %v664
      %v666 = vpop.f32.mrb[0].mxu0
      %v667 = vpop.f32.mrb[0].mxu0
      %v668 = vadd.f32 %v284, %v667
      %v669 = vpop.f32.mrb[0].mxu0
      %670 = vmatprep.mubr.bf16.mxu0 %v353
      %671 = vmatmul.mubr.bf16.gmra.mrb[0].mxu0 %v352
      %v672 = vpop.f32.mrb[0].mxu0
      %v673 = vadd.f32 %v284, %v672
      %v674 = vpop.f32.mrb[0].mxu0
      %v675 = vpop.f32.mrb[0].mxu0
      %v676 = vadd.f32 %v284, %v675
      %v677 = vpop.f32.mrb[0].mxu0
      %678 = vmatprep.mubr.bf16.mxu0 %v358
      %679 = vmatmul.mubr.bf16.gmra.mrb[0].mxu0 %v357
      %v680 = vpop.f32.mrb[0].mxu0
      %v681 = vadd.f32 %v284, %v680
      %v682 = vpop.f32.mrb[0].mxu0
      %v683 = vpop.f32.mrb[0].mxu0
      %v684 = vpop.f32.mrb[0].mxu0
      %685 = vdwg.mxu0
      %686 = vmatprep.subr.bf16.mxu0 0
      %687 = vmatpush1.bf16.msra.mxu0 %v558
      %688 = vmatprep.subr.bf16.mxu0 0
      %689 = vmatpush1.bf16.msra.mxu0 %v559
      %690 = vmatprep.subr.bf16.mxu0 0
      %691 = vmatpush1.bf16.msra.mxu0 %v560
      %692 = vmatprep.subr.bf16.mxu0 0
      %693 = vmatpush1.bf16.msra.mxu0 %v561
      %694 = vmatprep.subr.bf16.mxu0 0
      %695 = vmatpush1.bf16.msra.mxu0 %v562
      %696 = vmatprep.subr.bf16.mxu0 0
      %697 = vmatpush1.bf16.msra.mxu0 %v563
      %698 = vmatprep.subr.bf16.mxu0 0
      %699 = vmatpush1.bf16.msra.mxu0 %v564
      %700 = vmatprep.subr.bf16.mxu0 0
      %701 = vmatpush1.bf16.msra.mxu0 %v565
      %702 = vmatprep.subr.bf16.mxu0 0
      %703 = vmatpush1.bf16.msra.mxu0 %v566
      %704 = vmatprep.subr.bf16.mxu0 0
      %705 = vmatpush1.bf16.msra.mxu0 %v567
      %706 = vmatprep.subr.bf16.mxu0 0
      %707 = vmatpush1.bf16.msra.mxu0 %v568
      %708 = vmatprep.subr.bf16.mxu0 0
      %709 = vmatpush1.bf16.msra.mxu0 %v569
      %710 = vmatprep.subr.bf16.mxu0 0
      %711 = vmatpush1.bf16.msra.mxu0 %v570
      %712 = vmatprep.subr.bf16.mxu0 0
      %713 = vmatpush1.bf16.msra.mxu0 %v571
      %714 = vmatprep.subr.bf16.mxu0 0
      %715 = vmatpush1.bf16.msra.mxu0 %v572
      %716 = vmatprep.subr.bf16.mxu0 0
      %717 = vmatpush1.bf16.msra.mxu0 %v573
      %718 = vmatprep.mubr.bf16.mxu0 %v345
      %719 = vmatmul.mubr.bf16.gmra.mrb[0].mxu0 %v344
      %v720 = vpop.f32.mrb[0].mxu0
      %v721 = vadd.f32 %v657, %v720
      %v722 = vpop.f32.mrb[0].mxu0
      %v723 = vpop.f32.mrb[0].mxu0
      %v724 = vadd.f32 %v660, %v723
      %v725 = vpop.f32.mrb[0].mxu0
      %726 = vmatprep.mubr.bf16.mxu0 %v350
      %727 = vmatmul.mubr.bf16.gmra.mrb[0].mxu0 %v349
      %v728 = vpop.f32.mrb[0].mxu0
      %v729 = vadd.f32 %v665, %v728
      %v730 = vpop.f32.mrb[0].mxu0
      %v731 = vpop.f32.mrb[0].mxu0
      %v732 = vadd.f32 %v668, %v731
      %v733 = vpop.f32.mrb[0].mxu0
      %734 = vmatprep.mubr.bf16.mxu0 %v355
      %735 = vmatmul.mubr.bf16.gmra.mrb[0].mxu0 %v354
      %v736 = vpop.f32.mrb[0].mxu0
      %v737 = vadd.f32 %v673, %v736
      %v738 = vpop.f32.mrb[0].mxu0
      %v739 = vpop.f32.mrb[0].mxu0
      %v740 = vadd.f32 %v676, %v739
      %v741 = vpop.f32.mrb[0].mxu0
      %742 = vmatprep.mubr.bf16.mxu0 %v360
      %743 = vmatmul.mubr.bf16.gmra.mrb[0].mxu0 %v359
      %v744 = vpop.f32.mrb[0].mxu0
      %v745 = vadd.f32 %v681, %v744
      %v746 = vpop.f32.mrb[0].mxu0
      %v747 = vpop.f32.mrb[0].mxu0
      %v748 = vpop.f32.mrb[0].mxu0
      %749 = vdwg.mxu0
      %750 = vmatprep.subr.bf16.mxu0 0
      %751 = vmatpush1.bf16.msra.mxu0 %v574
      %752 = vmatprep.subr.bf16.mxu0 0
      %753 = vmatpush1.bf16.msra.mxu0 %v575
      %754 = vmatprep.subr.bf16.mxu0 0
      %755 = vmatpush1.bf16.msra.mxu0 %v576
      %756 = vmatprep.subr.bf16.mxu0 0
      %757 = vmatpush1.bf16.msra.mxu0 %v577
      %758 = vmatprep.subr.bf16.mxu0 0
      %759 = vmatpush1.bf16.msra.mxu0 %v578
      %760 = vmatprep.subr.bf16.mxu0 0
      %761 = vmatpush1.bf16.msra.mxu0 %v579
      %762 = vmatprep.subr.bf16.mxu0 0
      %763 = vmatpush1.bf16.msra.mxu0 %v580
      %764 = vmatprep.subr.bf16.mxu0 0
      %765 = vmatpush1.bf16.msra.mxu0 %v581
      %766 = vmatprep.subr.bf16.mxu0 0
      %767 = vmatpush1.bf16.msra.mxu0 0
      %768 = vmatprep.subr.bf16.mxu0 0
      %769 = vmatpush1.bf16.msra.mxu0 0
      %770 = vmatprep.subr.bf16.mxu0 0
      %771 = vmatpush1.bf16.msra.mxu0 0
      %772 = vmatprep.subr.bf16.mxu0 0
      %773 = vmatpush1.bf16.msra.mxu0 0
      %774 = vmatprep.subr.bf16.mxu0 0
      %775 = vmatpush1.bf16.msra.mxu0 0
      %776 = vmatprep.subr.bf16.mxu0 0
      %777 = vmatpush1.bf16.msra.mxu0 0
      %778 = vmatprep.subr.bf16.mxu0 0
      %779 = vmatpush1.bf16.msra.mxu0 0
      %780 = vmatprep.subr.bf16.mxu0 0
      %781 = vmatpush1.bf16.msra.mxu0 0
      %782 = vmatprep.mubr.bf16.mxu0 0
      %783 = vmatmul.mubr.bf16.gmra.mrb[0].mxu0 %v346
      %v784 = vpop.f32.mrb[0].mxu0
      %v785 = vadd.f32 %v721, %v784
      %v786 = vpop.f32.mrb[0].mxu0
      %v787 = vpop.f32.mrb[0].mxu0
      %v788 = vadd.f32 %v724, %v787
      %v789 = vpop.f32.mrb[0].mxu0
      %790 = vmatprep.mubr.bf16.mxu0 0
      %791 = vmatmul.mubr.bf16.gmra.mrb[0].mxu0 %v351
      %v792 = vpop.f32.mrb[0].mxu0
      %v793 = vadd.f32 %v729, %v792
      %v794 = vpop.f32.mrb[0].mxu0
      %v795 = vpop.f32.mrb[0].mxu0
      %v796 = vadd.f32 %v732, %v795
      %v797 = vpop.f32.mrb[0].mxu0
      %798 = vmatprep.mubr.bf16.mxu0 0
      %799 = vmatmul.mubr.bf16.gmra.mrb[0].mxu0 %v356
      %v800 = vpop.f32.mrb[0].mxu0
      %v801 = vadd.f32 %v737, %v800
      %v802 = vpop.f32.mrb[0].mxu0
      %v803 = vpop.f32.mrb[0].mxu0
      %v804 = vadd.f32 %v740, %v803
      %v805 = vpop.f32.mrb[0].mxu0
      %806 = vmatprep.mubr.bf16.mxu0 0
      %807 = vmatmul.mubr.bf16.gmra.mrb[0].mxu0 %v361
      %v808 = vpop.f32.mrb[0].mxu0
      %v809 = vadd.f32 %v745, %v808
      %v810 = vpop.f32.mrb[0].mxu0
      %v811 = vpop.f32.mrb[0].mxu0
      %v812 = vpop.f32.mrb[0].mxu0
      %813 = vdwg.mxu0
      %v814 = vmax.f32 %v785, 0.0
      %v815 = vmax.f32 %v788, 0.0
      %v816 = vmax.f32 %v793, 0.0
      %v817 = vmax.f32 %v796, 0.0
      %v818 = vmax.f32 %v801, 0.0
      %v819 = vmax.f32 %v804, 0.0
      %v820 = vmax.f32 %v809, 0.0
      %v821 = vpack.c.bf16 %v815, %v814
      %v822 = vpack.c.bf16 %v817, %v816
      %v823 = vpack.c.bf16 %v819, %v818
      %v824 = vpack.c.bf16 %v820, %v820
      %v829 = vunpack.c.l.b16 %v821
      %v830 = vunpack.c.h.b16 %v821
      %v831 = vunpack.c.l.b16 %v822
      %v832 = vunpack.c.h.b16 %v822
      %v833 = vunpack.c.l.b16 %v823
      %v834 = vunpack.c.h.b16 %v823
      %v835 = vunpack.c.l.b16 %v824
      %v836 = vpack.c.b16 %v829, %v829
      %v837 = vpack.c.b16 %v830, %v830
      %v838 = vpack.c.b16 %v831, %v831
      %v839 = vpack.c.b16 %v832, %v832
      %v840 = vpack.c.b16 %v833, %v833
      %v841 = vpack.c.b16 %v834, %v834
      %v842 = vpack.c.b16 %v835, %v835
      %850 = vst [vmem:[%s175] sm:$0xf] %v836
      %851 = vst [vmem:[%s175 + $0x4] sm:$0xf] %v837
      %852 = vst [vmem:[%s175 + $0x8] sm:$0xf] %v838
      %853 = vst [vmem:[%s175 + $0xc] sm:$0xf] %v839
      %854 = vst [vmem:[%s175 + $0x10] sm:$0xf] %v840
      %855 = vst [vmem:[%s175 + $0x14] sm:$0xf] %v841
      %856 = vst [vmem:[%s175 + $0x18] sm:$0xf] %v842
      %s857 = smul.u32 7, %s14
      %p858 = scmp.lt.s32.totalorder %s857, 13
      %s859 = scalar_select %p858, %s857, 13
      %s860 = smul.addr %s859, 4
      %s861 = scalar_lea.vmem %s3, %s860
      // Predicated region
      $region33: #{policynet2d_conv_forward.6} parent=31 // pred_check
        %p862 = pneg %p100
      $region34: #{policynet2d_conv_forward.6} parent=31 // pred_check_branch
        %864 = sbr.rel (%p862) target = $region36
      $region35: #{policynet2d_conv_forward.6} parent=31 // pred_region
        %s865 = smul.u32 7, %s14
      $region36: #{policynet2d_conv_forward.6} parent=31 // pred_fallthru
        _
    $region32: #{policynet2d_conv_forward.6} parent=5 // pred_fallthru
      _
    %p866 = scmp.le.s32.totalorder 2, %s9
    // Predicated region
    $region37: #{policynet2d_conv_forward.6} parent=5 // pred_check
      %p867 = pneg %p866
    $region38: #{policynet2d_conv_forward.6} parent=5 // pred_check_branch
      %869 = sbr.rel (%p867) target = $region40
    $region39: #{policynet2d_conv_forward.6} parent=5 // pred_region
      %s870 = ssub.s32 %s9, 2
      // Predicated region
      $region41: #{policynet2d_conv_forward.6} parent=39 // pred_check
        %p871 = pneg %p106
      $region42: #{policynet2d_conv_forward.6} parent=39 // pred_check_branch
        %873 = sbr.rel (%p871) target = $region44
      $region43: #{policynet2d_conv_forward.6} parent=39 // pred_region
        %s874 = smul.u32 7, %s15
        %p875 = scmp.lt.s32.totalorder %s874, 13
        %s876 = scalar_select %p875, %s874, 13
        %s877 = smul.addr %s876, 4
        %s878 = scalar_lea.vmem %s3, %s877
      $region44: #{policynet2d_conv_forward.6} parent=39 // pred_fallthru
        _
    $region40: #{policynet2d_conv_forward.6} parent=5 // pred_fallthru
      _
  $region6: #{policynet2d_conv_forward.6} parent=0 // loop_footer
    %s13 = sadd.s32 1, %s9
  $region7: #{policynet2d_conv_forward.6} parent=0 // loop_footer_branch
    %8 = sbr.rel target = $region3
  $region8: #{policynet2d_conv_forward.6} parent=0 // loop_exit
    _

// kernel: policynet2d_conv_forward.7
$region0: #{policynet2d_conv_forward.7}
  #allocation0 [shape = 'u32[]', space=smem, size = 0x4, offset = 0x4, fixed_abs, tag = 'smem constant byte address 0x4 - core index']
  #allocation1 [shape = 'u32[144,128]{1,0:T(1,128)}', space=vmem, size = 0x12000, scoped, tag = 'internal scratch']
  #allocation2 [shape = 'f32[2,256]{1,0:T(2,128)}', space=vmem, size = 0x800, scoped, tag = 'scratch operand']
  %s0 = inlined_call_operand.vmem [shape: bf16[2,3200], index: 0, kind: input, shape index: {}]
  %s1 = inlined_call_operand.vmem [shape: bf16[3200,512], index: 1, kind: input, shape index: {}]
  %s2 = inlined_call_operand.vmem [shape: f32[1,512], index: 2, kind: input, shape index: {}]
  %s3 = inlined_call_operand.vmem [shape: bf16[512,6], index: 3, kind: input, shape index: {}]
  %s4 = inlined_call_operand.vmem [shape: f32[1,6], index: 4, kind: input, shape index: {}]
  %s5 = inlined_call_operand.vmem [shape: f32[2,2,6], index: 5, kind: output, shape index: {}]
  %s6 = sld [smem:[#allocation0]]
  $region99: #{policynet2d_conv_forward.7} parent=0
    _
  %s8 = ssub.s32 1, %s6
  %s9 = scalar_select 0, %s8, %s6
  $region1: #{policynet2d_conv_forward.7} parent=0
    #allocation3 [shape = 'u8[655360]{0}', space=vmem, size = 0xa0000, scoped, tag = 'input window, operand 1']
    loop: start=0, step=1, limit=12
    $region2: #{policynet2d_conv_forward.7} parent=1 // loop_pre_header
      _
    $region3: #{policynet2d_conv_forward.7} parent=1 // loop_header
      %s11 = sphi 0, %s15
      %p12 = scmp.ge.s32.totalorder %s11, 12
      %s18 = sphi 0, %s30
      %s19 = sphi 0, %s26
      %s20 = sphi 0, %s18
      %s21 = sphi 0, %s19
      %s22 = sphi 0, %s20
      %s23 = sphi 0, %s21
      %s33 = sphi 0, %s35
      %s36 = sphi 0, %s33
      %s37 = sphi 0, %s36
      %s53 = sphi 0, %s37
      %s61 = sphi 0, %s63
      %s64 = sphi 0, %s61
      %s65 = sphi 0, %s64
      %s81 = sphi 0, %s65
      %s87 = sphi 0, %s89
      %s90 = sphi 0, %s87
      %s91 = sphi 0, %s90
      %s107 = sphi 0, %s91
      %s113 = sphi 0, %s115
      %s116 = sphi 0, %s113
      %s117 = sphi 0, %s116
      %s133 = sphi 0, %s117
      %s137 = sphi 0, %s137
      %s139 = sphi 0, %s137
      %s140 = sphi 0, %s139
      %s154 = sphi 0, %s140
      %s160 = sphi 0, %s162
      %s163 = sphi 0, %s160
      %s164 = sphi 0, %s163
      %s180 = sphi 0, %s164
    $region4: #{policynet2d_conv_forward.7} parent=1 // loop_header_branch
      %14 = sbr.rel (%p12) target = $region8
    $region5: #{policynet2d_conv_forward.7} parent=1 // loop_body
      %s16 = ssub.s32 %s11, 1
      %s17 = ssub.s32 %s11, 2
      %s24 = sadd.s32 1, %s19
      %p25 = scmp.ge.s32.totalorder %s24, 5
      %s26 = scalar_select %p25, 0, %s24
      %s27 = sadd.s32 1, %s18
      %s28 = scalar_select %p25, %s27, %s18
      %p29 = scmp.ge.s32.totalorder %s28, 2
      %s30 = scalar_select %p29, 0, %s28
      %s31 = ssub.s32 %s19, %s26
      %p32 = scmp.eq.s32.totalorder %s31, 0
      %s34 = sadd.s32 %s33, 1
      %s35 = scalar_select %p32, %s33, %s34
      %p38 = pneg %p32
      %p39 = scmp.eq.s32.totalorder %s11, 9
      %p40 = por %p38, %p39
      %p41 = scmp.ne.s32.totalorder %s33, %s36
      %p42 = scmp.eq.s32.totalorder %s11, 0
      %p43 = por %p41, %p42
      %p44 = scmp.ne.s32.totalorder %s33, %s36
      %p45 = scmp.eq.s32.totalorder %s16, 9
      %p46 = por %p44, %p45
      %p47 = scmp.ne.s32.totalorder %s36, %s37
      %p48 = scmp.eq.s32.totalorder %s16, 0
      %p49 = por %p47, %p48
      %p50 = scmp.ne.s32.totalorder %s36, %s37
      %p51 = scmp.eq.s32.totalorder %s17, 9
      %p52 = por %p50, %p51
      %p54 = scmp.ne.s32.totalorder %s37, %s53
      %p55 = scmp.eq.s32.totalorder %s17, 0
      %p56 = por %p54, %p55
      %s57 = ssub.s32 %s19, %s26
      %s58 = ssub.s32 %s18, %s30
      %s59 = sor.u32 %s57, %s58
      %p60 = scmp.eq.s32.totalorder %s59, 0
      %s62 = sadd.s32 %s61, 1
      %s63 = scalar_select %p60, %s61, %s62
      %p66 = pneg %p60
      %p67 = scmp.eq.s32.totalorder %s11, 9
      %p68 = por %p66, %p67
      %p69 = scmp.ne.s32.totalorder %s61, %s64
      %p70 = scmp.eq.s32.totalorder %s11, 0
      %p71 = por %p69, %p70
      %p72 = scmp.ne.s32.totalorder %s61, %s64
      %p73 = scmp.eq.s32.totalorder %s16, 9
      %p74 = por %p72, %p73
      %p75 = scmp.ne.s32.totalorder %s64, %s65
      %p76 = scmp.eq.s32.totalorder %s16, 0
      %p77 = por %p75, %p76
      %p78 = scmp.ne.s32.totalorder %s64, %s65
      %p79 = scmp.eq.s32.totalorder %s17, 9
      %p80 = por %p78, %p79
      %p82 = scmp.ne.s32.totalorder %s65, %s81
      %p83 = scmp.eq.s32.totalorder %s17, 0
      %p84 = por %p82, %p83
      %s85 = ssub.s32 %s18, %s30
      %p86 = scmp.eq.s32.totalorder %s85, 0
      %s88 = sadd.s32 %s87, 1
      %s89 = scalar_select %p86, %s87, %s88
      %p92 = pneg %p86
      %p93 = scmp.eq.s32.totalorder %s11, 9
      %p94 = por %p92, %p93
      %p95 = scmp.ne.s32.totalorder %s87, %s90
      %p96 = scmp.eq.s32.totalorder %s11, 0
      %p97 = por %p95, %p96
      %p98 = scmp.ne.s32.totalorder %s87, %s90
      %p99 = scmp.eq.s32.totalorder %s16, 9
      %p100 = por %p98, %p99
      %p101 = scmp.ne.s32.totalorder %s90, %s91
      %p102 = scmp.eq.s32.totalorder %s16, 0
      %p103 = por %p101, %p102
      %p104 = scmp.ne.s32.totalorder %s90, %s91
      %p105 = scmp.eq.s32.totalorder %s17, 9
      %p106 = por %p104, %p105
      %p108 = scmp.ne.s32.totalorder %s91, %s107
      %p109 = scmp.eq.s32.totalorder %s17, 0
      %p110 = por %p108, %p109
      %s111 = ssub.s32 %s18, %s30
      %p112 = scmp.eq.s32.totalorder %s111, 0
      %s114 = sadd.s32 %s113, 1
      %s115 = scalar_select %p112, %s113, %s114
      %p118 = pneg %p112
      %p119 = scmp.eq.s32.totalorder %s11, 9
      %p120 = por %p118, %p119
      %p121 = scmp.ne.s32.totalorder %s113, %s116
      %p122 = scmp.eq.s32.totalorder %s11, 0
      %p123 = por %p121, %p122
      %p124 = scmp.ne.s32.totalorder %s113, %s116
      %p125 = scmp.eq.s32.totalorder %s16, 9
      %p126 = por %p124, %p125
      %p127 = scmp.ne.s32.totalorder %s116, %s117
      %p128 = scmp.eq.s32.totalorder %s16, 0
      %p129 = por %p127, %p128
      %p130 = scmp.ne.s32.totalorder %s116, %s117
      %p131 = scmp.eq.s32.totalorder %s17, 9
      %p132 = por %p130, %p131
      %p134 = scmp.ne.s32.totalorder %s117, %s133
      %p135 = scmp.eq.s32.totalorder %s17, 0
      %p136 = por %p134, %p135
      %s138 = sadd.s32 %s137, 1
      %p141 = scmp.eq.s32.totalorder %s11, 9
      %p142 = scmp.ne.s32.totalorder %s137, %s139
      %p143 = scmp.eq.s32.totalorder %s11, 0
      %p144 = por %p142, %p143
      %p145 = scmp.ne.s32.totalorder %s137, %s139
      %p146 = scmp.eq.s32.totalorder %s16, 9
      %p147 = por %p145, %p146
      %p148 = scmp.ne.s32.totalorder %s139, %s140
      %p149 = scmp.eq.s32.totalorder %s16, 0
      %p150 = por %p148, %p149
      %p151 = scmp.ne.s32.totalorder %s139, %s140
      %p152 = scmp.eq.s32.totalorder %s17, 9
      %p153 = por %p151, %p152
      %p155 = scmp.ne.s32.totalorder %s140, %s154
      %p156 = scmp.eq.s32.totalorder %s17, 0
      %p157 = por %p155, %p156
      %s158 = ssub.s32 %s18, %s30
      %p159 = scmp.eq.s32.totalorder %s158, 0
      %s161 = sadd.s32 %s160, 1
      %s162 = scalar_select %p159, %s160, %s161
      %p165 = pneg %p159
      %p166 = scmp.eq.s32.totalorder %s11, 9
      %p167 = por %p165, %p166
      %p168 = scmp.ne.s32.totalorder %s160, %s163
      %p169 = scmp.eq.s32.totalorder %s11, 0
      %p170 = por %p168, %p169
      %p171 = scmp.ne.s32.totalorder %s160, %s163
      %p172 = scmp.eq.s32.totalorder %s16, 9
      %p173 = por %p171, %p172
      %p174 = scmp.ne.s32.totalorder %s163, %s164
      %p175 = scmp.eq.s32.totalorder %s16, 0
      %p176 = por %p174, %p175
      %p177 = scmp.ne.s32.totalorder %s163, %s164
      %p178 = scmp.eq.s32.totalorder %s17, 9
      %p179 = por %p177, %p178
      %p181 = scmp.ne.s32.totalorder %s164, %s180
      %p182 = scmp.eq.s32.totalorder %s17, 0
      %p183 = por %p181, %p182
      %p184 = scmp.le.s32.totalorder 1, %s11
      %p185 = scmp.lt.s32.totalorder %s11, 11
      %p186 = pnand %p184, %p185
      %p187 = pneg %p186
      // Predicated region
      $region9: #{policynet2d_conv_forward.7} parent=5 // pred_check
        _
      $region10: #{policynet2d_conv_forward.7} parent=5 // pred_check_branch
        %189 = sbr.rel (%p186) target = $region12
      $region11: #{policynet2d_conv_forward.7} parent=5 // pred_region
        %s190 = ssub.s32 %s11, 1
        // Predicated region
        $region13: #{policynet2d_conv_forward.7} parent=11 // pred_check
          %p191 = pneg %p150
        $region14: #{policynet2d_conv_forward.7} parent=11 // pred_check_branch
          %193 = sbr.rel (%p191) target = $region16
        $region15: #{policynet2d_conv_forward.7} parent=11 // pred_region
          _
        $region16: #{policynet2d_conv_forward.7} parent=11 // pred_fallthru
          _
      $region12: #{policynet2d_conv_forward.7} parent=5 // pred_fallthru
        _
      %p194 = scmp.lt.s32.totalorder %s11, 10
      // Predicated region
      $region17: #{policynet2d_conv_forward.7} parent=5 // pred_check
        %p195 = pneg %p194
      $region18: #{policynet2d_conv_forward.7} parent=5 // pred_check_branch
        %197 = sbr.rel (%p195) target = $region20
      $region19: #{policynet2d_conv_forward.7} parent=5 // pred_region
        // Predicated region
        $region21: #{policynet2d_conv_forward.7} parent=19 // pred_check
          %p198 = pneg %p43
        $region22: #{policynet2d_conv_forward.7} parent=19 // pred_check_branch
          %200 = sbr.rel (%p198) target = $region24
        $region23: #{policynet2d_conv_forward.7} parent=19 // pred_region
          %s201 = smul.u32 5, %s19
          %p202 = scmp.lt.s32.totalorder %s201, 24
          %s203 = scalar_select %p202, %s201, 24
          %s204 = scalar_lea.vmem %s0, %s203
          %s205 = smul.u32 5, %s19
        $region24: #{policynet2d_conv_forward.7} parent=19 // pred_fallthru
          _
        // Predicated region
        $region25: #{policynet2d_conv_forward.7} parent=19 // pred_check
          %p206 = pneg %p71
        $region26: #{policynet2d_conv_forward.7} parent=19 // pred_check_branch
          %208 = sbr.rel (%p206) target = $region28
        $region27: #{policynet2d_conv_forward.7} parent=19 // pred_region
          %s209 = sand.u32 %s61, 1
          %s210 = sand.u32 %s61, 1
          %s211 = smul.addr %s210, 640
          %s212 = scalar_lea.vmem [#allocation3], %s211
          %s213 = smul.u32 80, %s19
          %s214 = smul.u32 2, %s18
          %s215 = smul.addr %s213, 4
          %s216 = sadd.s32 %s214, %s215
          %s217 = smul.addr %s216, 4
          %s218 = scalar_lea.vmem %s1, %s217
          // Predicated region
          $region29: #{policynet2d_conv_forward.7} parent=27 // pred_check
            _
          $region30: #{policynet2d_conv_forward.7} parent=27 // pred_check_branch
            %220 = sbr.rel (0) target = $region32
          $region31: #{policynet2d_conv_forward.7} parent=27 // pred_region
            // Predicated region
            $region33: #{policynet2d_conv_forward.7} parent=31 // pred_check
              _
            $region34: #{policynet2d_conv_forward.7} parent=31 // pred_check_branch
              %222 = sbr.rel (0) target = $region36
            $region35: #{policynet2d_conv_forward.7} parent=31 // pred_region
              // Predicated region
              $region48: #{policynet2d_conv_forward.7} parent=35 // pred_check
                _
              $region49: #{policynet2d_conv_forward.7} parent=35 // pred_check_branch
                %395 = sbr.rel (0) target = $region51
              $region50: #{policynet2d_conv_forward.7} parent=35 // pred_region
                loop: start=0, step=1, limit=1
                $region52: #{policynet2d_conv_forward.7} parent=50 // loop_pre_header
                  _
                $region53: #{policynet2d_conv_forward.7} parent=50 // loop_header
                  %s397 = sphi 0, %s401
                  %p398 = scmp.ge.s32.totalorder %s397, 1
                  %s402 = sphi %s218, %s218
                  %s403 = sphi %s212, %s212
                $region54: #{policynet2d_conv_forward.7} parent=50 // loop_header_branch
                  %400 = sbr.rel (%p398) target = $region58
                $region55: #{policynet2d_conv_forward.7} parent=50 // loop_body
                  %v404 = vld [vmem:[%s402] sm:$0xff]
                  %405 = vst [vmem:[%s403] sm:$0xff] %v404
                  %v406 = vld [vmem:[%s402 + $0x10] sm:$0xff]
                  %407 = vst [vmem:[%s403 + $0x8] sm:$0xff] %v406
                  %v408 = vld [vmem:[%s402 + $0x20] sm:$0xff]
                  %409 = vst [vmem:[%s403 + $0x10] sm:$0xff] %v408
                  %v410 = vld [vmem:[%s402 + $0x30] sm:$0xff]
                  %411 = vst [vmem:[%s403 + $0x18] sm:$0xff] %v410
                  %v412 = vld [vmem:[%s402 + $0x40] sm:$0xff]
                  %413 = vst [vmem:[%s403 + $0x20] sm:$0xff] %v412
                  %v414 = vld [vmem:[%s402 + $0x50] sm:$0xff]
                  %415 = vst [vmem:[%s403 + $0x28] sm:$0xff] %v414
                  %v416 = vld [vmem:[%s402 + $0x60] sm:$0xff]
                  %417 = vst [vmem:[%s403 + $0x30] sm:$0xff] %v416
                  %v418 = vld [vmem:[%s402 + $0x70] sm:$0xff]
                  %419 = vst [vmem:[%s403 + $0x38] sm:$0xff] %v418
                  %v420 = vld [vmem:[%s402 + $0x80] sm:$0xff]
                  %421 = vst [vmem:[%s403 + $0x40] sm:$0xff] %v420
                  %v422 = vld [vmem:[%s402 + $0x90] sm:$0xff]
                  %423 = vst [vmem:[%s403 + $0x48] sm:$0xff] %v422
                  %v424 = vld [vmem:[%s402 + $0xa0] sm:$0xff]
                  %425 = vst [vmem:[%s403 + $0x50] sm:$0xff] %v424
                  %v426 = vld [vmem:[%s402 + $0xb0] sm:$0xff]
                  %427 = vst [vmem:[%s403 + $0x58] sm:$0xff] %v426
                  %v428 = vld [vmem:[%s402 + $0xc0] sm:$0xff]
                  %429 = vst [vmem:[%s403 + $0x60] sm:$0xff] %v428
                  %v430 = vld [vmem:[%s402 + $0xd0] sm:$0xff]
                  %431 = vst [vmem:[%s403 + $0x68] sm:$0xff] %v430
                  %v432 = vld [vmem:[%s402 + $0xe0] sm:$0xff]
                  %433 = vst [vmem:[%s403 + $0x70] sm:$0xff] %v432
                  %v434 = vld [vmem:[%s402 + $0xf0] sm:$0xff]
                  %435 = vst [vmem:[%s403 + $0x78] sm:$0xff] %v434
                  %v436 = vld [vmem:[%s402 + $0x100] sm:$0xff]
                  %437 = vst [vmem:[%s403 + $0x80] sm:$0xff] %v436
                  %v438 = vld [vmem:[%s402 + $0x110] sm:$0xff]
                  %439 = vst [vmem:[%s403 + $0x88] sm:$0xff] %v438
                  %v440 = vld [vmem:[%s402 + $0x120] sm:$0xff]
                  %441 = vst [vmem:[%s403 + $0x90] sm:$0xff] %v440
                  %v442 = vld [vmem:[%s402 + $0x130] sm:$0xff]
                  %443 = vst [vmem:[%s403 + $0x98] sm:$0xff] %v442
                  %v444 = vld [vmem:[%s402 + $0x140] sm:$0xff]
                  %445 = vst [vmem:[%s403 + $0xa0] sm:$0xff] %v444
                  %v446 = vld [vmem:[%s402 + $0x150] sm:$0xff]
                  %447 = vst [vmem:[%s403 + $0xa8] sm:$0xff] %v446
                  %v448 = vld [vmem:[%s402 + $0x160] sm:$0xff]
                  %449 = vst [vmem:[%s403 + $0xb0] sm:$0xff] %v448
                  %v450 = vld [vmem:[%s402 + $0x170] sm:$0xff]
                  %451 = vst [vmem:[%s403 + $0xb8] sm:$0xff] %v450
                  %v452 = vld [vmem:[%s402 + $0x180] sm:$0xff]
                  %453 = vst [vmem:[%s403 + $0xc0] sm:$0xff] %v452
                  %v454 = vld [vmem:[%s402 + $0x190] sm:$0xff]
                  %455 = vst [vmem:[%s403 + $0xc8] sm:$0xff] %v454
                  %v456 = vld [vmem:[%s402 + $0x1a0] sm:$0xff]
                  %457 = vst [vmem:[%s403 + $0xd0] sm:$0xff] %v456
                  %v458 = vld [vmem:[%s402 + $0x1b0] sm:$0xff]
                  %459 = vst [vmem:[%s403 + $0xd8] sm:$0xff] %v458
                  %v460 = vld [vmem:[%s402 + $0x1c0] sm:$0xff]
                  %461 = vst [vmem:[%s403 + $0xe0] sm:$0xff] %v460
                  %v462 = vld [vmem:[%s402 + $0x1d0] sm:$0xff]
                  %463 = vst [vmem:[%s403 + $0xe8] sm:$0xff] %v462
                  %v464 = vld [vmem:[%s402 + $0x1e0] sm:$0xff]
                  %465 = vst [vmem:[%s403 + $0xf0] sm:$0xff] %v464
                  %v466 = vld [vmem:[%s402 + $0x1f0] sm:$0xff]
                  %467 = vst [vmem:[%s403 + $0xf8] sm:$0xff] %v466
                  %v468 = vld [vmem:[%s402 + $0x200] sm:$0xff]
                  %469 = vst [vmem:[%s403 + $0x100] sm:$0xff] %v468
                  %v470 = vld [vmem:[%s402 + $0x210] sm:$0xff]
                  %471 = vst [vmem:[%s403 + $0x108] sm:$0xff] %v470
                  %v472 = vld [vmem:[%s402 + $0x220] sm:$0xff]
                  %473 = vst [vmem:[%s403 + $0x110] sm:$0xff] %v472
                  %v474 = vld [vmem:[%s402 + $0x230] sm:$0xff]
                  %475 = vst [vmem:[%s403 + $0x118] sm:$0xff] %v474
                  %v476 = vld [vmem:[%s402 + $0x240] sm:$0xff]
                  %477 = vst [vmem:[%s403 + $0x120] sm:$0xff] %v476
                  %v478 = vld [vmem:[%s402 + $0x250] sm:$0xff]
                  %479 = vst [vmem:[%s403 + $0x128] sm:$0xff] %v478
                  %v480 = vld [vmem:[%s402 + $0x260] sm:$0xff]
                  %481 = vst [vmem:[%s403 + $0x130] sm:$0xff] %v480
                  %v482 = vld [vmem:[%s402 + $0x270] sm:$0xff]
                  %483 = vst [vmem:[%s403 + $0x138] sm:$0xff] %v482
                  %v484 = vld [vmem:[%s402 + $0x280] sm:$0xff]
                  %485 = vst [vmem:[%s403 + $0x140] sm:$0xff] %v484
                  %v486 = vld [vmem:[%s402 + $0x290] sm:$0xff]
                  %487 = vst [vmem:[%s403 + $0x148] sm:$0xff] %v486
                  %v488 = vld [vmem:[%s402 + $0x2a0] sm:$0xff]
                  %489 = vst [vmem:[%s403 + $0x150] sm:$0xff] %v488
                  %v490 = vld [vmem:[%s402 + $0x2b0] sm:$0xff]
                  %491 = vst [vmem:[%s403 + $0x158] sm:$0xff] %v490
                  %v492 = vld [vmem:[%s402 + $0x2c0] sm:$0xff]
                  %493 = vst [vmem:[%s403 + $0x160] sm:$0xff] %v492
                  %v494 = vld [vmem:[%s402 + $0x2d0] sm:$0xff]
                  %495 = vst [vmem:[%s403 + $0x168] sm:$0xff] %v494
                  %v496 = vld [vmem:[%s402 + $0x2e0] sm:$0xff]
                  %497 = vst [vmem:[%s403 + $0x170] sm:$0xff] %v496
                  %v498 = vld [vmem:[%s402 + $0x2f0] sm:$0xff]
                  %499 = vst [vmem:[%s403 + $0x178] sm:$0xff] %v498
                  %v500 = vld [vmem:[%s402 + $0x300] sm:$0xff]
                  %501 = vst [vmem:[%s403 + $0x180] sm:$0xff] %v500
                  %v502 = vld [vmem:[%s402 + $0x310] sm:$0xff]
                  %503 = vst [vmem:[%s403 + $0x188] sm:$0xff] %v502
                  %v504 = vld [vmem:[%s402 + $0x320] sm:$0xff]
                  %505 = vst [vmem:[%s403 + $0x190] sm:$0xff] %v504
                  %v506 = vld [vmem:[%s402 + $0x330] sm:$0xff]
                  %507 = vst [vmem:[%s403 + $0x198] sm:$0xff] %v506
                  %v508 = vld [vmem:[%s402 + $0x340] sm:$0xff]
                  %509 = vst [vmem:[%s403 + $0x1a0] sm:$0xff] %v508
                  %v510 = vld [vmem:[%s402 + $0x350] sm:$0xff]
                  %511 = vst [vmem:[%s403 + $0x1a8] sm:$0xff] %v510
                  %v512 = vld [vmem:[%s402 + $0x360] sm:$0xff]
                  %513 = vst [vmem:[%s403 + $0x1b0] sm:$0xff] %v512
                  %v514 = vld [vmem:[%s402 + $0x370] sm:$0xff]
                  %515 = vst [vmem:[%s403 + $0x1b8] sm:$0xff] %v514
                  %v516 = vld [vmem:[%s402 + $0x380] sm:$0xff]
                  %517 = vst [vmem:[%s403 + $0x1c0] sm:$0xff] %v516
                  %v518 = vld [vmem:[%s402 + $0x390] sm:$0xff]
                  %519 = vst [vmem:[%s403 + $0x1c8] sm:$0xff] %v518
                  %v520 = vld [vmem:[%s402 + $0x3a0] sm:$0xff]
                  %521 = vst [vmem:[%s403 + $0x1d0] sm:$0xff] %v520
                  %v522 = vld [vmem:[%s402 + $0x3b0] sm:$0xff]
                  %523 = vst [vmem:[%s403 + $0x1d8] sm:$0xff] %v522
                  %v524 = vld [vmem:[%s402 + $0x3c0] sm:$0xff]
                  %525 = vst [vmem:[%s403 + $0x1e0] sm:$0xff] %v524
                  %v526 = vld [vmem:[%s402 + $0x3d0] sm:$0xff]
                  %527 = vst [vmem:[%s403 + $0x1e8] sm:$0xff] %v526
                  %v528 = vld [vmem:[%s402 + $0x3e0] sm:$0xff]
                  %529 = vst [vmem:[%s403 + $0x1f0] sm:$0xff] %v528
                  %v530 = vld [vmem:[%s402 + $0x3f0] sm:$0xff]
                  %531 = vst [vmem:[%s403 + $0x1f8] sm:$0xff] %v530
                  %v532 = vld [vmem:[%s402 + $0x400] sm:$0xff]
                  %533 = vst [vmem:[%s403 + $0x200] sm:$0xff] %v532
                  %v534 = vld [vmem:[%s402 + $0x410] sm:$0xff]
                  %535 = vst [vmem:[%s403 + $0x208] sm:$0xff] %v534
                  %v536 = vld [vmem:[%s402 + $0x420] sm:$0xff]
                  %537 = vst [vmem:[%s403 + $0x210] sm:$0xff] %v536
                  %v538 = vld [vmem:[%s402 + $0x430] sm:$0xff]
                  %539 = vst [vmem:[%s403 + $0x218] sm:$0xff] %v538
                  %v540 = vld [vmem:[%s402 + $0x440] sm:$0xff]
                  %541 = vst [vmem:[%s403 + $0x220] sm:$0xff] %v540
                  %v542 = vld [vmem:[%s402 + $0x450] sm:$0xff]
                  %543 = vst [vmem:[%s403 + $0x228] sm:$0xff] %v542
                  %v544 = vld [vmem:[%s402 + $0x460] sm:$0xff]
                  %545 = vst [vmem:[%s403 + $0x230] sm:$0xff] %v544
                  %v546 = vld [vmem:[%s402 + $0x470] sm:$0xff]
                  %547 = vst [vmem:[%s403 + $0x238] sm:$0xff] %v546
                  %v548 = vld [vmem:[%s402 + $0x480] sm:$0xff]
                  %549 = vst [vmem:[%s403 + $0x240] sm:$0xff] %v548
                  %v550 = vld [vmem:[%s402 + $0x490] sm:$0xff]
                  %551 = vst [vmem:[%s403 + $0x248] sm:$0xff] %v550
                  %v552 = vld [vmem:[%s402 + $0x4a0] sm:$0xff]
                  %553 = vst [vmem:[%s403 + $0x250] sm:$0xff] %v552
                  %v554 = vld [vmem:[%s402 + $0x4b0] sm:$0xff]
                  %555 = vst [vmem:[%s403 + $0x258] sm:$0xff] %v554
                  %v556 = vld [vmem:[%s402 + $0x4c0] sm:$0xff]
                  %557 = vst [vmem:[%s403 + $0x260] sm:$0xff] %v556
                  %v558 = vld [vmem:[%s402 + $0x4d0] sm:$0xff]
                  %559 = vst [vmem:[%s403 + $0x268] sm:$0xff] %v558
                  %v560 = vld [vmem:[%s402 + $0x4e0] sm:$0xff]
                  %561 = vst [vmem:[%s403 + $0x270] sm:$0xff] %v560
                  %v562 = vld [vmem:[%s402 + $0x4f0] sm:$0xff]
                  %563 = vst [vmem:[%s403 + $0x278] sm:$0xff] %v562
                $region56: #{policynet2d_conv_forward.7} parent=50 // loop_footer
                  %s401 = sadd.s32 1, %s397
                $region57: #{policynet2d_conv_forward.7} parent=50 // loop_footer_branch
                  %396 = sbr.rel target = $region53
                $region58: #{policynet2d_conv_forward.7} parent=50 // loop_exit
                  _
              $region51: #{policynet2d_conv_forward.7} parent=35 // pred_fallthru
                _
              // Predicated region
              $region59: #{policynet2d_conv_forward.7} parent=35 // pred_check
                _
              $region60: #{policynet2d_conv_forward.7} parent=35 // pred_check_branch
                %565 = sbr.rel target = $region62
              $region61: #{policynet2d_conv_forward.7} parent=35 // pred_region
                _
              $region62: #{policynet2d_conv_forward.7} parent=35 // pred_fallthru
                _
            $region36: #{policynet2d_conv_forward.7} parent=31 // pred_fallthru
              _
            // Predicated region
            $region37: #{policynet2d_conv_forward.7} parent=31 // pred_check
              _
            $region38: #{policynet2d_conv_forward.7} parent=31 // pred_check_branch
              %224 = sbr.rel target = $region40
            $region39: #{policynet2d_conv_forward.7} parent=31 // pred_region
              loop: start=0, step=1, limit=1
              $region41: #{policynet2d_conv_forward.7} parent=39 // loop_pre_header
                _
              $region42: #{policynet2d_conv_forward.7} parent=39 // loop_header
                %s227 = sphi 0, %s231
                %p228 = scmp.ge.s32.totalorder %s227, 1
                %s232 = sphi %s218, %s218
                %s233 = sphi %s212, %s212
              $region43: #{policynet2d_conv_forward.7} parent=39 // loop_header_branch
                %230 = sbr.rel (%p228) target = $region47
              $region44: #{policynet2d_conv_forward.7} parent=39 // loop_body
                %v234 = vld [vmem:[%s232] sm:$0xff]
                %235 = vst [vmem:[%s233] sm:$0xff] %v234
                %v236 = vld [vmem:[%s232 + $0x10] sm:$0xff]
                %237 = vst [vmem:[%s233 + $0x8] sm:$0xff] %v236
                %v238 = vld [vmem:[%s232 + $0x20] sm:$0xff]
                %239 = vst [vmem:[%s233 + $0x10] sm:$0xff] %v238
                %v240 = vld [vmem:[%s232 + $0x30] sm:$0xff]
                %241 = vst [vmem:[%s233 + $0x18] sm:$0xff] %v240
                %v242 = vld [vmem:[%s232 + $0x40] sm:$0xff]
                %243 = vst [vmem:[%s233 + $0x20] sm:$0xff] %v242
                %v244 = vld [vmem:[%s232 + $0x50] sm:$0xff]
                %245 = vst [vmem:[%s233 + $0x28] sm:$0xff] %v244
                %v246 = vld [vmem:[%s232 + $0x60] sm:$0xff]
                %247 = vst [vmem:[%s233 + $0x30] sm:$0xff] %v246
                %v248 = vld [vmem:[%s232 + $0x70] sm:$0xff]
                %249 = vst [vmem:[%s233 + $0x38] sm:$0xff] %v248
                %v250 = vld [vmem:[%s232 + $0x80] sm:$0xff]
                %251 = vst [vmem:[%s233 + $0x40] sm:$0xff] %v250
                %v252 = vld [vmem:[%s232 + $0x90] sm:$0xff]
                %253 = vst [vmem:[%s233 + $0x48] sm:$0xff] %v252
                %v254 = vld [vmem:[%s232 + $0xa0] sm:$0xff]
                %255 = vst [vmem:[%s233 + $0x50] sm:$0xff] %v254
                %v256 = vld [vmem:[%s232 + $0xb0] sm:$0xff]
                %257 = vst [vmem:[%s233 + $0x58] sm:$0xff] %v256
                %v258 = vld [vmem:[%s232 + $0xc0] sm:$0xff]
                %259 = vst [vmem:[%s233 + $0x60] sm:$0xff] %v258
                %v260 = vld [vmem:[%s232 + $0xd0] sm:$0xff]
                %261 = vst [vmem:[%s233 + $0x68] sm:$0xff] %v260
                %v262 = vld [vmem:[%s232 + $0xe0] sm:$0xff]
                %263 = vst [vmem:[%s233 + $0x70] sm:$0xff] %v262
                %v264 = vld [vmem:[%s232 + $0xf0] sm:$0xff]
                %265 = vst [vmem:[%s233 + $0x78] sm:$0xff] %v264
                %v266 = vld [vmem:[%s232 + $0x100] sm:$0xff]
                %267 = vst [vmem:[%s233 + $0x80] sm:$0xff] %v266
                %v268 = vld [vmem:[%s232 + $0x110] sm:$0xff]
                %269 = vst [vmem:[%s233 + $0x88] sm:$0xff] %v268
                %v270 = vld [vmem:[%s232 + $0x120] sm:$0xff]
                %271 = vst [vmem:[%s233 + $0x90] sm:$0xff] %v270
                %v272 = vld [vmem:[%s232 + $0x130] sm:$0xff]
                %273 = vst [vmem:[%s233 + $0x98] sm:$0xff] %v272
                %v274 = vld [vmem:[%s232 + $0x140] sm:$0xff]
                %275 = vst [vmem:[%s233 + $0xa0] sm:$0xff] %v274
                %v276 = vld [vmem:[%s232 + $0x150] sm:$0xff]
                %277 = vst [vmem:[%s233 + $0xa8] sm:$0xff] %v276
                %v278 = vld [vmem:[%s232 + $0x160] sm:$0xff]
                %279 = vst [vmem:[%s233 + $0xb0] sm:$0xff] %v278
                %v280 = vld [vmem:[%s232 + $0x170] sm:$0xff]
                %281 = vst [vmem:[%s233 + $0xb8] sm:$0xff] %v280
                %v282 = vld [vmem:[%s232 + $0x180] sm:$0xff]
                %283 = vst [vmem:[%s233 + $0xc0] sm:$0xff] %v282
                %v284 = vld [vmem:[%s232 + $0x190] sm:$0xff]
                %285 = vst [vmem:[%s233 + $0xc8] sm:$0xff] %v284
                %v286 = vld [vmem:[%s232 + $0x1a0] sm:$0xff]
                %287 = vst [vmem:[%s233 + $0xd0] sm:$0xff] %v286
                %v288 = vld [vmem:[%s232 + $0x1b0] sm:$0xff]
                %289 = vst [vmem:[%s233 + $0xd8] sm:$0xff] %v288
                %v290 = vld [vmem:[%s232 + $0x1c0] sm:$0xff]
                %291 = vst [vmem:[%s233 + $0xe0] sm:$0xff] %v290
                %v292 = vld [vmem:[%s232 + $0x1d0] sm:$0xff]
                %293 = vst [vmem:[%s233 + $0xe8] sm:$0xff] %v292
                %v294 = vld [vmem:[%s232 + $0x1e0] sm:$0xff]
                %295 = vst [vmem:[%s233 + $0xf0] sm:$0xff] %v294
                %v296 = vld [vmem:[%s232 + $0x1f0] sm:$0xff]
                %297 = vst [vmem:[%s233 + $0xf8] sm:$0xff] %v296
                %v298 = vld [vmem:[%s232 + $0x200] sm:$0xff]
                %299 = vst [vmem:[%s233 + $0x100] sm:$0xff] %v298
                %v300 = vld [vmem:[%s232 + $0x210] sm:$0xff]
                %301 = vst [vmem:[%s233 + $0x108] sm:$0xff] %v300
                %v302 = vld [vmem:[%s232 + $0x220] sm:$0xff]
                %303 = vst [vmem:[%s233 + $0x110] sm:$0xff] %v302
                %v304 = vld [vmem:[%s232 + $0x230] sm:$0xff]
                %305 = vst [vmem:[%s233 + $0x118] sm:$0xff] %v304
                %v306 = vld [vmem:[%s232 + $0x240] sm:$0xff]
                %307 = vst [vmem:[%s233 + $0x120] sm:$0xff] %v306
                %v308 = vld [vmem:[%s232 + $0x250] sm:$0xff]
                %309 = vst [vmem:[%s233 + $0x128] sm:$0xff] %v308
                %v310 = vld [vmem:[%s232 + $0x260] sm:$0xff]
                %311 = vst [vmem:[%s233 + $0x130] sm:$0xff] %v310
                %v312 = vld [vmem:[%s232 + $0x270] sm:$0xff]
                %313 = vst [vmem:[%s233 + $0x138] sm:$0xff] %v312
                %v314 = vld [vmem:[%s232 + $0x280] sm:$0xff]
                %315 = vst [vmem:[%s233 + $0x140] sm:$0xff] %v314
                %v316 = vld [vmem:[%s232 + $0x290] sm:$0xff]
                %317 = vst [vmem:[%s233 + $0x148] sm:$0xff] %v316
                %v318 = vld [vmem:[%s232 + $0x2a0] sm:$0xff]
                %319 = vst [vmem:[%s233 + $0x150] sm:$0xff] %v318
                %v320 = vld [vmem:[%s232 + $0x2b0] sm:$0xff]
                %321 = vst [vmem:[%s233 + $0x158] sm:$0xff] %v320
                %v322 = vld [vmem:[%s232 + $0x2c0] sm:$0xff]
                %323 = vst [vmem:[%s233 + $0x160] sm:$0xff] %v322
                %v324 = vld [vmem:[%s232 + $0x2d0] sm:$0xff]
                %325 = vst [vmem:[%s233 + $0x168] sm:$0xff] %v324
                %v326 = vld [vmem:[%s232 + $0x2e0] sm:$0xff]
                %327 = vst [vmem:[%s233 + $0x170] sm:$0xff] %v326
                %v328 = vld [vmem:[%s232 + $0x2f0] sm:$0xff]
                %329 = vst [vmem:[%s233 + $0x178] sm:$0xff] %v328
                %v330 = vld [vmem:[%s232 + $0x300] sm:$0xff]
                %331 = vst [vmem:[%s233 + $0x180] sm:$0xff] %v330
                %v332 = vld [vmem:[%s232 + $0x310] sm:$0xff]
                %333 = vst [vmem:[%s233 + $0x188] sm:$0xff] %v332
                %v334 = vld [vmem:[%s232 + $0x320] sm:$0xff]
                %335 = vst [vmem:[%s233 + $0x190] sm:$0xff] %v334
                %v336 = vld [vmem:[%s232 + $0x330] sm:$0xff]
                %337 = vst [vmem:[%s233 + $0x198] sm:$0xff] %v336
                %v338 = vld [vmem:[%s232 + $0x340] sm:$0xff]
                %339 = vst [vmem:[%s233 + $0x1a0] sm:$0xff] %v338
                %v340 = vld [vmem:[%s232 + $0x350] sm:$0xff]
                %341 = vst [vmem:[%s233 + $0x1a8] sm:$0xff] %v340
                %v342 = vld [vmem:[%s232 + $0x360] sm:$0xff]
                %343 = vst [vmem:[%s233 + $0x1b0] sm:$0xff] %v342
                %v344 = vld [vmem:[%s232 + $0x370] sm:$0xff]
                %345 = vst [vmem:[%s233 + $0x1b8] sm:$0xff] %v344
                %v346 = vld [vmem:[%s232 + $0x380] sm:$0xff]
                %347 = vst [vmem:[%s233 + $0x1c0] sm:$0xff] %v346
                %v348 = vld [vmem:[%s232 + $0x390] sm:$0xff]
                %349 = vst [vmem:[%s233 + $0x1c8] sm:$0xff] %v348
                %v350 = vld [vmem:[%s232 + $0x3a0] sm:$0xff]
                %351 = vst [vmem:[%s233 + $0x1d0] sm:$0xff] %v350
                %v352 = vld [vmem:[%s232 + $0x3b0] sm:$0xff]
                %353 = vst [vmem:[%s233 + $0x1d8] sm:$0xff] %v352
                %v354 = vld [vmem:[%s232 + $0x3c0] sm:$0xff]
                %355 = vst [vmem:[%s233 + $0x1e0] sm:$0xff] %v354
                %v356 = vld [vmem:[%s232 + $0x3d0] sm:$0xff]
                %357 = vst [vmem:[%s233 + $0x1e8] sm:$0xff] %v356
                %v358 = vld [vmem:[%s232 + $0x3e0] sm:$0xff]
                %359 = vst [vmem:[%s233 + $0x1f0] sm:$0xff] %v358
                %v360 = vld [vmem:[%s232 + $0x3f0] sm:$0xff]
                %361 = vst [vmem:[%s233 + $0x1f8] sm:$0xff] %v360
                %v362 = vld [vmem:[%s232 + $0x400] sm:$0xff]
                %363 = vst [vmem:[%s233 + $0x200] sm:$0xff] %v362
                %v364 = vld [vmem:[%s232 + $0x410] sm:$0xff]
                %365 = vst [vmem:[%s233 + $0x208] sm:$0xff] %v364
                %v366 = vld [vmem:[%s232 + $0x420] sm:$0xff]
                %367 = vst [vmem:[%s233 + $0x210] sm:$0xff] %v366
                %v368 = vld [vmem:[%s232 + $0x430] sm:$0xff]
                %369 = vst [vmem:[%s233 + $0x218] sm:$0xff] %v368
                %v370 = vld [vmem:[%s232 + $0x440] sm:$0xff]
                %371 = vst [vmem:[%s233 + $0x220] sm:$0xff] %v370
                %v372 = vld [vmem:[%s232 + $0x450] sm:$0xff]
                %373 = vst [vmem:[%s233 + $0x228] sm:$0xff] %v372
                %v374 = vld [vmem:[%s232 + $0x460] sm:$0xff]
                %375 = vst [vmem:[%s233 + $0x230] sm:$0xff] %v374
                %v376 = vld [vmem:[%s232 + $0x470] sm:$0xff]
                %377 = vst [vmem:[%s233 + $0x238] sm:$0xff] %v376
                %v378 = vld [vmem:[%s232 + $0x480] sm:$0xff]
                %379 = vst [vmem:[%s233 + $0x240] sm:$0xff] %v378
                %v380 = vld [vmem:[%s232 + $0x490] sm:$0xff]
                %381 = vst [vmem:[%s233 + $0x248] sm:$0xff] %v380
                %v382 = vld [vmem:[%s232 + $0x4a0] sm:$0xff]
                %383 = vst [vmem:[%s233 + $0x250] sm:$0xff] %v382
                %v384 = vld [vmem:[%s232 + $0x4b0] sm:$0xff]
                %385 = vst [vmem:[%s233 + $0x258] sm:$0xff] %v384
                %v386 = vld [vmem:[%s232 + $0x4c0] sm:$0xff]
                %387 = vst [vmem:[%s233 + $0x260] sm:$0xff] %v386
                %v388 = vld [vmem:[%s232 + $0x4d0] sm:$0xff]
                %389 = vst [vmem:[%s233 + $0x268] sm:$0xff] %v388
                %v390 = vld [vmem:[%s232 + $0x4e0] sm:$0xff]
                %391 = vst [vmem:[%s233 + $0x270] sm:$0xff] %v390
                %v392 = vld [vmem:[%s232 + $0x4f0] sm:$0xff]
                %393 = vst [vmem:[%s233 + $0x278] sm:$0xff] %v392
              $region45: #{policynet2d_conv_forward.7} parent=39 // loop_footer
                %s231 = sadd.s32 1, %s227
              $region46: #{policynet2d_conv_forward.7} parent=39 // loop_footer_branch
                %226 = sbr.rel target = $region42
              $region47: #{policynet2d_conv_forward.7} parent=39 // loop_exit
                _
            $region40: #{policynet2d_conv_forward.7} parent=31 // pred_fallthru
              _
          $region32: #{policynet2d_conv_forward.7} parent=27 // pred_fallthru
            _
          %566 = vnop
        $region28: #{policynet2d_conv_forward.7} parent=19 // pred_fallthru
          _
        // Predicated region
        $region63: #{policynet2d_conv_forward.7} parent=19 // pred_check
          %p567 = pneg %p97
        $region64: #{policynet2d_conv_forward.7} parent=19 // pred_check_branch
          %569 = sbr.rel (%p567) target = $region66
        $region65: #{policynet2d_conv_forward.7} parent=19 // pred_region
          %s570 = smul.u32 2, %s18
          %p571 = scmp.lt.s32.totalorder %s570, 3
          %s572 = scalar_select %p571, %s570, 3
          %s573 = scalar_lea.vmem %s2, %s572
          %s574 = smul.u32 2, %s18
        $region66: #{policynet2d_conv_forward.7} parent=19 // pred_fallthru
          _
        // Predicated region
        $region67: #{policynet2d_conv_forward.7} parent=19 // pred_check
          %p575 = pneg %p123
        $region68: #{policynet2d_conv_forward.7} parent=19 // pred_check_branch
          %577 = sbr.rel (%p575) target = $region70
        $region69: #{policynet2d_conv_forward.7} parent=19 // pred_region
          %s578 = smul.u32 32, %s18
          %p579 = scmp.lt.s32.totalorder %s578, 63
          %s580 = scalar_select %p579, %s578, 63
          %s581 = smul.addr %s580, 4
          %s582 = scalar_lea.vmem %s3, %s581
          %s583 = smul.u32 32, %s18
        $region70: #{policynet2d_conv_forward.7} parent=19 // pred_fallthru
          _
      $region20: #{policynet2d_conv_forward.7} parent=5 // pred_fallthru
        _
      %p584 = scmp.le.s32.totalorder 1, %s11
      %p585 = scmp.lt.s32.totalorder %s11, 11
      %p586 = pnand %p584, %p585
      %p587 = pneg %p586
      // Predicated region
      $region71: #{policynet2d_conv_forward.7} parent=5 // pred_check
        _
      $region72: #{policynet2d_conv_forward.7} parent=5 // pred_check_branch
        %589 = sbr.rel (%p586) target = $region74
      $region73: #{policynet2d_conv_forward.7} parent=5 // pred_region
        %s590 = ssub.s32 %s11, 1
        %s591 = sand.u32 %s64, 1
        %s592 = sand.u32 %s64, 1
        %s593 = smul.addr %s592, 640
        %s594 = scalar_lea.vmem [#allocation3], %s593
        // Predicated region
        $region75: #{policynet2d_conv_forward.7} parent=73 // pred_check
          %p595 = pneg %p77
        $region76: #{policynet2d_conv_forward.7} parent=73 // pred_check_branch
          %597 = sbr.rel (%p595) target = $region78
        $region77: #{policynet2d_conv_forward.7} parent=73 // pred_region
          _
        $region78: #{policynet2d_conv_forward.7} parent=73 // pred_fallthru
          _
        %s598 = smul.u32 5, %s21
        %p599 = scmp.lt.s32.totalorder %s598, 24
        %s600 = scalar_select %p599, %s598, 24
        %s601 = scalar_lea.vmem %s0, %s600
        %p602 = pneg %p49
        %p603 = pneg %p46
        %s604 = sand.u32 %s64, 1
        %s605 = sand.u32 %s64, 1
        %s606 = smul.addr %s605, 640
        %s607 = scalar_lea.vmem [#allocation3], %s606
        %p608 = pneg %p77
        %p609 = pneg %p74
        %s610 = smul.u32 2, %s20
        %p611 = scmp.lt.s32.totalorder %s610, 3
        %s612 = scalar_select %p611, %s610, 3
        %s613 = scalar_lea.vmem %s2, %s612
        %p614 = pneg %p103
        %p615 = pneg %p100
        %s616 = smul.u32 32, %s20
        %p617 = scmp.lt.s32.totalorder %s616, 63
        %s618 = scalar_select %p617, %s616, 63
        %s619 = smul.addr %s618, 4
        %s620 = scalar_lea.vmem %s3, %s619
        %p621 = pneg %p129
        %p622 = pneg %p126
        %p623 = pneg %p150
        %p624 = pneg %p147
        %p625 = pneg %p176
        %p626 = pneg %p173
        %p627 = scmp.lt.s32.totalorder %s20, 1
        %s628 = scalar_select %p627, %s20, 1
        %s629 = smul.addr %s628, 2
        %s630 = scalar_lea.vmem %s5, %s629
        %s631 = smul.u32 5, %s21
        %p632 = scmp.lt.s32.totalorder %s631, 24
        %s633 = scalar_select %p632, %s631, 24
        %s634 = scalar_lea.vmem %s0, %s633
        %s635 = smul.u32 5, %s21
        %s636 = smul.u32 80, %s21
        %s637 = smul.u32 2, %s20
        %s638 = smul.u32 2, %s20
        %p639 = scmp.lt.s32.totalorder %s638, 3
        %s640 = scalar_select %p639, %s638, 3
        %s641 = scalar_lea.vmem %s2, %s640
        %s642 = smul.u32 2, %s20
        %s643 = smul.u32 32, %s20
        %p644 = scmp.lt.s32.totalorder %s643, 63
        %s645 = scalar_select %p644, %s643, 63
        %s646 = smul.addr %s645, 4
        %s647 = scalar_lea.vmem %s3, %s646
        %s648 = smul.u32 32, %s20
        %p649 = scmp.lt.s32.totalorder %s20, 1
        %s650 = scalar_select %p649, %s20, 1
        %s651 = smul.addr %s650, 2
        %s652 = scalar_lea.vmem %s5, %s651
        %p654 = scmp.eq.s32.totalorder %s21, 0
        // Predicated region
        $region79: #{policynet2d_conv_forward.7} parent=73 // pred_check
          %p655 = pneg %p654
        $region80: #{policynet2d_conv_forward.7} parent=73 // pred_check_branch
          %657 = sbr.rel (%p655) target = $region82
        $region81: #{policynet2d_conv_forward.7} parent=73 // pred_region
          %658 = vst [vmem:[#allocation2] sm:$0xf] 0.0
        $region82: #{policynet2d_conv_forward.7} parent=73 // pred_fallthru
          _
        %v659 = vld [vmem:[#allocation2] sm:$0xf]
        %v660 = vld [vmem:[%s634] sm:$0x1f]
        %v661 = vld [vmem:[%s594] sm:$0xff]
        %v662 = vld [vmem:[%s594 + $0x8] sm:$0xff]
        %v663 = vld [vmem:[%s594 + $0x10] sm:$0xff]
        %v664 = vld [vmem:[%s594 + $0x18] sm:$0xff]
        %v665 = vld [vmem:[%s594 + $0x20] sm:$0xff]
        %v666 = vld [vmem:[%s594 + $0x28] sm:$0xff]
        %v667 = vld [vmem:[%s594 + $0x30] sm:$0xff]
        %v668 = vld [vmem:[%s594 + $0x38] sm:$0xff]
        %v669 = vld [vmem:[%s594 + $0x40] sm:$0xff]
        %v670 = vld [vmem:[%s594 + $0x48] sm:$0xff]
        %v671 = vld [vmem:[%s594 + $0x50] sm:$0xff]
        %v672 = vld [vmem:[%s594 + $0x58] sm:$0xff]
        %v673 = vld [vmem:[%s594 + $0x60] sm:$0xff]
        %v674 = vld [vmem:[%s594 + $0x68] sm:$0xff]
        %v675 = vld [vmem:[%s594 + $0x70] sm:$0xff]
        %v676 = vld [vmem:[%s594 + $0x78] sm:$0xff]
        %v677 = vld [vmem:[%s594 + $0x80] sm:$0xff]
        %v678 = vld [vmem:[%s594 + $0x88] sm:$0xff]
        %v679 = vld [vmem:[%s594 + $0x90] sm:$0xff]
        %v680 = vld [vmem:[%s594 + $0x98] sm:$0xff]
        %v681 = vld [vmem:[%s594 + $0xa0] sm:$0xff]
        %v682 = vld [vmem:[%s594 + $0xa8] sm:$0xff]
        %v683 = vld [vmem:[%s594 + $0xb0] sm:$0xff]
        %v684 = vld [vmem:[%s594 + $0xb8] sm:$0xff]
        %v685 = vld [vmem:[%s594 + $0xc0] sm:$0xff]
        %v686 = vld [vmem:[%s594 + $0xc8] sm:$0xff]
        %v687 = vld [vmem:[%s594 + $0xd0] sm:$0xff]
        %v688 = vld [vmem:[%s594 + $0xd8] sm:$0xff]
        %v689 = vld [vmem:[%s594 + $0xe0] sm:$0xff]
        %v690 = vld [vmem:[%s594 + $0xe8] sm:$0xff]
        %v691 = vld [vmem:[%s594 + $0xf0] sm:$0xff]
        %v692 = vld [vmem:[%s594 + $0xf8] sm:$0xff]
        %v693 = vld [vmem:[%s594 + $0x100] sm:$0xff]
        %v694 = vld [vmem:[%s594 + $0x108] sm:$0xff]
        %v695 = vld [vmem:[%s594 + $0x110] sm:$0xff]
        %v696 = vld [vmem:[%s594 + $0x118] sm:$0xff]
        %v697 = vld [vmem:[%s594 + $0x120] sm:$0xff]
        %v698 = vld [vmem:[%s594 + $0x128] sm:$0xff]
        %v699 = vld [vmem:[%s594 + $0x130] sm:$0xff]
        %v700 = vld [vmem:[%s594 + $0x138] sm:$0xff]
        %v701 = vld [vmem:[%s594 + $0x140] sm:$0xff]
        %v702 = vld [vmem:[%s594 + $0x148] sm:$0xff]
        %v703 = vld [vmem:[%s594 + $0x150] sm:$0xff]
        %v704 = vld [vmem:[%s594 + $0x158] sm:$0xff]
        %v705 = vld [vmem:[%s594 + $0x160] sm:$0xff]
        %v706 = vld [vmem:[%s594 + $0x168] sm:$0xff]
        %v707 = vld [vmem:[%s594 + $0x170] sm:$0xff]
        %v708 = vld [vmem:[%s594 + $0x178] sm:$0xff]
        %v709 = vld [vmem:[%s594 + $0x180] sm:$0xff]
        %v710 = vld [vmem:[%s594 + $0x188] sm:$0xff]
        %v711 = vld [vmem:[%s594 + $0x190] sm:$0xff]
        %v712 = vld [vmem:[%s594 + $0x198] sm:$0xff]
        %v713 = vld [vmem:[%s594 + $0x1a0] sm:$0xff]
        %v714 = vld [vmem:[%s594 + $0x1a8] sm:$0xff]
        %v715 = vld [vmem:[%s594 + $0x1b0] sm:$0xff]
        %v716 = vld [vmem:[%s594 + $0x1b8] sm:$0xff]
        %v717 = vld [vmem:[%s594 + $0x1c0] sm:$0xff]
        %v718 = vld [vmem:[%s594 + $0x1c8] sm:$0xff]
        %v719 = vld [vmem:[%s594 + $0x1d0] sm:$0xff]
        %v720 = vld [vmem:[%s594 + $0x1d8] sm:$0xff]
        %v721 = vld [vmem:[%s594 + $0x1e0] sm:$0xff]
        %v722 = vld [vmem:[%s594 + $0x1e8] sm:$0xff]
        %v723 = vld [vmem:[%s594 + $0x1f0] sm:$0xff]
        %v724 = vld [vmem:[%s594 + $0x1f8] sm:$0xff]
        %v725 = vld [vmem:[%s594 + $0x200] sm:$0xff]
        %v726 = vld [vmem:[%s594 + $0x208] sm:$0xff]
        %v727 = vld [vmem:[%s594 + $0x210] sm:$0xff]
        %v728 = vld [vmem:[%s594 + $0x218] sm:$0xff]
        %v729 = vld [vmem:[%s594 + $0x220] sm:$0xff]
        %v730 = vld [vmem:[%s594 + $0x228] sm:$0xff]
        %v731 = vld [vmem:[%s594 + $0x230] sm:$0xff]
        %v732 = vld [vmem:[%s594 + $0x238] sm:$0xff]
        %v733 = vld [vmem:[%s594 + $0x240] sm:$0xff]
        %v734 = vld [vmem:[%s594 + $0x248] sm:$0xff]
        %v735 = vld [vmem:[%s594 + $0x250] sm:$0xff]
        %v736 = vld [vmem:[%s594 + $0x258] sm:$0xff]
        %v737 = vld [vmem:[%s594 + $0x260] sm:$0xff]
        %v738 = vld [vmem:[%s594 + $0x268] sm:$0xff]
        %v739 = vld [vmem:[%s594 + $0x270] sm:$0xff]
        %v740 = vld [vmem:[%s594 + $0x278] sm:$0xff]
        %v742 = vcombine.high %v660, %v660
        %v744 = vunpack.c.l.s4 1966171168
        %v745 = vunpack.c.0.s8 %v744
        %v746 = vlaneseq
        %v747 = vshrl.u32 %v746, 7
        %v748 = vsub.s32 %v745, %v747
        %v749 = vrot.slane %v660, %v748
        %v751 = vunpack.c.l.s4 1966171168
        %v752 = vunpack.c.0.s8 %v751
        %v753 = vlaneseq
        %v754 = vshrl.u32 %v753, 7
        %v755 = vsub.s32 %v752, %v754
        %v756 = vrot.slane %v742, %v755
        %v757 = vcombine.high %v749, %v749
        %v759 = vunpack.c.l.s4 1966171168
        %v760 = vunpack.c.0.s8 %v759
        %v761 = vlaneseq
        %v762 = vshrl.u32 %v761, 7
        %v763 = vsub.s32 %v760, %v762
        %v764 = vrot.slane %v749, %v763
        %v766 = vunpack.c.l.s4 1966171168
        %v767 = vunpack.c.0.s8 %v766
        %v768 = vlaneseq
        %v769 = vshrl.u32 %v768, 7
        %v770 = vsub.s32 %v767, %v769
        %v771 = vrot.slane %v756, %v770
        %v773 = vunpack.c.l.s4 1966171168
        %v774 = vunpack.c.0.s8 %v773
        %v775 = vlaneseq
        %v776 = vshrl.u32 %v775, 7
        %v777 = vsub.s32 %v774, %v776
        %v778 = vrot.slane %v757, %v777
        %v779 = vcombine.high %v764, %v764
        %v780 = vcombine.high %v778, %v778
        %v866 = vunpack.c.l.b16 %v661
        %v867 = vunpack.c.h.b16 %v661
        %v868 = vunpack.c.l.b16 %v662
        %v869 = vunpack.c.h.b16 %v662
        %v870 = vunpack.c.l.b16 %v663
        %v871 = vunpack.c.h.b16 %v663
        %v872 = vunpack.c.l.b16 %v664
        %v873 = vunpack.c.h.b16 %v664
        %v874 = vunpack.c.l.b16 %v665
        %v875 = vunpack.c.h.b16 %v665
        %v876 = vunpack.c.l.b16 %v666
        %v877 = vunpack.c.h.b16 %v666
        %v878 = vunpack.c.l.b16 %v667
        %v879 = vunpack.c.h.b16 %v667
        %v880 = vunpack.c.l.b16 %v668
        %v881 = vunpack.c.h.b16 %v668
        %v882 = vunpack.c.l.b16 %v669
        %v883 = vunpack.c.h.b16 %v669
        %v884 = vunpack.c.l.b16 %v670
        %v885 = vunpack.c.h.b16 %v670
        %v886 = vunpack.c.l.b16 %v671
        %v887 = vunpack.c.h.b16 %v671
        %v888 = vunpack.c.l.b16 %v672
        %v889 = vunpack.c.h.b16 %v672
        %v890 = vunpack.c.l.b16 %v673
        %v891 = vunpack.c.h.b16 %v673
        %v892 = vunpack.c.l.b16 %v674
        %v893 = vunpack.c.h.b16 %v674
        %v894 = vunpack.c.l.b16 %v675
        %v895 = vunpack.c.h.b16 %v675
        %v896 = vunpack.c.l.b16 %v676
        %v897 = vunpack.c.h.b16 %v676
        %v898 = vunpack.c.l.b16 %v677
        %v899 = vunpack.c.h.b16 %v677
        %v900 = vunpack.c.l.b16 %v678
        %v901 = vunpack.c.h.b16 %v678
        %v902 = vunpack.c.l.b16 %v679
        %v903 = vunpack.c.h.b16 %v679
        %v904 = vunpack.c.l.b16 %v680
        %v905 = vunpack.c.h.b16 %v680
        %v906 = vunpack.c.l.b16 %v681
        %v907 = vunpack.c.h.b16 %v681
        %v908 = vunpack.c.l.b16 %v682
        %v909 = vunpack.c.h.b16 %v682
        %v910 = vunpack.c.l.b16 %v683
        %v911 = vunpack.c.h.b16 %v683
        %v912 = vunpack.c.l.b16 %v684
        %v913 = vunpack.c.h.b16 %v684
        %v914 = vunpack.c.l.b16 %v685
        %v915 = vunpack.c.h.b16 %v685
        %v916 = vunpack.c.l.b16 %v686
        %v917 = vunpack.c.h.b16 %v686
        %v918 = vunpack.c.l.b16 %v687
        %v919 = vunpack.c.h.b16 %v687
        %v920 = vunpack.c.l.b16 %v688
        %v921 = vunpack.c.h.b16 %v688
        %v922 = vunpack.c.l.b16 %v689
        %v923 = vunpack.c.h.b16 %v689
        %v924 = vunpack.c.l.b16 %v690
        %v925 = vunpack.c.h.b16 %v690
        %v926 = vunpack.c.l.b16 %v691
        %v927 = vunpack.c.h.b16 %v691
        %v928 = vunpack.c.l.b16 %v692
        %v929 = vunpack.c.h.b16 %v692
        %v930 = vunpack.c.l.b16 %v693
        %v931 = vunpack.c.h.b16 %v693
        %v932 = vunpack.c.l.b16 %v694
        %v933 = vunpack.c.h.b16 %v694
        %v934 = vunpack.c.l.b16 %v695
        %v935 = vunpack.c.h.b16 %v695
        %v936 = vunpack.c.l.b16 %v696
        %v937 = vunpack.c.h.b16 %v696
        %v938 = vunpack.c.l.b16 %v697
        %v939 = vunpack.c.h.b16 %v697
        %v940 = vunpack.c.l.b16 %v698
        %v941 = vunpack.c.h.b16 %v698
        %v942 = vunpack.c.l.b16 %v699
        %v943 = vunpack.c.h.b16 %v699
        %v944 = vunpack.c.l.b16 %v700
        %v945 = vunpack.c.h.b16 %v700
        %v946 = vunpack.c.l.b16 %v701
        %v947 = vunpack.c.h.b16 %v701
        %v948 = vunpack.c.l.b16 %v702
        %v949 = vunpack.c.h.b16 %v702
        %v950 = vunpack.c.l.b16 %v703
        %v951 = vunpack.c.h.b16 %v703
        %v952 = vunpack.c.l.b16 %v704
        %v953 = vunpack.c.h.b16 %v704
        %v954 = vunpack.c.l.b16 %v705
        %v955 = vunpack.c.h.b16 %v705
        %v956 = vunpack.c.l.b16 %v706
        %v957 = vunpack.c.h.b16 %v706
        %v958 = vunpack.c.l.b16 %v707
        %v959 = vunpack.c.h.b16 %v707
        %v960 = vunpack.c.l.b16 %v708
        %v961 = vunpack.c.h.b16 %v708
        %v962 = vunpack.c.l.b16 %v709
        %v963 = vunpack.c.h.b16 %v709
        %v964 = vunpack.c.l.b16 %v710
        %v965 = vunpack.c.h.b16 %v710
        %v966 = vunpack.c.l.b16 %v711
        %v967 = vunpack.c.h.b16 %v711
        %v968 = vunpack.c.l.b16 %v712
        %v969 = vunpack.c.h.b16 %v712
        %v970 = vunpack.c.l.b16 %v713
        %v971 = vunpack.c.h.b16 %v713
        %v972 = vunpack.c.l.b16 %v714
        %v973 = vunpack.c.h.b16 %v714
        %v974 = vunpack.c.l.b16 %v715
        %v975 = vunpack.c.h.b16 %v715
        %v976 = vunpack.c.l.b16 %v716
        %v977 = vunpack.c.h.b16 %v716
        %v978 = vunpack.c.l.b16 %v717
        %v979 = vunpack.c.h.b16 %v717
        %v980 = vunpack.c.l.b16 %v718
        %v981 = vunpack.c.h.b16 %v718
        %v982 = vunpack.c.l.b16 %v719
        %v983 = vunpack.c.h.b16 %v719
        %v984 = vunpack.c.l.b16 %v720
        %v985 = vunpack.c.h.b16 %v720
        %v986 = vunpack.c.l.b16 %v721
        %v987 = vunpack.c.h.b16 %v721
        %v988 = vunpack.c.l.b16 %v722
        %v989 = vunpack.c.h.b16 %v722
        %v990 = vunpack.c.l.b16 %v723
        %v991 = vunpack.c.h.b16 %v723
        %v992 = vunpack.c.l.b16 %v724
        %v993 = vunpack.c.h.b16 %v724
        %v994 = vunpack.c.l.b16 %v725
        %v995 = vunpack.c.h.b16 %v725
        %v996 = vunpack.c.l.b16 %v726
        %v997 = vunpack.c.h.b16 %v726
        %v998 = vunpack.c.l.b16 %v727
        %v999 = vunpack.c.h.b16 %v727
        %v1000 = vunpack.c.l.b16 %v728
        %v1001 = vunpack.c.h.b16 %v728
        %v1002 = vunpack.c.l.b16 %v729
        %v1003 = vunpack.c.h.b16 %v729
        %v1004 = vunpack.c.l.b16 %v730
        %v1005 = vunpack.c.h.b16 %v730
        %v1006 = vunpack.c.l.b16 %v731
        %v1007 = vunpack.c.h.b16 %v731
        %v1008 = vunpack.c.l.b16 %v732
        %v1009 = vunpack.c.h.b16 %v732
        %v1010 = vunpack.c.l.b16 %v733
        %v1011 = vunpack.c.h.b16 %v733
        %v1012 = vunpack.c.l.b16 %v734
        %v1013 = vunpack.c.h.b16 %v734
        %v1014 = vunpack.c.l.b16 %v735
        %v1015 = vunpack.c.h.b16 %v735
        %v1016 = vunpack.c.l.b16 %v736
        %v1017 = vunpack.c.h.b16 %v736
        %v1018 = vunpack.c.l.b16 %v737
        %v1019 = vunpack.c.h.b16 %v737
        %v1020 = vunpack.c.l.b16 %v738
        %v1021 = vunpack.c.h.b16 %v738
        %v1022 = vunpack.c.l.b16 %v739
        %v1023 = vunpack.c.h.b16 %v739
        %v1024 = vunpack.c.l.b16 %v740
        %v1025 = vunpack.c.h.b16 %v740
        %v1026 = vpack.c.b16 %v868, %v866
        %v1027 = vpack.c.b16 %v869, %v867
        %v1028 = vpack.c.b16 %v872, %v870
        %v1029 = vpack.c.b16 %v873, %v871
        %v1030 = vpack.c.b16 %v876, %v874
        %v1031 = vpack.c.b16 %v877, %v875
        %v1032 = vpack.c.b16 %v880, %v878
        %v1033 = vpack.c.b16 %v881, %v879
        %v1034 = vpack.c.b16 %v884, %v882
        %v1035 = vpack.c.b16 %v885, %v883
        %v1036 = vpack.c.b16 %v888, %v886
        %v1037 = vpack.c.b16 %v889, %v887
        %v1038 = vpack.c.b16 %v892, %v890
        %v1039 = vpack.c.b16 %v893, %v891
        %v1040 = vpack.c.b16 %v896, %v894
        %v1041 = vpack.c.b16 %v897, %v895
        %v1042 = vpack.c.b16 %v900, %v898
        %v1043 = vpack.c.b16 %v901, %v899
        %v1044 = vpack.c.b16 %v904, %v902
        %v1045 = vpack.c.b16 %v905, %v903
        %v1046 = vpack.c.b16 %v908, %v906
        %v1047 = vpack.c.b16 %v909, %v907
        %v1048 = vpack.c.b16 %v912, %v910
        %v1049 = vpack.c.b16 %v913, %v911
        %v1050 = vpack.c.b16 %v916, %v914
        %v1051 = vpack.c.b16 %v917, %v915
        %v1052 = vpack.c.b16 %v920, %v918
        %v1053 = vpack.c.b16 %v921, %v919
        %v1054 = vpack.c.b16 %v924, %v922
        %v1055 = vpack.c.b16 %v925, %v923
        %v1056 = vpack.c.b16 %v928, %v926
        %v1057 = vpack.c.b16 %v929, %v927
        %v1058 = vpack.c.b16 %v932, %v930
        %v1059 = vpack.c.b16 %v933, %v931
        %v1060 = vpack.c.b16 %v936, %v934
        %v1061 = vpack.c.b16 %v937, %v935
        %v1062 = vpack.c.b16 %v940, %v938
        %v1063 = vpack.c.b16 %v941, %v939
        %v1064 = vpack.c.b16 %v944, %v942
        %v1065 = vpack.c.b16 %v945, %v943
        %v1066 = vpack.c.b16 %v948, %v946
        %v1067 = vpack.c.b16 %v949, %v947
        %v1068 = vpack.c.b16 %v952, %v950
        %v1069 = vpack.c.b16 %v953, %v951
        %v1070 = vpack.c.b16 %v956, %v954
        %v1071 = vpack.c.b16 %v957, %v955
        %v1072 = vpack.c.b16 %v960, %v958
        %v1073 = vpack.c.b16 %v961, %v959
        %v1074 = vpack.c.b16 %v964, %v962
        %v1075 = vpack.c.b16 %v965, %v963
        %v1076 = vpack.c.b16 %v968, %v966
        %v1077 = vpack.c.b16 %v969, %v967
        %v1078 = vpack.c.b16 %v972, %v970
        %v1079 = vpack.c.b16 %v973, %v971
        %v1080 = vpack.c.b16 %v976, %v974
        %v1081 = vpack.c.b16 %v977, %v975
        %v1082 = vpack.c.b16 %v980, %v978
        %v1083 = vpack.c.b16 %v981, %v979
        %v1084 = vpack.c.b16 %v984, %v982
        %v1085 = vpack.c.b16 %v985, %v983
        %v1086 = vpack.c.b16 %v988, %v986
        %v1087 = vpack.c.b16 %v989, %v987
        %v1088 = vpack.c.b16 %v992, %v990
        %v1089 = vpack.c.b16 %v993, %v991
        %v1090 = vpack.c.b16 %v996, %v994
        %v1091 = vpack.c.b16 %v997, %v995
        %v1092 = vpack.c.b16 %v1000, %v998
        %v1093 = vpack.c.b16 %v1001, %v999
        %v1094 = vpack.c.b16 %v1004, %v1002
        %v1095 = vpack.c.b16 %v1005, %v1003
        %v1096 = vpack.c.b16 %v1008, %v1006
        %v1097 = vpack.c.b16 %v1009, %v1007
        %v1098 = vpack.c.b16 %v1012, %v1010
        %v1099 = vpack.c.b16 %v1013, %v1011
        %v1100 = vpack.c.b16 %v1016, %v1014
        %v1101 = vpack.c.b16 %v1017, %v1015
        %v1102 = vpack.c.b16 %v1020, %v1018
        %v1103 = vpack.c.b16 %v1021, %v1019
        %v1104 = vpack.c.b16 %v1024, %v1022
        %v1105 = vpack.c.b16 %v1025, %v1023
        %1186 = vmatprep.subr.bf16.mxu0 %v1027
        %1187 = vmatpush1.bf16.msra.mxu0 %v1026
        %1188 = vmatprep.subr.bf16.mxu0 %v1029
        %1189 = vmatpush1.bf16.msra.mxu0 %v1028
        %1190 = vmatprep.subr.bf16.mxu0 %v1031
        %1191 = vmatpush1.bf16.msra.mxu0 %v1030
        %1192 = vmatprep.subr.bf16.mxu0 %v1033
        %1193 = vmatpush1.bf16.msra.mxu0 %v1032
        %1194 = vmatprep.subr.bf16.mxu0 %v1035
        %1195 = vmatpush1.bf16.msra.mxu0 %v1034
        %1196 = vmatprep.subr.bf16.mxu0 %v1037
        %1197 = vmatpush1.bf16.msra.mxu0 %v1036
        %1198 = vmatprep.subr.bf16.mxu0 %v1039
        %1199 = vmatpush1.bf16.msra.mxu0 %v1038
        %1200 = vmatprep.subr.bf16.mxu0 %v1041
        %1201 = vmatpush1.bf16.msra.mxu0 %v1040
        %1202 = vmatprep.subr.bf16.mxu0 %v1043
        %1203 = vmatpush1.bf16.msra.mxu0 %v1042
        %1204 = vmatprep.subr.bf16.mxu0 %v1045
        %1205 = vmatpush1.bf16.msra.mxu0 %v1044
        %1206 = vmatprep.subr.bf16.mxu0 %v1047
        %1207 = vmatpush1.bf16.msra.mxu0 %v1046
        %1208 = vmatprep.subr.bf16.mxu0 %v1049
        %1209 = vmatpush1.bf16.msra.mxu0 %v1048
        %1210 = vmatprep.subr.bf16.mxu0 %v1051
        %1211 = vmatpush1.bf16.msra.mxu0 %v1050
        %1212 = vmatprep.subr.bf16.mxu0 %v1053
        %1213 = vmatpush1.bf16.msra.mxu0 %v1052
        %1214 = vmatprep.subr.bf16.mxu0 %v1055
        %1215 = vmatpush1.bf16.msra.mxu0 %v1054
        %1216 = vmatprep.subr.bf16.mxu0 %v1057
        %1217 = vmatpush1.bf16.msra.mxu0 %v1056
        %1218 = vmatprep.mubr.bf16.mxu0 %v778
        %1219 = vmatmul.mubr.bf16.gmra.mrb[0].mxu0 %v764
        %v1220 = vpop.f32.mrb[0].mxu0
        %v1221 = vadd.f32 0.0, %v1220
        %v1222 = vpop.f32.mrb[0].mxu0
        %v1223 = vadd.f32 0.0, %v1222
        %v1224 = vpop.f32.mrb[0].mxu0
        %v1225 = vpop.f32.mrb[0].mxu0
        %1226 = vdwg.mxu0
        %1227 = vmatprep.subr.bf16.mxu0 %v1059
        %1228 = vmatpush1.bf16.msra.mxu0 %v1058
        %1229 = vmatprep.subr.bf16.mxu0 %v1061
        %1230 = vmatpush1.bf16.msra.mxu0 %v1060
        %1231 = vmatprep.subr.bf16.mxu0 %v1063
        %1232 = vmatpush1.bf16.msra.mxu0 %v1062
        %1233 = vmatprep.subr.bf16.mxu0 %v1065
        %1234 = vmatpush1.bf16.msra.mxu0 %v1064
        %1235 = vmatprep.subr.bf16.mxu0 %v1067
        %1236 = vmatpush1.bf16.msra.mxu0 %v1066
        %1237 = vmatprep.subr.bf16.mxu0 %v1069
        %1238 = vmatpush1.bf16.msra.mxu0 %v1068
        %1239 = vmatprep.subr.bf16.mxu0 %v1071
        %1240 = vmatpush1.bf16.msra.mxu0 %v1070
        %1241 = vmatprep.subr.bf16.mxu0 %v1073
        %1242 = vmatpush1.bf16.msra.mxu0 %v1072
        %1243 = vmatprep.subr.bf16.mxu0 %v1075
        %1244 = vmatpush1.bf16.msra.mxu0 %v1074
        %1245 = vmatprep.subr.bf16.mxu0 %v1077
        %1246 = vmatpush1.bf16.msra.mxu0 %v1076
        %1247 = vmatprep.subr.bf16.mxu0 %v1079
        %1248 = vmatpush1.bf16.msra.mxu0 %v1078
        %1249 = vmatprep.subr.bf16.mxu0 %v1081
        %1250 = vmatpush1.bf16.msra.mxu0 %v1080
        %1251 = vmatprep.subr.bf16.mxu0 %v1083
        %1252 = vmatpush1.bf16.msra.mxu0 %v1082
        %1253 = vmatprep.subr.bf16.mxu0 %v1085
        %1254 = vmatpush1.bf16.msra.mxu0 %v1084
        %1255 = vmatprep.subr.bf16.mxu0 %v1087
        %1256 = vmatpush1.bf16.msra.mxu0 %v1086
        %1257 = vmatprep.subr.bf16.mxu0 %v1089
        %1258 = vmatpush1.bf16.msra.mxu0 %v1088
        %1259 = vmatprep.mubr.bf16.mxu0 %v780
        %1260 = vmatmul.mubr.bf16.gmra.mrb[0].mxu0 %v779
        %v1261 = vpop.f32.mrb[0].mxu0
        %v1262 = vadd.f32 %v1221, %v1261
        %v1263 = vpop.f32.mrb[0].mxu0
        %v1264 = vadd.f32 %v1223, %v1263
        %v1265 = vpop.f32.mrb[0].mxu0
        %v1266 = vpop.f32.mrb[0].mxu0
        %1267 = vdwg.mxu0
        %1268 = vmatprep.subr.bf16.mxu0 %v1091
        %1269 = vmatpush1.bf16.msra.mxu0 %v1090
        %1270 = vmatprep.subr.bf16.mxu0 %v1093
        %1271 = vmatpush1.bf16.msra.mxu0 %v1092
        %1272 = vmatprep.subr.bf16.mxu0 %v1095
        %1273 = vmatpush1.bf16.msra.mxu0 %v1094
        %1274 = vmatprep.subr.bf16.mxu0 %v1097
        %1275 = vmatpush1.bf16.msra.mxu0 %v1096
        %1276 = vmatprep.subr.bf16.mxu0 %v1099
        %1277 = vmatpush1.bf16.msra.mxu0 %v1098
        %1278 = vmatprep.subr.bf16.mxu0 %v1101
        %1279 = vmatpush1.bf16.msra.mxu0 %v1100
        %1280 = vmatprep.subr.bf16.mxu0 %v1103
        %1281 = vmatpush1.bf16.msra.mxu0 %v1102
        %1282 = vmatprep.subr.bf16.mxu0 %v1105
        %1283 = vmatpush1.bf16.msra.mxu0 %v1104
        %1284 = vmatprep.subr.bf16.mxu0 0
        %1285 = vmatpush1.bf16.msra.mxu0 0
        %1286 = vmatprep.subr.bf16.mxu0 0
        %1287 = vmatpush1.bf16.msra.mxu0 0
        %1288 = vmatprep.subr.bf16.mxu0 0
        %1289 = vmatpush1.bf16.msra.mxu0 0
        %1290 = vmatprep.subr.bf16.mxu0 0
        %1291 = vmatpush1.bf16.msra.mxu0 0
        %1292 = vmatprep.subr.bf16.mxu0 0
        %1293 = vmatpush1.bf16.msra.mxu0 0
        %1294 = vmatprep.subr.bf16.mxu0 0
        %1295 = vmatpush1.bf16.msra.mxu0 0
        %1296 = vmatprep.subr.bf16.mxu0 0
        %1297 = vmatpush1.bf16.msra.mxu0 0
        %1298 = vmatprep.subr.bf16.mxu0 0
        %1299 = vmatpush1.bf16.msra.mxu0 0
        %1300 = vmatprep.mubr.bf16.mxu0 0
        %1301 = vmatmul.mubr.bf16.gmra.mrb[0].mxu0 %v771
        %v1302 = vpop.f32.mrb[0].mxu0
        %v1303 = vadd.f32 %v1262, %v1302
        %v1304 = vpop.f32.mrb[0].mxu0
        %v1305 = vadd.f32 %v1264, %v1304
        %v1306 = vpop.f32.mrb[0].mxu0
        %v1307 = vpop.f32.mrb[0].mxu0
        %1308 = vdwg.mxu0
        %v1311 = vcombine.low %v1303, %v1305
        %v1313 = vunpack.c.l.s4 1983009808
        %v1314 = vunpack.c.0.s8 %v1313
        %v1315 = vlaneseq
        %v1316 = vshrl.u32 %v1315, 7
        %v1317 = vsub.s32 %v1314, %v1316
        %v1318 = vrot.slane %v1311, %v1317
        %v1320 = vadd.f32 %v659, %v1318
        %1321 = vst [vmem:[#allocation2] sm:$0xf] %v1320
        %p1322 = scmp.eq.s32.totalorder %s21, 4
        // Predicated region
        $region83: #{policynet2d_conv_forward.7} parent=73 // pred_check
          %p1323 = pneg %p1322
        $region84: #{policynet2d_conv_forward.7} parent=73 // pred_check_branch
          %1325 = sbr.rel (%p1323) target = $region86
        $region85: #{policynet2d_conv_forward.7} parent=73 // pred_region
          %v1326 = vld [vmem:[#allocation2] sm:$0xf]
          %v1327 = vld [vmem:[%s641] sm:$0x3]
          %v1329 = vlaneseq
          %v1330 = vshrl.u32 %v1329, 7
          %v1331 = vsub.s32 0, %v1330
          %v1332 = vrot.slane %v1327, %v1331
          %v1333 = vlaneseq
          %v1334 = vshrl.u32 %v1333, 7
          %v1335 = vsub.s32 1, %v1334
          %v1336 = vrot.slane %v1327, %v1335
          %v1337 = vcombine.low %v1332, %v1336
          %v1339 = vunpack.c.l.s4 1983009808
          %v1340 = vunpack.c.0.s8 %v1339
          %v1341 = vlaneseq
          %v1342 = vshrl.u32 %v1341, 7
          %v1343 = vsub.s32 %v1340, %v1342
          %v1344 = vrot.slane %v1337, %v1343
          %v1346 = vadd.f32 %v1326, %v1344
          %v1347 = vmax.f32 %v1346, 0.0
          %v1350 = vunpack.c.l.s4 1983009808
          %v1351 = vunpack.c.0.s8 %v1350
          %v1352 = vlaneseq
          %v1353 = vshrl.u32 %v1352, 7
          %v1354 = vsub.s32 %v1351, %v1353
          %v1355 = vrot.slane %v1347, %v1354
          %v1356 = vcombine.high %v1355, %v1355
          %v1359 = vpack.c.bf16 %v1355, %v1355
          %v1360 = vpack.c.bf16 %v1356, %v1356
          %v1361 = vld [vmem:[%s647] sm:$0xf]
          %v1362 = vld [vmem:[%s647 + $0x4] sm:$0xf]
          %v1363 = vld [vmem:[%s647 + $0x8] sm:$0xf]
          %v1364 = vld [vmem:[%s647 + $0xc] sm:$0xf]
          %v1365 = vld [vmem:[%s647 + $0x10] sm:$0xf]
          %v1366 = vld [vmem:[%s647 + $0x14] sm:$0xf]
          %v1367 = vld [vmem:[%s647 + $0x18] sm:$0xf]
          %v1368 = vld [vmem:[%s647 + $0x1c] sm:$0xf]
          %v1369 = vld [vmem:[%s647 + $0x20] sm:$0xf]
          %v1370 = vld [vmem:[%s647 + $0x24] sm:$0xf]
          %v1371 = vld [vmem:[%s647 + $0x28] sm:$0xf]
          %v1372 = vld [vmem:[%s647 + $0x2c] sm:$0xf]
          %v1373 = vld [vmem:[%s647 + $0x30] sm:$0xf]
          %v1374 = vld [vmem:[%s647 + $0x34] sm:$0xf]
          %v1375 = vld [vmem:[%s647 + $0x38] sm:$0xf]
          %v1376 = vld [vmem:[%s647 + $0x3c] sm:$0xf]
          %v1377 = vld [vmem:[%s647 + $0x40] sm:$0xf]
          %v1378 = vld [vmem:[%s647 + $0x44] sm:$0xf]
          %v1379 = vld [vmem:[%s647 + $0x48] sm:$0xf]
          %v1380 = vld [vmem:[%s647 + $0x4c] sm:$0xf]
          %v1381 = vld [vmem:[%s647 + $0x50] sm:$0xf]
          %v1382 = vld [vmem:[%s647 + $0x54] sm:$0xf]
          %v1383 = vld [vmem:[%s647 + $0x58] sm:$0xf]
          %v1384 = vld [vmem:[%s647 + $0x5c] sm:$0xf]
          %v1385 = vld [vmem:[%s647 + $0x60] sm:$0xf]
          %v1386 = vld [vmem:[%s647 + $0x64] sm:$0xf]
          %v1387 = vld [vmem:[%s647 + $0x68] sm:$0xf]
          %v1388 = vld [vmem:[%s647 + $0x6c] sm:$0xf]
          %v1389 = vld [vmem:[%s647 + $0x70] sm:$0xf]
          %v1390 = vld [vmem:[%s647 + $0x74] sm:$0xf]
          %v1391 = vld [vmem:[%s647 + $0x78] sm:$0xf]
          %v1392 = vld [vmem:[%s647 + $0x7c] sm:$0xf]
          %v1393 = vld [vmem:[%s4] sm:$0x1]
          %v1395 = vlaneseq
          %v1396 = vshrl.u32 %v1395, 7
          %v1397 = vsub.s32 0, %v1396
          %v1398 = vrot.slane %v1393, %v1397
          %v1432 = vunpack.c.l.b16 %v1361
          %v1433 = vunpack.c.l.b16 %v1362
          %v1434 = vunpack.c.l.b16 %v1363
          %v1435 = vunpack.c.l.b16 %v1364
          %v1436 = vunpack.c.l.b16 %v1365
          %v1437 = vunpack.c.l.b16 %v1366
          %v1438 = vunpack.c.l.b16 %v1367
          %v1439 = vunpack.c.l.b16 %v1368
          %v1440 = vunpack.c.l.b16 %v1369
          %v1441 = vunpack.c.l.b16 %v1370
          %v1442 = vunpack.c.l.b16 %v1371
          %v1443 = vunpack.c.l.b16 %v1372
          %v1444 = vunpack.c.l.b16 %v1373
          %v1445 = vunpack.c.l.b16 %v1374
          %v1446 = vunpack.c.l.b16 %v1375
          %v1447 = vunpack.c.l.b16 %v1376
          %v1448 = vunpack.c.l.b16 %v1377
          %v1449 = vunpack.c.l.b16 %v1378
          %v1450 = vunpack.c.l.b16 %v1379
          %v1451 = vunpack.c.l.b16 %v1380
          %v1452 = vunpack.c.l.b16 %v1381
          %v1453 = vunpack.c.l.b16 %v1382
          %v1454 = vunpack.c.l.b16 %v1383
          %v1455 = vunpack.c.l.b16 %v1384
          %v1456 = vunpack.c.l.b16 %v1385
          %v1457 = vunpack.c.l.b16 %v1386
          %v1458 = vunpack.c.l.b16 %v1387
          %v1459 = vunpack.c.l.b16 %v1388
          %v1460 = vunpack.c.l.b16 %v1389
          %v1461 = vunpack.c.l.b16 %v1390
          %v1462 = vunpack.c.l.b16 %v1391
          %v1463 = vunpack.c.l.b16 %v1392
          %v1464 = vpack.c.b16 %v1433, %v1432
          %v1465 = vpack.c.b16 %v1435, %v1434
          %v1466 = vpack.c.b16 %v1437, %v1436
          %v1467 = vpack.c.b16 %v1439, %v1438
          %v1468 = vpack.c.b16 %v1441, %v1440
          %v1469 = vpack.c.b16 %v1443, %v1442
          %v1470 = vpack.c.b16 %v1445, %v1444
          %v1471 = vpack.c.b16 %v1447, %v1446
          %v1472 = vpack.c.b16 %v1449, %v1448
          %v1473 = vpack.c.b16 %v1451, %v1450
          %v1474 = vpack.c.b16 %v1453, %v1452
          %v1475 = vpack.c.b16 %v1455, %v1454
          %v1476 = vpack.c.b16 %v1457, %v1456
          %v1477 = vpack.c.b16 %v1459, %v1458
          %v1478 = vpack.c.b16 %v1461, %v1460
          %v1479 = vpack.c.b16 %v1463, %v1462
          %1496 = vmatprep.subr.bf16.mxu0 0
          %1497 = vmatpush1.bf16.msra.mxu0 %v1464
          %1498 = vmatprep.subr.bf16.mxu0 0
          %1499 = vmatpush1.bf16.msra.mxu0 %v1465
          %1500 = vmatprep.subr.bf16.mxu0 0
          %1501 = vmatpush1.bf16.msra.mxu0 %v1466
          %1502 = vmatprep.subr.bf16.mxu0 0
          %1503 = vmatpush1.bf16.msra.mxu0 %v1467
          %1504 = vmatprep.subr.bf16.mxu0 0
          %1505 = vmatpush1.bf16.msra.mxu0 %v1468
          %1506 = vmatprep.subr.bf16.mxu0 0
          %1507 = vmatpush1.bf16.msra.mxu0 %v1469
          %1508 = vmatprep.subr.bf16.mxu0 0
          %1509 = vmatpush1.bf16.msra.mxu0 %v1470
          %1510 = vmatprep.subr.bf16.mxu0 0
          %1511 = vmatpush1.bf16.msra.mxu0 %v1471
          %1512 = vmatprep.subr.bf16.mxu0 0
          %1513 = vmatpush1.bf16.msra.mxu0 %v1472
          %1514 = vmatprep.subr.bf16.mxu0 0
          %1515 = vmatpush1.bf16.msra.mxu0 %v1473
          %1516 = vmatprep.subr.bf16.mxu0 0
          %1517 = vmatpush1.bf16.msra.mxu0 %v1474
          %1518 = vmatprep.subr.bf16.mxu0 0
          %1519 = vmatpush1.bf16.msra.mxu0 %v1475
          %1520 = vmatprep.subr.bf16.mxu0 0
          %1521 = vmatpush1.bf16.msra.mxu0 %v1476
          %1522 = vmatprep.subr.bf16.mxu0 0
          %1523 = vmatpush1.bf16.msra.mxu0 %v1477
          %1524 = vmatprep.subr.bf16.mxu0 0
          %1525 = vmatpush1.bf16.msra.mxu0 %v1478
          %1526 = vmatprep.subr.bf16.mxu0 0
          %1527 = vmatpush1.bf16.msra.mxu0 %v1479
          %1528 = vmatprep.mubr.bf16.mxu0 %v1360
          %1529 = vmatmul.mubr.bf16.gmra.mrb[0].mxu0 %v1359
          %v1530 = vpop.f32.mrb[0].mxu0
          %v1531 = vadd.f32 %v1398, %v1530
          %v1532 = vpop.f32.mrb[0].mxu0
          %v1533 = vpop.f32.mrb[0].mxu0
          %v1534 = vpop.f32.mrb[0].mxu0
          %1535 = vdwg.mxu0
          %vm1536 = vcmask 41984
          %1537 = vst.msk [vmem:[%s652] sm:$0x3] %vm1536, %v1531
        $region86: #{policynet2d_conv_forward.7} parent=73 // pred_fallthru
          _
        %p1538 = scmp.lt.s32.totalorder %s20, 1
        %s1539 = scalar_select %p1538, %s20, 1
        %s1540 = smul.addr %s1539, 2
        %s1541 = scalar_lea.vmem %s5, %s1540
        // Predicated region
        $region87: #{policynet2d_conv_forward.7} parent=73 // pred_check
          %p1542 = pneg %p173
        $region88: #{policynet2d_conv_forward.7} parent=73 // pred_check_branch
          %1544 = sbr.rel (%p1542) target = $region90
        $region89: #{policynet2d_conv_forward.7} parent=73 // pred_region
          _
        $region90: #{policynet2d_conv_forward.7} parent=73 // pred_fallthru
          _
      $region74: #{policynet2d_conv_forward.7} parent=5 // pred_fallthru
        _
      %p1545 = scmp.le.s32.totalorder 2, %s11
      // Predicated region
      $region91: #{policynet2d_conv_forward.7} parent=5 // pred_check
        %p1546 = pneg %p1545
      $region92: #{policynet2d_conv_forward.7} parent=5 // pred_check_branch
        %1548 = sbr.rel (%p1546) target = $region94
      $region93: #{policynet2d_conv_forward.7} parent=5 // pred_region
        %s1549 = ssub.s32 %s11, 2
        // Predicated region
        $region95: #{policynet2d_conv_forward.7} parent=93 // pred_check
          %p1550 = pneg %p179
        $region96: #{policynet2d_conv_forward.7} parent=93 // pred_check_branch
          %1552 = sbr.rel (%p1550) target = $region98
        $region97: #{policynet2d_conv_forward.7} parent=93 // pred_region
          %p1553 = scmp.lt.s32.totalorder %s22, 1
          %s1554 = scalar_select %p1553, %s22, 1
          %s1555 = smul.addr %s1554, 2
          %s1556 = scalar_lea.vmem %s5, %s1555
        $region98: #{policynet2d_conv_forward.7} parent=93 // pred_fallthru
          _
      $region94: #{policynet2d_conv_forward.7} parent=5 // pred_fallthru
        _
    $region6: #{policynet2d_conv_forward.7} parent=1 // loop_footer
      %s15 = sadd.s32 1, %s11
    $region7: #{policynet2d_conv_forward.7} parent=1 // loop_footer_branch
      %10 = sbr.rel target = $region3
    $region8: #{policynet2d_conv_forward.7} parent=1 // loop_exit
      _

</llo_original>
